<compile_context>
chip_gen: v7x
topology: tpu7x:2x2x1
jax: 0.10.0
libtpu: 0.0.40
codegen_flags: <defaults>
</compile_context>

<pallas_src>
import functools
import math

import jax
import jax.numpy as jnp
import numpy as np
from jax.experimental import pallas as pl
from jax.experimental.pallas import tpu as pltpu


def _round_up(n, m):
    return ((n + m - 1) // m) * m


def _pad_to(a, shape):
    pads = [(0, s - d) for d, s in zip(a.shape, shape)]
    if all(p == (0, 0) for p in pads):
        return a
    return jnp.pad(a, pads)


def _vmem_limit_bytes(resident_bytes):
    """Explicit scoped-VMEM budget (defaults are only 16-32 MiB)."""
    try:
        cap = int(pltpu.get_tpu_info().vmem_capacity_bytes)   # 64 MiB on v7x
    except Exception:
        cap = 64 * 1024 * 1024                                # conservative
    hard_cap = min(int(0.85 * cap), 100 << 20)
    return int(min(max(int(resident_bytes) + (16 << 20), 32 << 20), hard_cap))


# ----------------------------------------------------------------------------
# Fused expert kernel: all experts folded into the MXU N / K dimensions.
# ----------------------------------------------------------------------------
def _make_fused_moe_kernel(num_extra_hidden, eh_packed, compute_dtype):
    """In-kernel shapes (TT = token tile, Dp / EH lane-padded to 128):
      x      (TT, Dp)         f32
      gates  (TT, E)          f32   gate prob per expert (0 for unselected)
      w1     (Dp, EH)         compute_dtype   experts concatenated on N
      b1     (1, EH)          f32
      whbd   (Lx, EH, EH)     compute_dtype   block-diagonal per-expert HxH
      bh     (Lx, 1, EH)      f32
      w2     (EH, Dp)         compute_dtype   experts concatenated on K
      gproj  (E, EH + Dp)     compute_dtype   [gate expander | b2]
    """

    def kernel(x_ref, gates_ref, w1_ref, b1_ref, *rest):
        if num_extra_hidden > 0:
            whbd_ref, bh_ref, w2_ref, gproj_ref, out_ref = rest
        else:
            w2_ref, gproj_ref, out_ref = rest

        x = x_ref[...]                                               # (TT, Dp)

        # Layer 1: one lane-dense (TT, EH) matmul covering every expert.
        h = jnp.dot(x.astype(compute_dtype), w1_ref[...],
                    preferred_element_type=jnp.float32) + b1_ref[...]
        h = jax.nn.gelu(h, approximate=True)

        # Middle layers: block-diagonal so each stays a single MXU matmul.
        for l in range(num_extra_hidden):                            # static
            h = jnp.dot(h.astype(compute_dtype), whbd_ref[l],
                        preferred_element_type=jnp.float32) + bh_ref[l]
            h = jax.nn.gelu(h, approximate=True)

        # One tiny K=E MXU push expands the gates over each expert's H lanes
        # and produces the gated b2 bias (replaces the old (T, E*H) f32 gexp
        # HBM stream and the separate gates@b2 push).
        gproj = jnp.dot(gates_ref[...].astype(compute_dtype), gproj_ref[...],
                        preferred_element_type=jnp.float32)          # (TT,EH+Dp)
        gexp = gproj[:, :eh_packed]                                  # (TT, EH)
        gated_b2 = gproj[:, eh_packed:]                              # (TT, Dp)

        # Routing + combine: sum_e g_e * (h_e @ W2_e) as one K=EH matmul.
        gh = gexp * h
        y = jnp.dot(gh.astype(compute_dtype), w2_ref[...],
                    preferred_element_type=jnp.float32)              # (TT, Dp)
        out_ref[...] = (y + gated_b2 + x).astype(out_ref.dtype)      # residual

    return kernel


def moe_experts(pred, gates, w1, b1, wh, bh, w2, b2, *, num_hidden_layers,
                compute_dtype=jnp.bfloat16, token_tile=512,
                single_buffer_weights=True):
    """Dense-routed expert compute, all experts fused into one pallas_call.

    pred : (T, D)   gates : (T, E) (zeros for unselected experts)
    w1: (E, D, H)  b1: (E, 1, H)
    wh: (E, Lx, H, H)  bh: (E, Lx, 1, H)
    w2: (E, H, D)  b2: (E, 1, D)
    """
    T, D = pred.shape
    E, _, H = w1.shape
    n_extra = num_hidden_layers - 1
    f32 = jnp.float32

    # Lane-dense packing: per-expert hidden padded so E*Hp is a multiple of 128.
    Hp = _round_up(H, 128 // math.gcd(E, 128))
    EH = E * Hp
    Dp = _round_up(D, 128)

    # Token tiling: biggest tile that fits, but always >= 2 grid steps so the
    # "parallel" axis can shard across both TensorCores on v7x.
    Tr = _round_up(T, 8)
    TT = min(token_tile, Tr)
    if T > 8 and Tr // TT < 2:
        TT = _round_up((Tr + 1) // 2, 8)
    Tp = _round_up(T, TT)

    # ---- pack expert params (hoist to init time at production scale) ----
    w1p = _pad_to(_pad_to(w1, (E, D, Hp)).transpose(1, 0, 2).reshape(D, EH),
                  (Dp, EH)).astype(compute_dtype)
    b1p = _pad_to(b1, (E, 1, Hp)).transpose(1, 0, 2).reshape(1, EH).astype(f32)
    w2p = _pad_to(_pad_to(w2, (E, Hp, D)).reshape(EH, D),
                  (EH, Dp)).astype(compute_dtype)
    # Gate projection: [expander | b2] so a single K=E push makes gexp & gated b2.
    expander = jnp.repeat(jnp.eye(E, dtype=f32), Hp, axis=1)          # (E, EH)
    b2s = _pad_to(b2.reshape(E, D), (E, Dp)).astype(f32)
    gproj = jnp.concatenate([expander, b2s], axis=1).astype(compute_dtype)

    wsize = jnp.dtype(compute_dtype).itemsize
    weight_bytes = (Dp * EH + EH * Dp + E * (EH + Dp)) * wsize + EH * 4

    extra_args = []
    if n_extra > 0:
        whp = _pad_to(wh[:, :n_extra], (E, n_extra, Hp, Hp))
        whbd = jnp.einsum("ef,elij->leifj", jnp.eye(E, dtype=wh.dtype),
                          whp).reshape(n_extra, EH, EH).astype(compute_dtype)
        bhp = _pad_to(bh[:, :n_extra], (E, n_extra, 1, Hp)
                      ).transpose(1, 2, 0, 3).reshape(n_extra, 1, EH).astype(f32)
        extra_args = [whbd, bhp]
        weight_bytes += n_extra * EH * EH * wsize + n_extra * EH * 4

    # ---- pad activations ----
    x_p = _pad_to(pred.astype(f32), (Tp, Dp))
    gates_p = _pad_to(gates.astype(f32), (Tp, E))

    weight_buffers = 1 if single_buffer_weights else 2
    stream_bytes = 2 * (TT * Dp * 4 + TT * 128 * 4 + TT * Dp * 4)   # x, gates, out
    scratch_bytes = 4 * TT * (EH + Dp) * 4                          # live values
    vmem_limit = _vmem_limit_bytes(weight_bytes * weight_buffers
                                   + stream_bytes + scratch_bytes)

    def wspec(shape):
        # Grid-invariant weight: constant index_map (never re-fetched);
        # single-buffer it to halve its VMEM residency.
        idx = (lambda t: (0, 0)) if len(shape) == 2 else (lambda t: (0, 0, 0))
        if single_buffer_weights:
            return pl.BlockSpec(shape, idx, pipeline_mode=pl.Buffered(1))
        return pl.BlockSpec(shape, idx)

    in_specs = [
        pl.BlockSpec((TT, Dp), lambda t: (t, 0)),      # x tile (streamed)
        pl.BlockSpec((TT, E), lambda t: (t, 0)),       # gates tile (streamed)
        wspec((Dp, EH)),                               # W1 packed
        wspec((1, EH)),                                # b1 packed
    ]
    if n_extra > 0:
        in_specs += [wspec((n_extra, EH, EH)),         # Wh block-diag
                     wspec((n_extra, 1, EH))]          # bh packed
    in_specs += [wspec((EH, Dp)),                      # W2 packed
                 wspec((E, EH + Dp))]                  # [expander | b2]

    kernel = _make_fused_moe_kernel(n_extra, EH, compute_dtype)
    out = pl.pallas_call(
        kernel,
        out_shape=jax.ShapeDtypeStruct((Tp, Dp), jnp.float32),
        grid=(Tp // TT,),
        in_specs=in_specs,
        out_specs=pl.BlockSpec((TT, Dp), lambda t: (t, 0)),   # lane-dense store
        compiler_params=pltpu.CompilerParams(
            dimension_semantics=("parallel",),
            vmem_limit_bytes=vmem_limit),
    )(x_p, gates_p, w1p, b1p, *extra_args, w2p, gproj)
    return out[:T, :D]


# ----------------------------------------------------------------------------
# Full forward pass (gating / top-k / losses are tiny O(T*E) glue -> XLA)
# ----------------------------------------------------------------------------
def moe_forward(x, params, *, k, num_hidden_layers, w_importance=1.0,
                w_load=1.0, compute_dtype=jnp.bfloat16,
                single_buffer_weights=True):
    wg = params["wg"]                                      # (E, D) torch Linear
    E, D = wg.shape
    orig_shape = x.shape
    pred = x.reshape(-1, D).astype(jnp.float32)

    # 1) gating logits (no bias; eval mode -> no Gaussian gate noise)
    logits = pred @ wg.T                                   # (T, E)

    # 2) top-k then softmax (apply_softmax_before_top_k=False)
    top_vals, top_idx = jax.lax.top_k(logits, k)
    probs = jax.nn.softmax(top_vals, axis=-1)
    onehot = jax.nn.one_hot(top_idx, E, dtype=jnp.float32)
    gates = jnp.einsum("tk,tke->te", probs, onehot)        # gate_probs_expanded
    khot = jnp.sum(jax.nn.one_hot(top_idx, E, dtype=jnp.int32), axis=1)

    # 3) fused expert compute + weighted combine (Pallas kernel, hot path)
    out = moe_experts(pred, gates, params["w1"], params["b1"], params["wh"],
                      params["bh"], params["w2"], params["b2"],
                      num_hidden_layers=num_hidden_layers,
                      compute_dtype=compute_dtype,
                      single_buffer_weights=single_buffer_weights)
    out = out.reshape(orig_shape)

    # 4) load-balancing losses (unbiased variance, matching torch .var())
    eps = 1e-10
    importance = gates.sum(axis=0)
    imp_loss = w_importance * jnp.var(importance, ddof=1) / (
        jnp.mean(importance) ** 2 + eps)
    load = khot.sum(axis=0).astype(jnp.float32)            # eval-mode load
    load_loss = w_load * jnp.var(load, ddof=1) / (jnp.mean(load) ** 2 + eps)

    return out, (imp_loss, load_loss)


# ----------------------------------------------------------------------------
# Pure-JAX reference (for correctness check)
# ----------------------------------------------------------------------------
def _ref_forward(x, params, *, k, num_hidden_layers):
    E, D = params["wg"].shape
    pred = x.reshape(-1, D).astype(jnp.float32)
    logits = pred @ params["wg"].T
    top_vals, top_idx = jax.lax.top_k(logits, k)
    probs = jax.nn.softmax(top_vals, axis=-1)
    gpe = jnp.einsum("tk,tke->te", probs,
                     jax.nn.one_hot(top_idx, E, dtype=jnp.float32))
    out = jnp.zeros_like(pred)
    for e in range(E):
        h = jax.nn.gelu(pred @ params["w1"][e] + params["b1"][e, 0],
                        approximate=True)
        for l in range(num_hidden_layers - 1):
            h = jax.nn.gelu(h @ params["wh"][e, l] + params["bh"][e, l, 0],
                            approximate=True)
        y = h @ params["w2"][e] + params["b2"][e, 0] + pred
        out = out + gpe[:, e:e + 1] * y
    return out.reshape(x.shape)


# ----------------------------------------------------------------------------
# Main
# ----------------------------------------------------------------------------
if __name__ == "__main__":
    # Small config consistent with the module: in_features == output_features.
    B, N = 2, 32           # batch, tokens-per-item -> T = 64 tokens
    D = 32                 # in_features == output_features
    H = 64                 # hidden_features
    E = 8                  # num_experts
    K = 2                  # k
    L = 2                  # num_hidden_layers
    Lx = max(L - 1, 1)

    key = jax.random.PRNGKey(0)
    keys = jax.random.split(key, 8)
    scale = 0.05
    params = dict(
        wg=scale * jax.random.normal(keys[0], (E, D), jnp.float32),
        w1=scale * jax.random.normal(keys[1], (E, D, H), jnp.float32),
        b1=scale * jax.random.normal(keys[2], (E, 1, H), jnp.float32),
        wh=scale * jax.random.normal(keys[3], (E, Lx, H, H), jnp.float32),
        bh=scale * jax.random.normal(keys[4], (E, Lx, 1, H), jnp.float32),
        w2=scale * jax.random.normal(keys[5], (E, H, D), jnp.float32),
        b2=scale * jax.random.normal(keys[6], (E, 1, D), jnp.float32),
    )
    x = jax.random.normal(keys[7], (B, N, D), jnp.float32)

    ref = _ref_forward(x, params, k=K, num_hidden_layers=L)

    def _run(compute_dtype, single_buffer):
        fwd = jax.jit(functools.partial(
            moe_forward, k=K, num_hidden_layers=L,
            compute_dtype=compute_dtype,
            single_buffer_weights=single_buffer))
        out, losses = fwd(x, params)
        jax.block_until_ready((out,) + tuple(losses))
        return out, losses

    # f32-weight correctness path.  If the installed JAX rejects (or mishandles)
    # pipeline_mode=pl.Buffered(1), fall back to default double buffering.
    single_buffer = True
    try:
        out32, _ = _run(jnp.float32, True)
        np.testing.assert_allclose(np.asarray(out32), np.asarray(ref),
                                   rtol=5e-3, atol=5e-3)
    except Exception:
        single_buffer = False
        out32, _ = _run(jnp.float32, False)
        np.testing.assert_allclose(np.asarray(out32), np.asarray(ref),
                                   rtol=5e-3, atol=5e-3)

    # Default bf16-MXU path (f32 accumulation kept): production dtype on
    # v5e / v6e / v7x alike.
    out_bf, (imp_loss, load_loss) = _run(jnp.bfloat16, single_buffer)
    np.testing.assert_allclose(np.asarray(out_bf), np.asarray(ref),
                               rtol=2e-2, atol=2e-2)

    assert out_bf.shape == x.shape
    assert np.isfinite(float(imp_loss)) and np.isfinite(float(load_loss))

    print("KERNEL_OK")
</pallas_src>

<mosaic_0001>
module attributes {stable_mosaic.version = 11 : i64} {
  func.func @kernel(%arg0: i32, %arg1: memref<32x128xf32, #tpu.memory_space<vmem>>, %arg2: memref<32x8xf32, #tpu.memory_space<vmem>>, %arg3: memref<128x512xf32, #tpu.memory_space<vmem>>, %arg4: memref<1x512xf32, #tpu.memory_space<vmem>>, %arg5: memref<1x512x512xf32, #tpu.memory_space<vmem>>, %arg6: memref<1x1x512xf32, #tpu.memory_space<vmem>>, %arg7: memref<512x128xf32, #tpu.memory_space<vmem>>, %arg8: memref<8x640xf32, #tpu.memory_space<vmem>>, %arg9: memref<32x128xf32, #tpu.memory_space<vmem>>) attributes {dimension_semantics = [#tpu.dimension_semantics<parallel>], iteration_bounds = array<i64: 2>, scalar_prefetch = 0 : i64, scratch_operands = 0 : i64, tpu.core_type = #tpu.core_type<tc>, window_params = [{transform_indices = @transform_0, window_bounds = array<i64: 32, 128>}, {transform_indices = @transform_1, window_bounds = array<i64: 32, 8>}, {pipeline_mode = #tpu.pipeline_mode<synchronous>, transform_indices = @transform_2, window_bounds = array<i64: 128, 512>}, {pipeline_mode = #tpu.pipeline_mode<synchronous>, transform_indices = @transform_3, window_bounds = array<i64: 1, 512>}, {pipeline_mode = #tpu.pipeline_mode<synchronous>, transform_indices = @transform_4, window_bounds = array<i64: 1, 512, 512>}, {pipeline_mode = #tpu.pipeline_mode<synchronous>, transform_indices = @transform_5, window_bounds = array<i64: 1, 1, 512>}, {pipeline_mode = #tpu.pipeline_mode<synchronous>, transform_indices = @transform_6, window_bounds = array<i64: 512, 128>}, {pipeline_mode = #tpu.pipeline_mode<synchronous>, transform_indices = @transform_7, window_bounds = array<i64: 8, 640>}, {transform_indices = @transform_8, window_bounds = array<i64: 32, 128>}]} {
    %c0 = arith.constant 0 : index
    %c0_0 = arith.constant 0 : index
    %0 = vector.load %arg1[%c0, %c0_0] : memref<32x128xf32, #tpu.memory_space<vmem>>, vector<32x128xf32>
    %c0_1 = arith.constant 0 : index
    %c0_2 = arith.constant 0 : index
    %1 = vector.load %arg3[%c0_1, %c0_2] : memref<128x512xf32, #tpu.memory_space<vmem>>, vector<128x512xf32>
    %cst = arith.constant dense<0.000000e+00> : vector<32x512xf32>
    %2 = tpu.matmul %0, %1, %cst {dimension_numbers = #tpu.dot_dimension_numbers<[1], [0], [0], [1], [0, 0, 1, 1], [], []>} : vector<32x128xf32>, vector<128x512xf32>, vector<32x512xf32> -> vector<32x512xf32>
    %c0_3 = arith.constant 0 : index
    %c0_4 = arith.constant 0 : index
    %3 = vector.load %arg4[%c0_3, %c0_4] : memref<1x512xf32, #tpu.memory_space<vmem>>, vector<1x512xf32>
    %4 = vector.broadcast %3 : vector<1x512xf32> to vector<32x512xf32>
    %5 = arith.addf %2, %4 : vector<32x512xf32>
    %6 = arith.mulf %5, %5 : vector<32x512xf32>
    %7 = arith.mulf %5, %6 : vector<32x512xf32>
    %cst_5 = arith.constant 4.471500e-02 : f32
    %8 = vector.broadcast %cst_5 : f32 to vector<32x512xf32>
    %9 = arith.mulf %8, %7 : vector<32x512xf32>
    %10 = arith.addf %5, %9 : vector<32x512xf32>
    %cst_6 = arith.constant 0.797884583 : f32
    %11 = vector.broadcast %cst_6 : f32 to vector<32x512xf32>
    %12 = arith.mulf %11, %10 : vector<32x512xf32>
    %13 = math.tanh %12 : vector<32x512xf32>
    %cst_7 = arith.constant 1.000000e+00 : f32
    %14 = vector.broadcast %cst_7 : f32 to vector<32x512xf32>
    %15 = arith.addf %14, %13 : vector<32x512xf32>
    %cst_8 = arith.constant 5.000000e-01 : f32
    %16 = vector.broadcast %cst_8 : f32 to vector<32x512xf32>
    %17 = arith.mulf %16, %15 : vector<32x512xf32>
    %18 = arith.mulf %5, %17 : vector<32x512xf32>
    %c0_9 = arith.constant 0 : index
    %c0_10 = arith.constant 0 : index
    %c0_11 = arith.constant 0 : index
    %19 = vector.load %arg5[%c0_9, %c0_10, %c0_11] : memref<1x512x512xf32, #tpu.memory_space<vmem>>, vector<1x512x512xf32>
    %20 = vector.shape_cast %19 : vector<1x512x512xf32> to vector<512x512xf32>
    %cst_12 = arith.constant dense<0.000000e+00> : vector<32x512xf32>
    %21 = tpu.matmul %18, %20, %cst_12 {dimension_numbers = #tpu.dot_dimension_numbers<[1], [0], [0], [1], [0, 0, 1, 1], [], []>} : vector<32x512xf32>, vector<512x512xf32>, vector<32x512xf32> -> vector<32x512xf32>
    %c0_13 = arith.constant 0 : index
    %c0_14 = arith.constant 0 : index
    %c0_15 = arith.constant 0 : index
    %22 = vector.load %arg6[%c0_13, %c0_14, %c0_15] : memref<1x1x512xf32, #tpu.memory_space<vmem>>, vector<1x1x512xf32>
    %23 = vector.shape_cast %22 : vector<1x1x512xf32> to vector<1x512xf32>
    %24 = vector.broadcast %23 : vector<1x512xf32> to vector<32x512xf32>
    %25 = arith.addf %21, %24 : vector<32x512xf32>
    %26 = arith.mulf %25, %25 : vector<32x512xf32>
    %27 = arith.mulf %25, %26 : vector<32x512xf32>
    %cst_16 = arith.constant 4.471500e-02 : f32
    %28 = vector.broadcast %cst_16 : f32 to vector<32x512xf32>
    %29 = arith.mulf %28, %27 : vector<32x512xf32>
    %30 = arith.addf %25, %29 : vector<32x512xf32>
    %cst_17 = arith.constant 0.797884583 : f32
    %31 = vector.broadcast %cst_17 : f32 to vector<32x512xf32>
    %32 = arith.mulf %31, %30 : vector<32x512xf32>
    %33 = math.tanh %32 : vector<32x512xf32>
    %cst_18 = arith.constant 1.000000e+00 : f32
    %34 = vector.broadcast %cst_18 : f32 to vector<32x512xf32>
    %35 = arith.addf %34, %33 : vector<32x512xf32>
    %cst_19 = arith.constant 5.000000e-01 : f32
    %36 = vector.broadcast %cst_19 : f32 to vector<32x512xf32>
    %37 = arith.mulf %36, %35 : vector<32x512xf32>
    %38 = arith.mulf %25, %37 : vector<32x512xf32>
    %c0_20 = arith.constant 0 : index
    %c0_21 = arith.constant 0 : index
    %39 = vector.load %arg2[%c0_20, %c0_21] : memref<32x8xf32, #tpu.memory_space<vmem>>, vector<32x8xf32>
    %c0_22 = arith.constant 0 : index
    %c0_23 = arith.constant 0 : index
    %40 = vector.load %arg8[%c0_22, %c0_23] : memref<8x640xf32, #tpu.memory_space<vmem>>, vector<8x640xf32>
    %cst_24 = arith.constant dense<0.000000e+00> : vector<32x640xf32>
    %41 = tpu.matmul %39, %40, %cst_24 {dimension_numbers = #tpu.dot_dimension_numbers<[1], [0], [0], [1], [0, 0, 1, 1], [], []>} : vector<32x8xf32>, vector<8x640xf32>, vector<32x640xf32> -> vector<32x640xf32>
    %42 = vector.extract_strided_slice %41 {offsets = [0, 0], sizes = [32, 512], strides = [1, 1]} : vector<32x640xf32> to vector<32x512xf32>
    %43 = vector.extract_strided_slice %41 {offsets = [0, 512], sizes = [32, 128], strides = [1, 1]} : vector<32x640xf32> to vector<32x128xf32>
    %44 = arith.mulf %42, %38 : vector<32x512xf32>
    %c0_25 = arith.constant 0 : index
    %c0_26 = arith.constant 0 : index
    %45 = vector.load %arg7[%c0_25, %c0_26] : memref<512x128xf32, #tpu.memory_space<vmem>>, vector<512x128xf32>
    %cst_27 = arith.constant dense<0.000000e+00> : vector<32x128xf32>
    %46 = tpu.matmul %44, %45, %cst_27 {dimension_numbers = #tpu.dot_dimension_numbers<[1], [0], [0], [1], [0, 0, 1, 1], [], []>} : vector<32x512xf32>, vector<512x128xf32>, vector<32x128xf32> -> vector<32x128xf32>
    %47 = arith.addf %46, %43 : vector<32x128xf32>
    %48 = arith.addf %47, %0 : vector<32x128xf32>
    %c0_28 = arith.constant 0 : index
    %c0_29 = arith.constant 0 : index
    %49 = vector.load %arg9[%c0_28, %c0_29] : memref<32x128xf32, #tpu.memory_space<vmem>>, vector<32x128xf32>
    tpu.vector_store %arg9[%c0_28, %c0_29], %48 {strides = array<i32>} : memref<32x128xf32, #tpu.memory_space<vmem>>, vector<32x128xf32>,
    return
  }
  func.func @transform_0(%arg0: i32) -> (i32, i32) {
    %c0_i32 = arith.constant 0 : i32
    %c0_i32_0 = arith.constant 0 : i32
    return %arg0, %c0_i32 : i32, i32
  }
  func.func @transform_1(%arg0: i32) -> (i32, i32) {
    %c0_i32 = arith.constant 0 : i32
    %c0_i32_0 = arith.constant 0 : i32
    return %arg0, %c0_i32 : i32, i32
  }
  func.func @transform_2(%arg0: i32) -> (i32, i32) {
    %c0_i32 = arith.constant 0 : i32
    %c0_i32_0 = arith.constant 0 : i32
    %c0_i32_1 = arith.constant 0 : i32
    return %c0_i32, %c0_i32_0 : i32, i32
  }
  func.func @transform_3(%arg0: i32) -> (i32, i32) {
    %c0_i32 = arith.constant 0 : i32
    %c0_i32_0 = arith.constant 0 : i32
    %c0_i32_1 = arith.constant 0 : i32
    return %c0_i32, %c0_i32_0 : i32, i32
  }
  func.func @transform_4(%arg0: i32) -> (i32, i32, i32) {
    %c0_i32 = arith.constant 0 : i32
    %c0_i32_0 = arith.constant 0 : i32
    %c0_i32_1 = arith.constant 0 : i32
    %c0_i32_2 = arith.constant 0 : i32
    return %c0_i32, %c0_i32_0, %c0_i32_1 : i32, i32, i32
  }
  func.func @transform_5(%arg0: i32) -> (i32, i32, i32) {
    %c0_i32 = arith.constant 0 : i32
    %c0_i32_0 = arith.constant 0 : i32
    %c0_i32_1 = arith.constant 0 : i32
    %c0_i32_2 = arith.constant 0 : i32
    return %c0_i32, %c0_i32_0, %c0_i32_1 : i32, i32, i32
  }
  func.func @transform_6(%arg0: i32) -> (i32, i32) {
    %c0_i32 = arith.constant 0 : i32
    %c0_i32_0 = arith.constant 0 : i32
    %c0_i32_1 = arith.constant 0 : i32
    return %c0_i32, %c0_i32_0 : i32, i32
  }
  func.func @transform_7(%arg0: i32) -> (i32, i32) {
    %c0_i32 = arith.constant 0 : i32
    %c0_i32_0 = arith.constant 0 : i32
    %c0_i32_1 = arith.constant 0 : i32
    return %c0_i32, %c0_i32_0 : i32, i32
  }
  func.func @transform_8(%arg0: i32) -> (i32, i32) {
    %c0_i32 = arith.constant 0 : i32
    %c0_i32_0 = arith.constant 0 : i32
    return %arg0, %c0_i32 : i32, i32
  }
}

module attributes {stable_mosaic.version = 11 : i64} {
  func.func @kernel(%arg0: i32, %arg1: memref<32x128xf32, #tpu.memory_space<vmem>>, %arg2: memref<32x8xf32, #tpu.memory_space<vmem>>, %arg3: memref<128x512xf32, #tpu.memory_space<vmem>>, %arg4: memref<1x512xf32, #tpu.memory_space<vmem>>, %arg5: memref<1x512x512xf32, #tpu.memory_space<vmem>>, %arg6: memref<1x1x512xf32, #tpu.memory_space<vmem>>, %arg7: memref<512x128xf32, #tpu.memory_space<vmem>>, %arg8: memref<8x640xf32, #tpu.memory_space<vmem>>, %arg9: memref<32x128xf32, #tpu.memory_space<vmem>>) attributes {dimension_semantics = [#tpu.dimension_semantics<parallel>], iteration_bounds = array<i64: 2>, scalar_prefetch = 0 : i64, scratch_operands = 0 : i64, tpu.core_type = #tpu.core_type<tc>, window_params = [{transform_indices = @transform_0, window_bounds = array<i64: 32, 128>}, {transform_indices = @transform_1, window_bounds = array<i64: 32, 8>}, {pipeline_mode = #tpu.pipeline_mode<synchronous>, transform_indices = @transform_2, window_bounds = array<i64: 128, 512>}, {pipeline_mode = #tpu.pipeline_mode<synchronous>, transform_indices = @transform_3, window_bounds = array<i64: 1, 512>}, {pipeline_mode = #tpu.pipeline_mode<synchronous>, transform_indices = @transform_4, window_bounds = array<i64: 1, 512, 512>}, {pipeline_mode = #tpu.pipeline_mode<synchronous>, transform_indices = @transform_5, window_bounds = array<i64: 1, 1, 512>}, {pipeline_mode = #tpu.pipeline_mode<synchronous>, transform_indices = @transform_6, window_bounds = array<i64: 512, 128>}, {pipeline_mode = #tpu.pipeline_mode<synchronous>, transform_indices = @transform_7, window_bounds = array<i64: 8, 640>}, {transform_indices = @transform_8, window_bounds = array<i64: 32, 128>}]} {
    %c0 = arith.constant 0 : index
    %c0_0 = arith.constant 0 : index
    %0 = vector.load %arg1[%c0, %c0_0] : memref<32x128xf32, #tpu.memory_space<vmem>>, vector<32x128xf32>
    %c0_1 = arith.constant 0 : index
    %c0_2 = arith.constant 0 : index
    %1 = vector.load %arg3[%c0_1, %c0_2] : memref<128x512xf32, #tpu.memory_space<vmem>>, vector<128x512xf32>
    %cst = arith.constant dense<0.000000e+00> : vector<32x512xf32>
    %2 = tpu.matmul %0, %1, %cst {dimension_numbers = #tpu.dot_dimension_numbers<[1], [0], [0], [1], [0, 0, 1, 1], [], []>} : vector<32x128xf32>, vector<128x512xf32>, vector<32x512xf32> -> vector<32x512xf32>
    %c0_3 = arith.constant 0 : index
    %c0_4 = arith.constant 0 : index
    %3 = vector.load %arg4[%c0_3, %c0_4] : memref<1x512xf32, #tpu.memory_space<vmem>>, vector<1x512xf32>
    %4 = vector.broadcast %3 : vector<1x512xf32> to vector<32x512xf32>
    %5 = arith.addf %2, %4 : vector<32x512xf32>
    %6 = arith.mulf %5, %5 : vector<32x512xf32>
    %7 = arith.mulf %5, %6 : vector<32x512xf32>
    %cst_5 = arith.constant 4.471500e-02 : f32
    %8 = vector.broadcast %cst_5 : f32 to vector<32x512xf32>
    %9 = arith.mulf %8, %7 : vector<32x512xf32>
    %10 = arith.addf %5, %9 : vector<32x512xf32>
    %cst_6 = arith.constant 0.797884583 : f32
    %11 = vector.broadcast %cst_6 : f32 to vector<32x512xf32>
    %12 = arith.mulf %11, %10 : vector<32x512xf32>
    %13 = math.tanh %12 : vector<32x512xf32>
    %cst_7 = arith.constant 1.000000e+00 : f32
    %14 = vector.broadcast %cst_7 : f32 to vector<32x512xf32>
    %15 = arith.addf %14, %13 : vector<32x512xf32>
    %cst_8 = arith.constant 5.000000e-01 : f32
    %16 = vector.broadcast %cst_8 : f32 to vector<32x512xf32>
    %17 = arith.mulf %16, %15 : vector<32x512xf32>
    %18 = arith.mulf %5, %17 : vector<32x512xf32>
    %c0_9 = arith.constant 0 : index
    %c0_10 = arith.constant 0 : index
    %c0_11 = arith.constant 0 : index
    %19 = vector.load %arg5[%c0_9, %c0_10, %c0_11] : memref<1x512x512xf32, #tpu.memory_space<vmem>>, vector<1x512x512xf32>
    %20 = vector.shape_cast %19 : vector<1x512x512xf32> to vector<512x512xf32>
    %cst_12 = arith.constant dense<0.000000e+00> : vector<32x512xf32>
    %21 = tpu.matmul %18, %20, %cst_12 {dimension_numbers = #tpu.dot_dimension_numbers<[1], [0], [0], [1], [0, 0, 1, 1], [], []>} : vector<32x512xf32>, vector<512x512xf32>, vector<32x512xf32> -> vector<32x512xf32>
    %c0_13 = arith.constant 0 : index
    %c0_14 = arith.constant 0 : index
    %c0_15 = arith.constant 0 : index
    %22 = vector.load %arg6[%c0_13, %c0_14, %c0_15] : memref<1x1x512xf32, #tpu.memory_space<vmem>>, vector<1x1x512xf32>
    %23 = vector.shape_cast %22 : vector<1x1x512xf32> to vector<1x512xf32>
    %24 = vector.broadcast %23 : vector<1x512xf32> to vector<32x512xf32>
    %25 = arith.addf %21, %24 : vector<32x512xf32>
    %26 = arith.mulf %25, %25 : vector<32x512xf32>
    %27 = arith.mulf %25, %26 : vector<32x512xf32>
    %cst_16 = arith.constant 4.471500e-02 : f32
    %28 = vector.broadcast %cst_16 : f32 to vector<32x512xf32>
    %29 = arith.mulf %28, %27 : vector<32x512xf32>
    %30 = arith.addf %25, %29 : vector<32x512xf32>
    %cst_17 = arith.constant 0.797884583 : f32
    %31 = vector.broadcast %cst_17 : f32 to vector<32x512xf32>
    %32 = arith.mulf %31, %30 : vector<32x512xf32>
    %33 = math.tanh %32 : vector<32x512xf32>
    %cst_18 = arith.constant 1.000000e+00 : f32
    %34 = vector.broadcast %cst_18 : f32 to vector<32x512xf32>
    %35 = arith.addf %34, %33 : vector<32x512xf32>
    %cst_19 = arith.constant 5.000000e-01 : f32
    %36 = vector.broadcast %cst_19 : f32 to vector<32x512xf32>
    %37 = arith.mulf %36, %35 : vector<32x512xf32>
    %38 = arith.mulf %25, %37 : vector<32x512xf32>
    %c0_20 = arith.constant 0 : index
    %c0_21 = arith.constant 0 : index
    %39 = vector.load %arg2[%c0_20, %c0_21] : memref<32x8xf32, #tpu.memory_space<vmem>>, vector<32x8xf32>
    %c0_22 = arith.constant 0 : index
    %c0_23 = arith.constant 0 : index
    %40 = vector.load %arg8[%c0_22, %c0_23] : memref<8x640xf32, #tpu.memory_space<vmem>>, vector<8x640xf32>
    %cst_24 = arith.constant dense<0.000000e+00> : vector<32x640xf32>
    %41 = tpu.matmul %39, %40, %cst_24 {dimension_numbers = #tpu.dot_dimension_numbers<[1], [0], [0], [1], [0, 0, 1, 1], [], []>} : vector<32x8xf32>, vector<8x640xf32>, vector<32x640xf32> -> vector<32x640xf32>
    %42 = vector.extract_strided_slice %41 {offsets = [0, 0], sizes = [32, 512], strides = [1, 1]} : vector<32x640xf32> to vector<32x512xf32>
    %43 = vector.extract_strided_slice %41 {offsets = [0, 512], sizes = [32, 128], strides = [1, 1]} : vector<32x640xf32> to vector<32x128xf32>
    %44 = arith.mulf %42, %38 : vector<32x512xf32>
    %c0_25 = arith.constant 0 : index
    %c0_26 = arith.constant 0 : index
    %45 = vector.load %arg7[%c0_25, %c0_26] : memref<512x128xf32, #tpu.memory_space<vmem>>, vector<512x128xf32>
    %cst_27 = arith.constant dense<0.000000e+00> : vector<32x128xf32>
    %46 = tpu.matmul %44, %45, %cst_27 {dimension_numbers = #tpu.dot_dimension_numbers<[1], [0], [0], [1], [0, 0, 1, 1], [], []>} : vector<32x512xf32>, vector<512x128xf32>, vector<32x128xf32> -> vector<32x128xf32>
    %47 = arith.addf %46, %43 : vector<32x128xf32>
    %48 = arith.addf %47, %0 : vector<32x128xf32>
    %c0_28 = arith.constant 0 : index
    %c0_29 = arith.constant 0 : index
    %49 = vector.load %arg9[%c0_28, %c0_29] : memref<32x128xf32, #tpu.memory_space<vmem>>, vector<32x128xf32>
    tpu.vector_store %arg9[%c0_28, %c0_29], %48 {strides = array<i32>} : memref<32x128xf32, #tpu.memory_space<vmem>>, vector<32x128xf32>,
    return
  }
  func.func @transform_0(%arg0: i32) -> (i32, i32) {
    %c0_i32 = arith.constant 0 : i32
    %c0_i32_0 = arith.constant 0 : i32
    return %arg0, %c0_i32 : i32, i32
  }
  func.func @transform_1(%arg0: i32) -> (i32, i32) {
    %c0_i32 = arith.constant 0 : i32
    %c0_i32_0 = arith.constant 0 : i32
    return %arg0, %c0_i32 : i32, i32
  }
  func.func @transform_2(%arg0: i32) -> (i32, i32) {
    %c0_i32 = arith.constant 0 : i32
    %c0_i32_0 = arith.constant 0 : i32
    %c0_i32_1 = arith.constant 0 : i32
    return %c0_i32, %c0_i32_0 : i32, i32
  }
  func.func @transform_3(%arg0: i32) -> (i32, i32) {
    %c0_i32 = arith.constant 0 : i32
    %c0_i32_0 = arith.constant 0 : i32
    %c0_i32_1 = arith.constant 0 : i32
    return %c0_i32, %c0_i32_0 : i32, i32
  }
  func.func @transform_4(%arg0: i32) -> (i32, i32, i32) {
    %c0_i32 = arith.constant 0 : i32
    %c0_i32_0 = arith.constant 0 : i32
    %c0_i32_1 = arith.constant 0 : i32
    %c0_i32_2 = arith.constant 0 : i32
    return %c0_i32, %c0_i32_0, %c0_i32_1 : i32, i32, i32
  }
  func.func @transform_5(%arg0: i32) -> (i32, i32, i32) {
    %c0_i32 = arith.constant 0 : i32
    %c0_i32_0 = arith.constant 0 : i32
    %c0_i32_1 = arith.constant 0 : i32
    %c0_i32_2 = arith.constant 0 : i32
    return %c0_i32, %c0_i32_0, %c0_i32_1 : i32, i32, i32
  }
  func.func @transform_6(%arg0: i32) -> (i32, i32) {
    %c0_i32 = arith.constant 0 : i32
    %c0_i32_0 = arith.constant 0 : i32
    %c0_i32_1 = arith.constant 0 : i32
    return %c0_i32, %c0_i32_0 : i32, i32
  }
  func.func @transform_7(%arg0: i32) -> (i32, i32) {
    %c0_i32 = arith.constant 0 : i32
    %c0_i32_0 = arith.constant 0 : i32
    %c0_i32_1 = arith.constant 0 : i32
    return %c0_i32, %c0_i32_0 : i32, i32
  }
  func.func @transform_8(%arg0: i32) -> (i32, i32) {
    %c0_i32 = arith.constant 0 : i32
    %c0_i32_0 = arith.constant 0 : i32
    return %arg0, %c0_i32 : i32, i32
  }
}

</mosaic_0001>

<llo_original>
// kernel: moe_forward.1
$region0: #{moe_forward.1}
  #allocation0 [shape = 'u32[]', space=smem, size = 0x4, offset = 0x4, fixed_abs, tag = 'smem constant byte address 0x4 - core index']
  #allocation1 [shape = 'u32[144,128]{1,0:T(1,128)}', space=vmem, size = 0x12000, scoped, tag = 'internal scratch']
  %s0 = inlined_call_operand.vmem [shape: f32[64,128], index: 0, kind: input, shape index: {}]
  %s1 = inlined_call_operand.vmem [shape: f32[64,8], index: 1, kind: input, shape index: {}]
  %s2 = inlined_call_operand.vmem [shape: f32[128,512], index: 2, kind: input, shape index: {}]
  %s3 = inlined_call_operand.vmem [shape: f32[1,512], index: 3, kind: input, shape index: {}]
  %s4 = inlined_call_operand.vmem [shape: f32[1,512,512], index: 4, kind: input, shape index: {}]
  %s5 = inlined_call_operand.vmem [shape: f32[1,1,512], index: 5, kind: input, shape index: {}]
  %s6 = inlined_call_operand.vmem [shape: f32[512,128], index: 6, kind: input, shape index: {}]
  %s7 = inlined_call_operand.vmem [shape: f32[8,640], index: 7, kind: input, shape index: {}]
  %s8 = inlined_call_operand.hbm [shape: f32[64,128], index: 8, kind: output, shape index: {}]
  %s9 = sld [smem:[#allocation0]]
  $region65: #{moe_forward.1} parent=0
    _
  %s11 = ssub.s32 1, %s9
  %s12 = scalar_select 0, %s11, %s9
  $region1: #{moe_forward.1} parent=0
    #allocation2 [shape = 'u8[32768]{0}', space=vmem, size = 0x8000, scoped, tag = 'output window, operand 0']
    #allocation3 [shape = 's32[2]{0}', space=sflag, size = 0x8, scoped, tag = 'scoped memory for moe_forward.1']
    %13 = vsyncpa [#allocation3], 0
    %s14 = scalar_lea.sflag [#allocation3], 1
    %15 = vsyncpa %s14, 0
    loop: start=0, step=1, limit=4
    $region2: #{moe_forward.1} parent=1 // loop_pre_header
      _
    $region3: #{moe_forward.1} parent=1 // loop_header
      %s17 = sphi 0, %s21
      %p18 = scmp.ge.s32.totalorder %s17, 4
      %s27 = sphi 0, %s29
      %s30 = sphi 0, %s27
      %s31 = sphi 0, %s30
      %s47 = sphi 0, %s31
      %s53 = sphi 0, %s55
      %s56 = sphi 0, %s53
      %s57 = sphi 0, %s56
      %s73 = sphi 0, %s57
      %s77 = sphi 0, %s77
      %s79 = sphi 0, %s77
      %s80 = sphi 0, %s79
      %s94 = sphi 0, %s80
      %s98 = sphi 0, %s98
      %s100 = sphi 0, %s98
      %s101 = sphi 0, %s100
      %s115 = sphi 0, %s101
      %s119 = sphi 0, %s119
      %s121 = sphi 0, %s119
      %s122 = sphi 0, %s121
      %s136 = sphi 0, %s122
      %s140 = sphi 0, %s140
      %s142 = sphi 0, %s140
      %s143 = sphi 0, %s142
      %s157 = sphi 0, %s143
      %s161 = sphi 0, %s161
      %s163 = sphi 0, %s161
      %s164 = sphi 0, %s163
      %s178 = sphi 0, %s164
      %s182 = sphi 0, %s182
      %s184 = sphi 0, %s182
      %s185 = sphi 0, %s184
      %s199 = sphi 0, %s185
      %s205 = sphi 0, %s207
      %s208 = sphi 0, %s205
      %s209 = sphi 0, %s208
      %s225 = sphi 0, %s209
    $region4: #{moe_forward.1} parent=1 // loop_header_branch
      %20 = sbr.rel (%p18) target = $region8
    $region5: #{moe_forward.1} parent=1 // loop_body
      %s22 = ssub.s32 %s17, 1
      %s23 = ssub.s32 %s17, 2
      %s24 = sadd.s32 %s17, 1
      %s25 = ssub.s32 %s17, %s24
      %p26 = scmp.eq.s32.totalorder %s25, 0
      %s28 = sadd.s32 %s27, 1
      %s29 = scalar_select %p26, %s27, %s28
      %p32 = pneg %p26
      %p33 = scmp.eq.s32.totalorder %s17, 1
      %p34 = por %p32, %p33
      %p35 = scmp.ne.s32.totalorder %s27, %s30
      %p36 = scmp.eq.s32.totalorder %s17, 0
      %p37 = por %p35, %p36
      %p38 = scmp.ne.s32.totalorder %s27, %s30
      %p39 = scmp.eq.s32.totalorder %s22, 1
      %p40 = por %p38, %p39
      %p41 = scmp.ne.s32.totalorder %s30, %s31
      %p42 = scmp.eq.s32.totalorder %s22, 0
      %p43 = por %p41, %p42
      %p44 = scmp.ne.s32.totalorder %s30, %s31
      %p45 = scmp.eq.s32.totalorder %s23, 1
      %p46 = por %p44, %p45
      %p48 = scmp.ne.s32.totalorder %s31, %s47
      %p49 = scmp.eq.s32.totalorder %s23, 0
      %p50 = por %p48, %p49
      %s51 = ssub.s32 %s17, %s24
      %p52 = scmp.eq.s32.totalorder %s51, 0
      %s54 = sadd.s32 %s53, 1
      %s55 = scalar_select %p52, %s53, %s54
      %p58 = pneg %p52
      %p59 = scmp.eq.s32.totalorder %s17, 1
      %p60 = por %p58, %p59
      %p61 = scmp.ne.s32.totalorder %s53, %s56
      %p62 = scmp.eq.s32.totalorder %s17, 0
      %p63 = por %p61, %p62
      %p64 = scmp.ne.s32.totalorder %s53, %s56
      %p65 = scmp.eq.s32.totalorder %s22, 1
      %p66 = por %p64, %p65
      %p67 = scmp.ne.s32.totalorder %s56, %s57
      %p68 = scmp.eq.s32.totalorder %s22, 0
      %p69 = por %p67, %p68
      %p70 = scmp.ne.s32.totalorder %s56, %s57
      %p71 = scmp.eq.s32.totalorder %s23, 1
      %p72 = por %p70, %p71
      %p74 = scmp.ne.s32.totalorder %s57, %s73
      %p75 = scmp.eq.s32.totalorder %s23, 0
      %p76 = por %p74, %p75
      %s78 = sadd.s32 %s77, 1
      %p81 = scmp.eq.s32.totalorder %s17, 1
      %p82 = scmp.ne.s32.totalorder %s77, %s79
      %p83 = scmp.eq.s32.totalorder %s17, 0
      %p84 = por %p82, %p83
      %p85 = scmp.ne.s32.totalorder %s77, %s79
      %p86 = scmp.eq.s32.totalorder %s22, 1
      %p87 = por %p85, %p86
      %p88 = scmp.ne.s32.totalorder %s79, %s80
      %p89 = scmp.eq.s32.totalorder %s22, 0
      %p90 = por %p88, %p89
      %p91 = scmp.ne.s32.totalorder %s79, %s80
      %p92 = scmp.eq.s32.totalorder %s23, 1
      %p93 = por %p91, %p92
      %p95 = scmp.ne.s32.totalorder %s80, %s94
      %p96 = scmp.eq.s32.totalorder %s23, 0
      %p97 = por %p95, %p96
      %s99 = sadd.s32 %s98, 1
      %p102 = scmp.eq.s32.totalorder %s17, 1
      %p103 = scmp.ne.s32.totalorder %s98, %s100
      %p104 = scmp.eq.s32.totalorder %s17, 0
      %p105 = por %p103, %p104
      %p106 = scmp.ne.s32.totalorder %s98, %s100
      %p107 = scmp.eq.s32.totalorder %s22, 1
      %p108 = por %p106, %p107
      %p109 = scmp.ne.s32.totalorder %s100, %s101
      %p110 = scmp.eq.s32.totalorder %s22, 0
      %p111 = por %p109, %p110
      %p112 = scmp.ne.s32.totalorder %s100, %s101
      %p113 = scmp.eq.s32.totalorder %s23, 1
      %p114 = por %p112, %p113
      %p116 = scmp.ne.s32.totalorder %s101, %s115
      %p117 = scmp.eq.s32.totalorder %s23, 0
      %p118 = por %p116, %p117
      %s120 = sadd.s32 %s119, 1
      %p123 = scmp.eq.s32.totalorder %s17, 1
      %p124 = scmp.ne.s32.totalorder %s119, %s121
      %p125 = scmp.eq.s32.totalorder %s17, 0
      %p126 = por %p124, %p125
      %p127 = scmp.ne.s32.totalorder %s119, %s121
      %p128 = scmp.eq.s32.totalorder %s22, 1
      %p129 = por %p127, %p128
      %p130 = scmp.ne.s32.totalorder %s121, %s122
      %p131 = scmp.eq.s32.totalorder %s22, 0
      %p132 = por %p130, %p131
      %p133 = scmp.ne.s32.totalorder %s121, %s122
      %p134 = scmp.eq.s32.totalorder %s23, 1
      %p135 = por %p133, %p134
      %p137 = scmp.ne.s32.totalorder %s122, %s136
      %p138 = scmp.eq.s32.totalorder %s23, 0
      %p139 = por %p137, %p138
      %s141 = sadd.s32 %s140, 1
      %p144 = scmp.eq.s32.totalorder %s17, 1
      %p145 = scmp.ne.s32.totalorder %s140, %s142
      %p146 = scmp.eq.s32.totalorder %s17, 0
      %p147 = por %p145, %p146
      %p148 = scmp.ne.s32.totalorder %s140, %s142
      %p149 = scmp.eq.s32.totalorder %s22, 1
      %p150 = por %p148, %p149
      %p151 = scmp.ne.s32.totalorder %s142, %s143
      %p152 = scmp.eq.s32.totalorder %s22, 0
      %p153 = por %p151, %p152
      %p154 = scmp.ne.s32.totalorder %s142, %s143
      %p155 = scmp.eq.s32.totalorder %s23, 1
      %p156 = por %p154, %p155
      %p158 = scmp.ne.s32.totalorder %s143, %s157
      %p159 = scmp.eq.s32.totalorder %s23, 0
      %p160 = por %p158, %p159
      %s162 = sadd.s32 %s161, 1
      %p165 = scmp.eq.s32.totalorder %s17, 1
      %p166 = scmp.ne.s32.totalorder %s161, %s163
      %p167 = scmp.eq.s32.totalorder %s17, 0
      %p168 = por %p166, %p167
      %p169 = scmp.ne.s32.totalorder %s161, %s163
      %p170 = scmp.eq.s32.totalorder %s22, 1
      %p171 = por %p169, %p170
      %p172 = scmp.ne.s32.totalorder %s163, %s164
      %p173 = scmp.eq.s32.totalorder %s22, 0
      %p174 = por %p172, %p173
      %p175 = scmp.ne.s32.totalorder %s163, %s164
      %p176 = scmp.eq.s32.totalorder %s23, 1
      %p177 = por %p175, %p176
      %p179 = scmp.ne.s32.totalorder %s164, %s178
      %p180 = scmp.eq.s32.totalorder %s23, 0
      %p181 = por %p179, %p180
      %s183 = sadd.s32 %s182, 1
      %p186 = scmp.eq.s32.totalorder %s17, 1
      %p187 = scmp.ne.s32.totalorder %s182, %s184
      %p188 = scmp.eq.s32.totalorder %s17, 0
      %p189 = por %p187, %p188
      %p190 = scmp.ne.s32.totalorder %s182, %s184
      %p191 = scmp.eq.s32.totalorder %s22, 1
      %p192 = por %p190, %p191
      %p193 = scmp.ne.s32.totalorder %s184, %s185
      %p194 = scmp.eq.s32.totalorder %s22, 0
      %p195 = por %p193, %p194
      %p196 = scmp.ne.s32.totalorder %s184, %s185
      %p197 = scmp.eq.s32.totalorder %s23, 1
      %p198 = por %p196, %p197
      %p200 = scmp.ne.s32.totalorder %s185, %s199
      %p201 = scmp.eq.s32.totalorder %s23, 0
      %p202 = por %p200, %p201
      %s203 = ssub.s32 %s17, %s24
      %p204 = scmp.eq.s32.totalorder %s203, 0
      %s206 = sadd.s32 %s205, 1
      %s207 = scalar_select %p204, %s205, %s206
      %p210 = pneg %p204
      %p211 = scmp.eq.s32.totalorder %s17, 1
      %p212 = por %p210, %p211
      %p213 = scmp.ne.s32.totalorder %s205, %s208
      %p214 = scmp.eq.s32.totalorder %s17, 0
      %p215 = por %p213, %p214
      %p216 = scmp.ne.s32.totalorder %s205, %s208
      %p217 = scmp.eq.s32.totalorder %s22, 1
      %p218 = por %p216, %p217
      %p219 = scmp.ne.s32.totalorder %s208, %s209
      %p220 = scmp.eq.s32.totalorder %s22, 0
      %p221 = por %p219, %p220
      %p222 = scmp.ne.s32.totalorder %s208, %s209
      %p223 = scmp.eq.s32.totalorder %s23, 1
      %p224 = por %p222, %p223
      %p226 = scmp.ne.s32.totalorder %s209, %s225
      %p227 = scmp.eq.s32.totalorder %s23, 0
      %p228 = por %p226, %p227
      %p229 = scmp.le.s32.totalorder 1, %s17
      %p230 = scmp.lt.s32.totalorder %s17, 3
      %p231 = pnand %p229, %p230
      %p232 = pneg %p231
      // Predicated region
      $region9: #{moe_forward.1} parent=5 // pred_check
        _
      $region10: #{moe_forward.1} parent=5 // pred_check_branch
        %234 = sbr.rel (%p231) target = $region12
      $region11: #{moe_forward.1} parent=5 // pred_region
        %s235 = ssub.s32 %s17, 1
        // Predicated region
        $region13: #{moe_forward.1} parent=11 // pred_check
          %p236 = pneg %p90
        $region14: #{moe_forward.1} parent=11 // pred_check_branch
          %238 = sbr.rel (%p236) target = $region16
        $region15: #{moe_forward.1} parent=11 // pred_region
          _
        $region16: #{moe_forward.1} parent=11 // pred_fallthru
          _
        // Predicated region
        $region17: #{moe_forward.1} parent=11 // pred_check
          %p239 = pneg %p111
        $region18: #{moe_forward.1} parent=11 // pred_check_branch
          %241 = sbr.rel (%p239) target = $region20
        $region19: #{moe_forward.1} parent=11 // pred_region
          _
        $region20: #{moe_forward.1} parent=11 // pred_fallthru
          _
        // Predicated region
        $region21: #{moe_forward.1} parent=11 // pred_check
          %p242 = pneg %p132
        $region22: #{moe_forward.1} parent=11 // pred_check_branch
          %244 = sbr.rel (%p242) target = $region24
        $region23: #{moe_forward.1} parent=11 // pred_region
          _
        $region24: #{moe_forward.1} parent=11 // pred_fallthru
          _
        // Predicated region
        $region25: #{moe_forward.1} parent=11 // pred_check
          %p245 = pneg %p153
        $region26: #{moe_forward.1} parent=11 // pred_check_branch
          %247 = sbr.rel (%p245) target = $region28
        $region27: #{moe_forward.1} parent=11 // pred_region
          _
        $region28: #{moe_forward.1} parent=11 // pred_fallthru
          _
        // Predicated region
        $region29: #{moe_forward.1} parent=11 // pred_check
          %p248 = pneg %p174
        $region30: #{moe_forward.1} parent=11 // pred_check_branch
          %250 = sbr.rel (%p248) target = $region32
        $region31: #{moe_forward.1} parent=11 // pred_region
          _
        $region32: #{moe_forward.1} parent=11 // pred_fallthru
          _
        // Predicated region
        $region33: #{moe_forward.1} parent=11 // pred_check
          %p251 = pneg %p195
        $region34: #{moe_forward.1} parent=11 // pred_check_branch
          %253 = sbr.rel (%p251) target = $region36
        $region35: #{moe_forward.1} parent=11 // pred_region
          _
        $region36: #{moe_forward.1} parent=11 // pred_fallthru
          _
      $region12: #{moe_forward.1} parent=5 // pred_fallthru
        _
      %p254 = scmp.lt.s32.totalorder %s17, 2
      // Predicated region
      $region37: #{moe_forward.1} parent=5 // pred_check
        %p255 = pneg %p254
      $region38: #{moe_forward.1} parent=5 // pred_check_branch
        %257 = sbr.rel (%p255) target = $region40
      $region39: #{moe_forward.1} parent=5 // pred_region
        // Predicated region
        $region41: #{moe_forward.1} parent=39 // pred_check
          %p258 = pneg %p37
        $region42: #{moe_forward.1} parent=39 // pred_check_branch
          %260 = sbr.rel (%p258) target = $region44
        $region43: #{moe_forward.1} parent=39 // pred_region
          %s261 = smul.u32 4, %s17
          %p262 = scmp.lt.s32.totalorder %s261, 7
          %s263 = scalar_select %p262, %s261, 7
          %s264 = smul.addr %s263, 8
          %s265 = scalar_lea.vmem %s0, %s264
          %s266 = smul.u32 4, %s17
        $region44: #{moe_forward.1} parent=39 // pred_fallthru
          _
        // Predicated region
        $region45: #{moe_forward.1} parent=39 // pred_check
          %p267 = pneg %p63
        $region46: #{moe_forward.1} parent=39 // pred_check_branch
          %269 = sbr.rel (%p267) target = $region48
        $region47: #{moe_forward.1} parent=39 // pred_region
          %s270 = smul.u32 4, %s17
          %p271 = scmp.lt.s32.totalorder %s270, 7
          %s272 = scalar_select %p271, %s270, 7
          %s273 = smul.addr %s272, 8
          %s274 = scalar_lea.vmem %s1, %s273
          %s275 = smul.u32 4, %s17
        $region48: #{moe_forward.1} parent=39 // pred_fallthru
          _
      $region40: #{moe_forward.1} parent=5 // pred_fallthru
        _
      %p276 = scmp.le.s32.totalorder 1, %s17
      %p277 = scmp.lt.s32.totalorder %s17, 3
      %p278 = pnand %p276, %p277
      %p279 = pneg %p278
      // Predicated region
      $region49: #{moe_forward.1} parent=5 // pred_check
        _
      $region50: #{moe_forward.1} parent=5 // pred_check_branch
        %281 = sbr.rel (%p278) target = $region52
      $region51: #{moe_forward.1} parent=5 // pred_region
        %s282 = ssub.s32 %s17, 1
        %s283 = smul.u32 4, %s22
        %p284 = scmp.lt.s32.totalorder %s283, 7
        %s285 = scalar_select %p284, %s283, 7
        %s286 = smul.addr %s285, 8
        %s287 = scalar_lea.vmem %s0, %s286
        %p288 = pneg %p43
        %p289 = pneg %p40
        %s290 = smul.u32 4, %s22
        %p291 = scmp.lt.s32.totalorder %s290, 7
        %s292 = scalar_select %p291, %s290, 7
        %s293 = smul.addr %s292, 8
        %s294 = scalar_lea.vmem %s1, %s293
        %p295 = pneg %p69
        %p296 = pneg %p66
        %p297 = pneg %p90
        %p298 = pneg %p87
        %p299 = pneg %p111
        %p300 = pneg %p108
        %p301 = pneg %p132
        %p302 = pneg %p129
        %p303 = pneg %p153
        %p304 = pneg %p150
        %p305 = pneg %p174
        %p306 = pneg %p171
        %p307 = pneg %p195
        %p308 = pneg %p192
        %p309 = pneg %p221
        %p310 = pneg %p218
        %s311 = sand.u32 %s208, 1
        %s312 = scalar_lea.sflag [#allocation3], %s311
        %s313 = sand.u32 %s208, 1
        %s314 = smul.addr %s313, 32
        %s315 = scalar_lea.vmem [#allocation2], %s314
        %s316 = smul.u32 4, %s22
        %p317 = scmp.lt.s32.totalorder %s316, 7
        %s318 = scalar_select %p317, %s316, 7
        %s319 = smul.addr %s318, 8
        %s320 = scalar_lea.vmem %s0, %s319
        %s321 = smul.u32 4, %s22
        %s322 = smul.u32 4, %s22
        %p323 = scmp.lt.s32.totalorder %s322, 7
        %s324 = scalar_select %p323, %s322, 7
        %s325 = smul.addr %s324, 8
        %s326 = scalar_lea.vmem %s1, %s325
        %s327 = smul.u32 4, %s22
        %s328 = smul.u32 4, %s22
        %v329 = vld [vmem:[%s320] sm:$0xff]
        %v330 = vld [vmem:[%s320 + $0x8] sm:$0xff]
        %v331 = vld [vmem:[%s320 + $0x10] sm:$0xff]
        %v332 = vld [vmem:[%s320 + $0x18] sm:$0xff]
        %v333 = vld [vmem:[%s2] sm:$0xff]
        %v334 = vld [vmem:[%s2 + $0x8] sm:$0xff]
        %v335 = vld [vmem:[%s2 + $0x10] sm:$0xff]
        %v336 = vld [vmem:[%s2 + $0x18] sm:$0xff]
        %v337 = vld [vmem:[%s2 + $0x20] sm:$0xff]
        %v338 = vld [vmem:[%s2 + $0x28] sm:$0xff]
        %v339 = vld [vmem:[%s2 + $0x30] sm:$0xff]
        %v340 = vld [vmem:[%s2 + $0x38] sm:$0xff]
        %v341 = vld [vmem:[%s2 + $0x40] sm:$0xff]
        %v342 = vld [vmem:[%s2 + $0x48] sm:$0xff]
        %v343 = vld [vmem:[%s2 + $0x50] sm:$0xff]
        %v344 = vld [vmem:[%s2 + $0x58] sm:$0xff]
        %v345 = vld [vmem:[%s2 + $0x60] sm:$0xff]
        %v346 = vld [vmem:[%s2 + $0x68] sm:$0xff]
        %v347 = vld [vmem:[%s2 + $0x70] sm:$0xff]
        %v348 = vld [vmem:[%s2 + $0x78] sm:$0xff]
        %v349 = vld [vmem:[%s2 + $0x80] sm:$0xff]
        %v350 = vld [vmem:[%s2 + $0x88] sm:$0xff]
        %v351 = vld [vmem:[%s2 + $0x90] sm:$0xff]
        %v352 = vld [vmem:[%s2 + $0x98] sm:$0xff]
        %v353 = vld [vmem:[%s2 + $0xa0] sm:$0xff]
        %v354 = vld [vmem:[%s2 + $0xa8] sm:$0xff]
        %v355 = vld [vmem:[%s2 + $0xb0] sm:$0xff]
        %v356 = vld [vmem:[%s2 + $0xb8] sm:$0xff]
        %v357 = vld [vmem:[%s2 + $0xc0] sm:$0xff]
        %v358 = vld [vmem:[%s2 + $0xc8] sm:$0xff]
        %v359 = vld [vmem:[%s2 + $0xd0] sm:$0xff]
        %v360 = vld [vmem:[%s2 + $0xd8] sm:$0xff]
        %v361 = vld [vmem:[%s2 + $0xe0] sm:$0xff]
        %v362 = vld [vmem:[%s2 + $0xe8] sm:$0xff]
        %v363 = vld [vmem:[%s2 + $0xf0] sm:$0xff]
        %v364 = vld [vmem:[%s2 + $0xf8] sm:$0xff]
        %v365 = vld [vmem:[%s2 + $0x100] sm:$0xff]
        %v366 = vld [vmem:[%s2 + $0x108] sm:$0xff]
        %v367 = vld [vmem:[%s2 + $0x110] sm:$0xff]
        %v368 = vld [vmem:[%s2 + $0x118] sm:$0xff]
        %v369 = vld [vmem:[%s2 + $0x120] sm:$0xff]
        %v370 = vld [vmem:[%s2 + $0x128] sm:$0xff]
        %v371 = vld [vmem:[%s2 + $0x130] sm:$0xff]
        %v372 = vld [vmem:[%s2 + $0x138] sm:$0xff]
        %v373 = vld [vmem:[%s2 + $0x140] sm:$0xff]
        %v374 = vld [vmem:[%s2 + $0x148] sm:$0xff]
        %v375 = vld [vmem:[%s2 + $0x150] sm:$0xff]
        %v376 = vld [vmem:[%s2 + $0x158] sm:$0xff]
        %v377 = vld [vmem:[%s2 + $0x160] sm:$0xff]
        %v378 = vld [vmem:[%s2 + $0x168] sm:$0xff]
        %v379 = vld [vmem:[%s2 + $0x170] sm:$0xff]
        %v380 = vld [vmem:[%s2 + $0x178] sm:$0xff]
        %v381 = vld [vmem:[%s2 + $0x180] sm:$0xff]
        %v382 = vld [vmem:[%s2 + $0x188] sm:$0xff]
        %v383 = vld [vmem:[%s2 + $0x190] sm:$0xff]
        %v384 = vld [vmem:[%s2 + $0x198] sm:$0xff]
        %v385 = vld [vmem:[%s2 + $0x1a0] sm:$0xff]
        %v386 = vld [vmem:[%s2 + $0x1a8] sm:$0xff]
        %v387 = vld [vmem:[%s2 + $0x1b0] sm:$0xff]
        %v388 = vld [vmem:[%s2 + $0x1b8] sm:$0xff]
        %v389 = vld [vmem:[%s2 + $0x1c0] sm:$0xff]
        %v390 = vld [vmem:[%s2 + $0x1c8] sm:$0xff]
        %v391 = vld [vmem:[%s2 + $0x1d0] sm:$0xff]
        %v392 = vld [vmem:[%s2 + $0x1d8] sm:$0xff]
        %v393 = vld [vmem:[%s2 + $0x1e0] sm:$0xff]
        %v394 = vld [vmem:[%s2 + $0x1e8] sm:$0xff]
        %v395 = vld [vmem:[%s2 + $0x1f0] sm:$0xff]
        %v396 = vld [vmem:[%s2 + $0x1f8] sm:$0xff]
        %v397 = vld [vmem:[%s3] sm:$0xf]
        %v399 = vlaneseq
        %v400 = vshrl.u32 %v399, 7
        %v401 = vsub.s32 0, %v400
        %v402 = vrot.slane %v397, %v401
        %v403 = vlaneseq
        %v404 = vshrl.u32 %v403, 7
        %v405 = vsub.s32 1, %v404
        %v406 = vrot.slane %v397, %v405
        %v407 = vlaneseq
        %v408 = vshrl.u32 %v407, 7
        %v409 = vsub.s32 2, %v408
        %v410 = vrot.slane %v397, %v409
        %v411 = vlaneseq
        %v412 = vshrl.u32 %v411, 7
        %v413 = vsub.s32 3, %v412
        %v414 = vrot.slane %v397, %v413
        %419 = vmatprep.subr.mxu0 %v334
        %420 = vmatpush1.msra.mxu0 %v333
        %421 = vmatprep.subr.mxu0 %v338
        %422 = vmatpush1.msra.mxu0 %v337
        %423 = vmatprep.subr.mxu0 %v342
        %424 = vmatpush1.msra.mxu0 %v341
        %425 = vmatprep.subr.mxu0 %v346
        %426 = vmatpush1.msra.mxu0 %v345
        %427 = vmatprep.subr.mxu0 %v350
        %428 = vmatpush1.msra.mxu0 %v349
        %429 = vmatprep.subr.mxu0 %v354
        %430 = vmatpush1.msra.mxu0 %v353
        %431 = vmatprep.subr.mxu0 %v358
        %432 = vmatpush1.msra.mxu0 %v357
        %433 = vmatprep.subr.mxu0 %v362
        %434 = vmatpush1.msra.mxu0 %v361
        %435 = vmatprep.subr.mxu0 %v366
        %436 = vmatpush1.msra.mxu0 %v365
        %437 = vmatprep.subr.mxu0 %v370
        %438 = vmatpush1.msra.mxu0 %v369
        %439 = vmatprep.subr.mxu0 %v374
        %440 = vmatpush1.msra.mxu0 %v373
        %441 = vmatprep.subr.mxu0 %v378
        %442 = vmatpush1.msra.mxu0 %v377
        %443 = vmatprep.subr.mxu0 %v382
        %444 = vmatpush1.msra.mxu0 %v381
        %445 = vmatprep.subr.mxu0 %v386
        %446 = vmatpush1.msra.mxu0 %v385
        %447 = vmatprep.subr.mxu0 %v390
        %448 = vmatpush1.msra.mxu0 %v389
        %449 = vmatprep.subr.mxu0 %v394
        %450 = vmatpush1.msra.mxu0 %v393
        %451 = vmatprep.subr.mxu0 0.0
        %452 = vmatpush1.msra.mxu0 0.0
        %453 = vmatprep.subr.mxu0 0.0
        %454 = vmatpush1.msra.mxu0 0.0
        %455 = vmatprep.subr.mxu0 0.0
        %456 = vmatpush1.msra.mxu0 0.0
        %457 = vmatprep.subr.mxu0 0.0
        %458 = vmatpush1.msra.mxu0 0.0
        %459 = vmatprep.subr.mxu0 0.0
        %460 = vmatpush1.msra.mxu0 0.0
        %461 = vmatprep.subr.mxu0 0.0
        %462 = vmatpush1.msra.mxu0 0.0
        %463 = vmatprep.subr.mxu0 0.0
        %464 = vmatpush1.msra.mxu0 0.0
        %465 = vmatprep.subr.mxu0 0.0
        %466 = vmatpush1.msra.mxu0 0.0
        %467 = vmatprep.subr.mxu0 0.0
        %468 = vmatpush1.msra.mxu0 0.0
        %469 = vmatprep.subr.mxu0 0.0
        %470 = vmatpush1.msra.mxu0 0.0
        %471 = vmatprep.subr.mxu0 0.0
        %472 = vmatpush1.msra.mxu0 0.0
        %473 = vmatprep.subr.mxu0 0.0
        %474 = vmatpush1.msra.mxu0 0.0
        %475 = vmatprep.subr.mxu0 0.0
        %476 = vmatpush1.msra.mxu0 0.0
        %477 = vmatprep.subr.mxu0 0.0
        %478 = vmatpush1.msra.mxu0 0.0
        %479 = vmatprep.subr.mxu0 0.0
        %480 = vmatpush1.msra.mxu0 0.0
        %481 = vmatprep.subr.mxu0 0.0
        %482 = vmatpush1.msra.mxu0 0.0
        %483 = vmatprep.mubr.f32.mxu0 0.0
        %484 = vmatmul.mubr.f32.gmra.mrb[0].mxu0 %v329
        %v485 = vpop.f32.mrb[0].mxu0
        %v486 = vadd.f32 %v402, %v485
        %v487 = vpop.f32.mrb[0].mxu0
        %v488 = vadd.f32 %v406, %v487
        %489 = vmatprep.mubr.f32.mxu0 0.0
        %490 = vmatmul.mubr.f32.gmra.mrb[0].mxu0 %v330
        %v491 = vpop.f32.mrb[0].mxu0
        %v492 = vadd.f32 %v402, %v491
        %v493 = vpop.f32.mrb[0].mxu0
        %v494 = vadd.f32 %v406, %v493
        %495 = vmatprep.mubr.f32.mxu0 0.0
        %496 = vmatmul.mubr.f32.gmra.mrb[0].mxu0 %v331
        %v497 = vpop.f32.mrb[0].mxu0
        %v498 = vadd.f32 %v402, %v497
        %v499 = vpop.f32.mrb[0].mxu0
        %v500 = vadd.f32 %v406, %v499
        %501 = vmatprep.mubr.f32.mxu0 0.0
        %502 = vmatmul.mubr.f32.gmra.mrb[0].mxu0 %v332
        %v503 = vpop.f32.mrb[0].mxu0
        %v504 = vadd.f32 %v402, %v503
        %v505 = vpop.f32.mrb[0].mxu0
        %v506 = vadd.f32 %v406, %v505
        %507 = vdwg.mxu0
        %508 = vmatprep.subr.mxu0 %v336
        %509 = vmatpush1.msra.mxu0 %v335
        %510 = vmatprep.subr.mxu0 %v340
        %511 = vmatpush1.msra.mxu0 %v339
        %512 = vmatprep.subr.mxu0 %v344
        %513 = vmatpush1.msra.mxu0 %v343
        %514 = vmatprep.subr.mxu0 %v348
        %515 = vmatpush1.msra.mxu0 %v347
        %516 = vmatprep.subr.mxu0 %v352
        %517 = vmatpush1.msra.mxu0 %v351
        %518 = vmatprep.subr.mxu0 %v356
        %519 = vmatpush1.msra.mxu0 %v355
        %520 = vmatprep.subr.mxu0 %v360
        %521 = vmatpush1.msra.mxu0 %v359
        %522 = vmatprep.subr.mxu0 %v364
        %523 = vmatpush1.msra.mxu0 %v363
        %524 = vmatprep.subr.mxu0 %v368
        %525 = vmatpush1.msra.mxu0 %v367
        %526 = vmatprep.subr.mxu0 %v372
        %527 = vmatpush1.msra.mxu0 %v371
        %528 = vmatprep.subr.mxu0 %v376
        %529 = vmatpush1.msra.mxu0 %v375
        %530 = vmatprep.subr.mxu0 %v380
        %531 = vmatpush1.msra.mxu0 %v379
        %532 = vmatprep.subr.mxu0 %v384
        %533 = vmatpush1.msra.mxu0 %v383
        %534 = vmatprep.subr.mxu0 %v388
        %535 = vmatpush1.msra.mxu0 %v387
        %536 = vmatprep.subr.mxu0 %v392
        %537 = vmatpush1.msra.mxu0 %v391
        %538 = vmatprep.subr.mxu0 %v396
        %539 = vmatpush1.msra.mxu0 %v395
        %540 = vmatprep.subr.mxu0 0.0
        %541 = vmatpush1.msra.mxu0 0.0
        %542 = vmatprep.subr.mxu0 0.0
        %543 = vmatpush1.msra.mxu0 0.0
        %544 = vmatprep.subr.mxu0 0.0
        %545 = vmatpush1.msra.mxu0 0.0
        %546 = vmatprep.subr.mxu0 0.0
        %547 = vmatpush1.msra.mxu0 0.0
        %548 = vmatprep.subr.mxu0 0.0
        %549 = vmatpush1.msra.mxu0 0.0
        %550 = vmatprep.subr.mxu0 0.0
        %551 = vmatpush1.msra.mxu0 0.0
        %552 = vmatprep.subr.mxu0 0.0
        %553 = vmatpush1.msra.mxu0 0.0
        %554 = vmatprep.subr.mxu0 0.0
        %555 = vmatpush1.msra.mxu0 0.0
        %556 = vmatprep.subr.mxu0 0.0
        %557 = vmatpush1.msra.mxu0 0.0
        %558 = vmatprep.subr.mxu0 0.0
        %559 = vmatpush1.msra.mxu0 0.0
        %560 = vmatprep.subr.mxu0 0.0
        %561 = vmatpush1.msra.mxu0 0.0
        %562 = vmatprep.subr.mxu0 0.0
        %563 = vmatpush1.msra.mxu0 0.0
        %564 = vmatprep.subr.mxu0 0.0
        %565 = vmatpush1.msra.mxu0 0.0
        %566 = vmatprep.subr.mxu0 0.0
        %567 = vmatpush1.msra.mxu0 0.0
        %568 = vmatprep.subr.mxu0 0.0
        %569 = vmatpush1.msra.mxu0 0.0
        %570 = vmatprep.subr.mxu0 0.0
        %571 = vmatpush1.msra.mxu0 0.0
        %572 = vmatprep.mubr.f32.mxu0 0.0
        %573 = vmatmul.mubr.f32.gmra.mrb[0].mxu0 %v329
        %v574 = vpop.f32.mrb[0].mxu0
        %v575 = vadd.f32 %v410, %v574
        %v576 = vpop.f32.mrb[0].mxu0
        %v577 = vadd.f32 %v414, %v576
        %578 = vmatprep.mubr.f32.mxu0 0.0
        %579 = vmatmul.mubr.f32.gmra.mrb[0].mxu0 %v330
        %v580 = vpop.f32.mrb[0].mxu0
        %v581 = vadd.f32 %v410, %v580
        %v582 = vpop.f32.mrb[0].mxu0
        %v583 = vadd.f32 %v414, %v582
        %584 = vmatprep.mubr.f32.mxu0 0.0
        %585 = vmatmul.mubr.f32.gmra.mrb[0].mxu0 %v331
        %v586 = vpop.f32.mrb[0].mxu0
        %v587 = vadd.f32 %v410, %v586
        %v588 = vpop.f32.mrb[0].mxu0
        %v589 = vadd.f32 %v414, %v588
        %590 = vmatprep.mubr.f32.mxu0 0.0
        %591 = vmatmul.mubr.f32.gmra.mrb[0].mxu0 %v332
        %v592 = vpop.f32.mrb[0].mxu0
        %v593 = vadd.f32 %v410, %v592
        %v594 = vpop.f32.mrb[0].mxu0
        %v595 = vadd.f32 %v414, %v594
        %596 = vdwg.mxu0
        %v597 = vmul.f32 %v486, %v486
        %v598 = vmul.f32 %v488, %v488
        %v599 = vmul.f32 %v575, %v575
        %v600 = vmul.f32 %v577, %v577
        %v601 = vmul.f32 %v492, %v492
        %v602 = vmul.f32 %v494, %v494
        %v603 = vmul.f32 %v581, %v581
        %v604 = vmul.f32 %v583, %v583
        %v605 = vmul.f32 %v498, %v498
        %v606 = vmul.f32 %v500, %v500
        %v607 = vmul.f32 %v587, %v587
        %v608 = vmul.f32 %v589, %v589
        %v609 = vmul.f32 %v504, %v504
        %v610 = vmul.f32 %v506, %v506
        %v611 = vmul.f32 %v593, %v593
        %v612 = vmul.f32 %v595, %v595
        %v613 = vmul.f32 %v486, %v597
        %v614 = vmul.f32 %v488, %v598
        %v615 = vmul.f32 %v575, %v599
        %v616 = vmul.f32 %v577, %v600
        %v617 = vmul.f32 %v492, %v601
        %v618 = vmul.f32 %v494, %v602
        %v619 = vmul.f32 %v581, %v603
        %v620 = vmul.f32 %v583, %v604
        %v621 = vmul.f32 %v498, %v605
        %v622 = vmul.f32 %v500, %v606
        %v623 = vmul.f32 %v587, %v607
        %v624 = vmul.f32 %v589, %v608
        %v625 = vmul.f32 %v504, %v609
        %v626 = vmul.f32 %v506, %v610
        %v627 = vmul.f32 %v593, %v611
        %v628 = vmul.f32 %v595, %v612
        %v629 = vmul.f32 %v613, 0.044715
        %v630 = vmul.f32 %v614, 0.044715
        %v631 = vmul.f32 %v615, 0.044715
        %v632 = vmul.f32 %v616, 0.044715
        %v633 = vmul.f32 %v617, 0.044715
        %v634 = vmul.f32 %v618, 0.044715
        %v635 = vmul.f32 %v619, 0.044715
        %v636 = vmul.f32 %v620, 0.044715
        %v637 = vmul.f32 %v621, 0.044715
        %v638 = vmul.f32 %v622, 0.044715
        %v639 = vmul.f32 %v623, 0.044715
        %v640 = vmul.f32 %v624, 0.044715
        %v641 = vmul.f32 %v625, 0.044715
        %v642 = vmul.f32 %v626, 0.044715
        %v643 = vmul.f32 %v627, 0.044715
        %v644 = vmul.f32 %v628, 0.044715
        %v645 = vadd.f32 %v486, %v629
        %v646 = vadd.f32 %v488, %v630
        %v647 = vadd.f32 %v575, %v631
        %v648 = vadd.f32 %v577, %v632
        %v649 = vadd.f32 %v492, %v633
        %v650 = vadd.f32 %v494, %v634
        %v651 = vadd.f32 %v581, %v635
        %v652 = vadd.f32 %v583, %v636
        %v653 = vadd.f32 %v498, %v637
        %v654 = vadd.f32 %v500, %v638
        %v655 = vadd.f32 %v587, %v639
        %v656 = vadd.f32 %v589, %v640
        %v657 = vadd.f32 %v504, %v641
        %v658 = vadd.f32 %v506, %v642
        %v659 = vadd.f32 %v593, %v643
        %v660 = vadd.f32 %v595, %v644
        %v661 = vmul.f32 %v645, 0.7978846
        %v662 = vmul.f32 %v646, 0.7978846
        %v663 = vmul.f32 %v647, 0.7978846
        %v664 = vmul.f32 %v648, 0.7978846
        %v665 = vmul.f32 %v649, 0.7978846
        %v666 = vmul.f32 %v650, 0.7978846
        %v667 = vmul.f32 %v651, 0.7978846
        %v668 = vmul.f32 %v652, 0.7978846
        %v669 = vmul.f32 %v653, 0.7978846
        %v670 = vmul.f32 %v654, 0.7978846
        %v671 = vmul.f32 %v655, 0.7978846
        %v672 = vmul.f32 %v656, 0.7978846
        %v673 = vmul.f32 %v657, 0.7978846
        %v674 = vmul.f32 %v658, 0.7978846
        %v675 = vmul.f32 %v659, 0.7978846
        %v676 = vmul.f32 %v660, 0.7978846
        %v677 = vtanh.pop %v661
        %v678 = vtanh.pop %v662
        %v679 = vtanh.pop %v663
        %v680 = vtanh.pop %v664
        %v681 = vtanh.pop %v665
        %v682 = vtanh.pop %v666
        %v683 = vtanh.pop %v667
        %v684 = vtanh.pop %v668
        %v685 = vtanh.pop %v669
        %v686 = vtanh.pop %v670
        %v687 = vtanh.pop %v671
        %v688 = vtanh.pop %v672
        %v689 = vtanh.pop %v673
        %v690 = vtanh.pop %v674
        %v691 = vtanh.pop %v675
        %v692 = vtanh.pop %v676
        %v693 = vadd.f32 %v677, 1.0
        %v694 = vadd.f32 %v678, 1.0
        %v695 = vadd.f32 %v679, 1.0
        %v696 = vadd.f32 %v680, 1.0
        %v697 = vadd.f32 %v681, 1.0
        %v698 = vadd.f32 %v682, 1.0
        %v699 = vadd.f32 %v683, 1.0
        %v700 = vadd.f32 %v684, 1.0
        %v701 = vadd.f32 %v685, 1.0
        %v702 = vadd.f32 %v686, 1.0
        %v703 = vadd.f32 %v687, 1.0
        %v704 = vadd.f32 %v688, 1.0
        %v705 = vadd.f32 %v689, 1.0
        %v706 = vadd.f32 %v690, 1.0
        %v707 = vadd.f32 %v691, 1.0
        %v708 = vadd.f32 %v692, 1.0
        %v709 = vmul.f32 %v693, 0.5
        %v710 = vmul.f32 %v694, 0.5
        %v711 = vmul.f32 %v695, 0.5
        %v712 = vmul.f32 %v696, 0.5
        %v713 = vmul.f32 %v697, 0.5
        %v714 = vmul.f32 %v698, 0.5
        %v715 = vmul.f32 %v699, 0.5
        %v716 = vmul.f32 %v700, 0.5
        %v717 = vmul.f32 %v701, 0.5
        %v718 = vmul.f32 %v702, 0.5
        %v719 = vmul.f32 %v703, 0.5
        %v720 = vmul.f32 %v704, 0.5
        %v721 = vmul.f32 %v705, 0.5
        %v722 = vmul.f32 %v706, 0.5
        %v723 = vmul.f32 %v707, 0.5
        %v724 = vmul.f32 %v708, 0.5
        %v725 = vmul.f32 %v486, %v709
        %v726 = vmul.f32 %v488, %v710
        %v727 = vmul.f32 %v575, %v711
        %v728 = vmul.f32 %v577, %v712
        %v729 = vmul.f32 %v492, %v713
        %v730 = vmul.f32 %v494, %v714
        %v731 = vmul.f32 %v581, %v715
        %v732 = vmul.f32 %v583, %v716
        %v733 = vmul.f32 %v498, %v717
        %v734 = vmul.f32 %v500, %v718
        %v735 = vmul.f32 %v587, %v719
        %v736 = vmul.f32 %v589, %v720
        %v737 = vmul.f32 %v504, %v721
        %v738 = vmul.f32 %v506, %v722
        %v739 = vmul.f32 %v593, %v723
        %v740 = vmul.f32 %v595, %v724
        %v741 = vld [vmem:[%s4] sm:$0xff]
        %v742 = vld [vmem:[%s4 + $0x8] sm:$0xff]
        %v743 = vld [vmem:[%s4 + $0x10] sm:$0xff]
        %v744 = vld [vmem:[%s4 + $0x18] sm:$0xff]
        %v745 = vld [vmem:[%s4 + $0x20] sm:$0xff]
        %v746 = vld [vmem:[%s4 + $0x28] sm:$0xff]
        %v747 = vld [vmem:[%s4 + $0x30] sm:$0xff]
        %v748 = vld [vmem:[%s4 + $0x38] sm:$0xff]
        %v749 = vld [vmem:[%s4 + $0x40] sm:$0xff]
        %v750 = vld [vmem:[%s4 + $0x48] sm:$0xff]
        %v751 = vld [vmem:[%s4 + $0x50] sm:$0xff]
        %v752 = vld [vmem:[%s4 + $0x58] sm:$0xff]
        %v753 = vld [vmem:[%s4 + $0x60] sm:$0xff]
        %v754 = vld [vmem:[%s4 + $0x68] sm:$0xff]
        %v755 = vld [vmem:[%s4 + $0x70] sm:$0xff]
        %v756 = vld [vmem:[%s4 + $0x78] sm:$0xff]
        %v757 = vld [vmem:[%s4 + $0x80] sm:$0xff]
        %v758 = vld [vmem:[%s4 + $0x88] sm:$0xff]
        %v759 = vld [vmem:[%s4 + $0x90] sm:$0xff]
        %v760 = vld [vmem:[%s4 + $0x98] sm:$0xff]
        %v761 = vld [vmem:[%s4 + $0xa0] sm:$0xff]
        %v762 = vld [vmem:[%s4 + $0xa8] sm:$0xff]
        %v763 = vld [vmem:[%s4 + $0xb0] sm:$0xff]
        %v764 = vld [vmem:[%s4 + $0xb8] sm:$0xff]
        %v765 = vld [vmem:[%s4 + $0xc0] sm:$0xff]
        %v766 = vld [vmem:[%s4 + $0xc8] sm:$0xff]
        %v767 = vld [vmem:[%s4 + $0xd0] sm:$0xff]
        %v768 = vld [vmem:[%s4 + $0xd8] sm:$0xff]
        %v769 = vld [vmem:[%s4 + $0xe0] sm:$0xff]
        %v770 = vld [vmem:[%s4 + $0xe8] sm:$0xff]
        %v771 = vld [vmem:[%s4 + $0xf0] sm:$0xff]
        %v772 = vld [vmem:[%s4 + $0xf8] sm:$0xff]
        %v773 = vld [vmem:[%s4 + $0x100] sm:$0xff]
        %v774 = vld [vmem:[%s4 + $0x108] sm:$0xff]
        %v775 = vld [vmem:[%s4 + $0x110] sm:$0xff]
        %v776 = vld [vmem:[%s4 + $0x118] sm:$0xff]
        %v777 = vld [vmem:[%s4 + $0x120] sm:$0xff]
        %v778 = vld [vmem:[%s4 + $0x128] sm:$0xff]
        %v779 = vld [vmem:[%s4 + $0x130] sm:$0xff]
        %v780 = vld [vmem:[%s4 + $0x138] sm:$0xff]
        %v781 = vld [vmem:[%s4 + $0x140] sm:$0xff]
        %v782 = vld [vmem:[%s4 + $0x148] sm:$0xff]
        %v783 = vld [vmem:[%s4 + $0x150] sm:$0xff]
        %v784 = vld [vmem:[%s4 + $0x158] sm:$0xff]
        %v785 = vld [vmem:[%s4 + $0x160] sm:$0xff]
        %v786 = vld [vmem:[%s4 + $0x168] sm:$0xff]
        %v787 = vld [vmem:[%s4 + $0x170] sm:$0xff]
        %v788 = vld [vmem:[%s4 + $0x178] sm:$0xff]
        %v789 = vld [vmem:[%s4 + $0x180] sm:$0xff]
        %v790 = vld [vmem:[%s4 + $0x188] sm:$0xff]
        %v791 = vld [vmem:[%s4 + $0x190] sm:$0xff]
        %v792 = vld [vmem:[%s4 + $0x198] sm:$0xff]
        %v793 = vld [vmem:[%s4 + $0x1a0] sm:$0xff]
        %v794 = vld [vmem:[%s4 + $0x1a8] sm:$0xff]
        %v795 = vld [vmem:[%s4 + $0x1b0] sm:$0xff]
        %v796 = vld [vmem:[%s4 + $0x1b8] sm:$0xff]
        %v797 = vld [vmem:[%s4 + $0x1c0] sm:$0xff]
        %v798 = vld [vmem:[%s4 + $0x1c8] sm:$0xff]
        %v799 = vld [vmem:[%s4 + $0x1d0] sm:$0xff]
        %v800 = vld [vmem:[%s4 + $0x1d8] sm:$0xff]
        %v801 = vld [vmem:[%s4 + $0x1e0] sm:$0xff]
        %v802 = vld [vmem:[%s4 + $0x1e8] sm:$0xff]
        %v803 = vld [vmem:[%s4 + $0x1f0] sm:$0xff]
        %v804 = vld [vmem:[%s4 + $0x1f8] sm:$0xff]
        %v805 = vld [vmem:[%s4 + $0x200] sm:$0xff]
        %v806 = vld [vmem:[%s4 + $0x208] sm:$0xff]
        %v807 = vld [vmem:[%s4 + $0x210] sm:$0xff]
        %v808 = vld [vmem:[%s4 + $0x218] sm:$0xff]
        %v809 = vld [vmem:[%s4 + $0x220] sm:$0xff]
        %v810 = vld [vmem:[%s4 + $0x228] sm:$0xff]
        %v811 = vld [vmem:[%s4 + $0x230] sm:$0xff]
        %v812 = vld [vmem:[%s4 + $0x238] sm:$0xff]
        %v813 = vld [vmem:[%s4 + $0x240] sm:$0xff]
        %v814 = vld [vmem:[%s4 + $0x248] sm:$0xff]
        %v815 = vld [vmem:[%s4 + $0x250] sm:$0xff]
        %v816 = vld [vmem:[%s4 + $0x258] sm:$0xff]
        %v817 = vld [vmem:[%s4 + $0x260] sm:$0xff]
        %v818 = vld [vmem:[%s4 + $0x268] sm:$0xff]
        %v819 = vld [vmem:[%s4 + $0x270] sm:$0xff]
        %v820 = vld [vmem:[%s4 + $0x278] sm:$0xff]
        %v821 = vld [vmem:[%s4 + $0x280] sm:$0xff]
        %v822 = vld [vmem:[%s4 + $0x288] sm:$0xff]
        %v823 = vld [vmem:[%s4 + $0x290] sm:$0xff]
        %v824 = vld [vmem:[%s4 + $0x298] sm:$0xff]
        %v825 = vld [vmem:[%s4 + $0x2a0] sm:$0xff]
        %v826 = vld [vmem:[%s4 + $0x2a8] sm:$0xff]
        %v827 = vld [vmem:[%s4 + $0x2b0] sm:$0xff]
        %v828 = vld [vmem:[%s4 + $0x2b8] sm:$0xff]
        %v829 = vld [vmem:[%s4 + $0x2c0] sm:$0xff]
        %v830 = vld [vmem:[%s4 + $0x2c8] sm:$0xff]
        %v831 = vld [vmem:[%s4 + $0x2d0] sm:$0xff]
        %v832 = vld [vmem:[%s4 + $0x2d8] sm:$0xff]
        %v833 = vld [vmem:[%s4 + $0x2e0] sm:$0xff]
        %v834 = vld [vmem:[%s4 + $0x2e8] sm:$0xff]
        %v835 = vld [vmem:[%s4 + $0x2f0] sm:$0xff]
        %v836 = vld [vmem:[%s4 + $0x2f8] sm:$0xff]
        %v837 = vld [vmem:[%s4 + $0x300] sm:$0xff]
        %v838 = vld [vmem:[%s4 + $0x308] sm:$0xff]
        %v839 = vld [vmem:[%s4 + $0x310] sm:$0xff]
        %v840 = vld [vmem:[%s4 + $0x318] sm:$0xff]
        %v841 = vld [vmem:[%s4 + $0x320] sm:$0xff]
        %v842 = vld [vmem:[%s4 + $0x328] sm:$0xff]
        %v843 = vld [vmem:[%s4 + $0x330] sm:$0xff]
        %v844 = vld [vmem:[%s4 + $0x338] sm:$0xff]
        %v845 = vld [vmem:[%s4 + $0x340] sm:$0xff]
        %v846 = vld [vmem:[%s4 + $0x348] sm:$0xff]
        %v847 = vld [vmem:[%s4 + $0x350] sm:$0xff]
        %v848 = vld [vmem:[%s4 + $0x358] sm:$0xff]
        %v849 = vld [vmem:[%s4 + $0x360] sm:$0xff]
        %v850 = vld [vmem:[%s4 + $0x368] sm:$0xff]
        %v851 = vld [vmem:[%s4 + $0x370] sm:$0xff]
        %v852 = vld [vmem:[%s4 + $0x378] sm:$0xff]
        %v853 = vld [vmem:[%s4 + $0x380] sm:$0xff]
        %v854 = vld [vmem:[%s4 + $0x388] sm:$0xff]
        %v855 = vld [vmem:[%s4 + $0x390] sm:$0xff]
        %v856 = vld [vmem:[%s4 + $0x398] sm:$0xff]
        %v857 = vld [vmem:[%s4 + $0x3a0] sm:$0xff]
        %v858 = vld [vmem:[%s4 + $0x3a8] sm:$0xff]
        %v859 = vld [vmem:[%s4 + $0x3b0] sm:$0xff]
        %v860 = vld [vmem:[%s4 + $0x3b8] sm:$0xff]
        %v861 = vld [vmem:[%s4 + $0x3c0] sm:$0xff]
        %v862 = vld [vmem:[%s4 + $0x3c8] sm:$0xff]
        %v863 = vld [vmem:[%s4 + $0x3d0] sm:$0xff]
        %v864 = vld [vmem:[%s4 + $0x3d8] sm:$0xff]
        %v865 = vld [vmem:[%s4 + $0x3e0] sm:$0xff]
        %v866 = vld [vmem:[%s4 + $0x3e8] sm:$0xff]
        %v867 = vld [vmem:[%s4 + $0x3f0] sm:$0xff]
        %v868 = vld [vmem:[%s4 + $0x3f8] sm:$0xff]
        %v869 = vld [vmem:[%s4 + $0x400] sm:$0xff]
        %v870 = vld [vmem:[%s4 + $0x408] sm:$0xff]
        %v871 = vld [vmem:[%s4 + $0x410] sm:$0xff]
        %v872 = vld [vmem:[%s4 + $0x418] sm:$0xff]
        %v873 = vld [vmem:[%s4 + $0x420] sm:$0xff]
        %v874 = vld [vmem:[%s4 + $0x428] sm:$0xff]
        %v875 = vld [vmem:[%s4 + $0x430] sm:$0xff]
        %v876 = vld [vmem:[%s4 + $0x438] sm:$0xff]
        %v877 = vld [vmem:[%s4 + $0x440] sm:$0xff]
        %v878 = vld [vmem:[%s4 + $0x448] sm:$0xff]
        %v879 = vld [vmem:[%s4 + $0x450] sm:$0xff]
        %v880 = vld [vmem:[%s4 + $0x458] sm:$0xff]
        %v881 = vld [vmem:[%s4 + $0x460] sm:$0xff]
        %v882 = vld [vmem:[%s4 + $0x468] sm:$0xff]
        %v883 = vld [vmem:[%s4 + $0x470] sm:$0xff]
        %v884 = vld [vmem:[%s4 + $0x478] sm:$0xff]
        %v885 = vld [vmem:[%s4 + $0x480] sm:$0xff]
        %v886 = vld [vmem:[%s4 + $0x488] sm:$0xff]
        %v887 = vld [vmem:[%s4 + $0x490] sm:$0xff]
        %v888 = vld [vmem:[%s4 + $0x498] sm:$0xff]
        %v889 = vld [vmem:[%s4 + $0x4a0] sm:$0xff]
        %v890 = vld [vmem:[%s4 + $0x4a8] sm:$0xff]
        %v891 = vld [vmem:[%s4 + $0x4b0] sm:$0xff]
        %v892 = vld [vmem:[%s4 + $0x4b8] sm:$0xff]
        %v893 = vld [vmem:[%s4 + $0x4c0] sm:$0xff]
        %v894 = vld [vmem:[%s4 + $0x4c8] sm:$0xff]
        %v895 = vld [vmem:[%s4 + $0x4d0] sm:$0xff]
        %v896 = vld [vmem:[%s4 + $0x4d8] sm:$0xff]
        %v897 = vld [vmem:[%s4 + $0x4e0] sm:$0xff]
        %v898 = vld [vmem:[%s4 + $0x4e8] sm:$0xff]
        %v899 = vld [vmem:[%s4 + $0x4f0] sm:$0xff]
        %v900 = vld [vmem:[%s4 + $0x4f8] sm:$0xff]
        %v901 = vld [vmem:[%s4 + $0x500] sm:$0xff]
        %v902 = vld [vmem:[%s4 + $0x508] sm:$0xff]
        %v903 = vld [vmem:[%s4 + $0x510] sm:$0xff]
        %v904 = vld [vmem:[%s4 + $0x518] sm:$0xff]
        %v905 = vld [vmem:[%s4 + $0x520] sm:$0xff]
        %v906 = vld [vmem:[%s4 + $0x528] sm:$0xff]
        %v907 = vld [vmem:[%s4 + $0x530] sm:$0xff]
        %v908 = vld [vmem:[%s4 + $0x538] sm:$0xff]
        %v909 = vld [vmem:[%s4 + $0x540] sm:$0xff]
        %v910 = vld [vmem:[%s4 + $0x548] sm:$0xff]
        %v911 = vld [vmem:[%s4 + $0x550] sm:$0xff]
        %v912 = vld [vmem:[%s4 + $0x558] sm:$0xff]
        %v913 = vld [vmem:[%s4 + $0x560] sm:$0xff]
        %v914 = vld [vmem:[%s4 + $0x568] sm:$0xff]
        %v915 = vld [vmem:[%s4 + $0x570] sm:$0xff]
        %v916 = vld [vmem:[%s4 + $0x578] sm:$0xff]
        %v917 = vld [vmem:[%s4 + $0x580] sm:$0xff]
        %v918 = vld [vmem:[%s4 + $0x588] sm:$0xff]
        %v919 = vld [vmem:[%s4 + $0x590] sm:$0xff]
        %v920 = vld [vmem:[%s4 + $0x598] sm:$0xff]
        %v921 = vld [vmem:[%s4 + $0x5a0] sm:$0xff]
        %v922 = vld [vmem:[%s4 + $0x5a8] sm:$0xff]
        %v923 = vld [vmem:[%s4 + $0x5b0] sm:$0xff]
        %v924 = vld [vmem:[%s4 + $0x5b8] sm:$0xff]
        %v925 = vld [vmem:[%s4 + $0x5c0] sm:$0xff]
        %v926 = vld [vmem:[%s4 + $0x5c8] sm:$0xff]
        %v927 = vld [vmem:[%s4 + $0x5d0] sm:$0xff]
        %v928 = vld [vmem:[%s4 + $0x5d8] sm:$0xff]
        %v929 = vld [vmem:[%s4 + $0x5e0] sm:$0xff]
        %v930 = vld [vmem:[%s4 + $0x5e8] sm:$0xff]
        %v931 = vld [vmem:[%s4 + $0x5f0] sm:$0xff]
        %v932 = vld [vmem:[%s4 + $0x5f8] sm:$0xff]
        %v933 = vld [vmem:[%s4 + $0x600] sm:$0xff]
        %v934 = vld [vmem:[%s4 + $0x608] sm:$0xff]
        %v935 = vld [vmem:[%s4 + $0x610] sm:$0xff]
        %v936 = vld [vmem:[%s4 + $0x618] sm:$0xff]
        %v937 = vld [vmem:[%s4 + $0x620] sm:$0xff]
        %v938 = vld [vmem:[%s4 + $0x628] sm:$0xff]
        %v939 = vld [vmem:[%s4 + $0x630] sm:$0xff]
        %v940 = vld [vmem:[%s4 + $0x638] sm:$0xff]
        %v941 = vld [vmem:[%s4 + $0x640] sm:$0xff]
        %v942 = vld [vmem:[%s4 + $0x648] sm:$0xff]
        %v943 = vld [vmem:[%s4 + $0x650] sm:$0xff]
        %v944 = vld [vmem:[%s4 + $0x658] sm:$0xff]
        %v945 = vld [vmem:[%s4 + $0x660] sm:$0xff]
        %v946 = vld [vmem:[%s4 + $0x668] sm:$0xff]
        %v947 = vld [vmem:[%s4 + $0x670] sm:$0xff]
        %v948 = vld [vmem:[%s4 + $0x678] sm:$0xff]
        %v949 = vld [vmem:[%s4 + $0x680] sm:$0xff]
        %v950 = vld [vmem:[%s4 + $0x688] sm:$0xff]
        %v951 = vld [vmem:[%s4 + $0x690] sm:$0xff]
        %v952 = vld [vmem:[%s4 + $0x698] sm:$0xff]
        %v953 = vld [vmem:[%s4 + $0x6a0] sm:$0xff]
        %v954 = vld [vmem:[%s4 + $0x6a8] sm:$0xff]
        %v955 = vld [vmem:[%s4 + $0x6b0] sm:$0xff]
        %v956 = vld [vmem:[%s4 + $0x6b8] sm:$0xff]
        %v957 = vld [vmem:[%s4 + $0x6c0] sm:$0xff]
        %v958 = vld [vmem:[%s4 + $0x6c8] sm:$0xff]
        %v959 = vld [vmem:[%s4 + $0x6d0] sm:$0xff]
        %v960 = vld [vmem:[%s4 + $0x6d8] sm:$0xff]
        %v961 = vld [vmem:[%s4 + $0x6e0] sm:$0xff]
        %v962 = vld [vmem:[%s4 + $0x6e8] sm:$0xff]
        %v963 = vld [vmem:[%s4 + $0x6f0] sm:$0xff]
        %v964 = vld [vmem:[%s4 + $0x6f8] sm:$0xff]
        %v965 = vld [vmem:[%s4 + $0x700] sm:$0xff]
        %v966 = vld [vmem:[%s4 + $0x708] sm:$0xff]
        %v967 = vld [vmem:[%s4 + $0x710] sm:$0xff]
        %v968 = vld [vmem:[%s4 + $0x718] sm:$0xff]
        %v969 = vld [vmem:[%s4 + $0x720] sm:$0xff]
        %v970 = vld [vmem:[%s4 + $0x728] sm:$0xff]
        %v971 = vld [vmem:[%s4 + $0x730] sm:$0xff]
        %v972 = vld [vmem:[%s4 + $0x738] sm:$0xff]
        %v973 = vld [vmem:[%s4 + $0x740] sm:$0xff]
        %v974 = vld [vmem:[%s4 + $0x748] sm:$0xff]
        %v975 = vld [vmem:[%s4 + $0x750] sm:$0xff]
        %v976 = vld [vmem:[%s4 + $0x758] sm:$0xff]
        %v977 = vld [vmem:[%s4 + $0x760] sm:$0xff]
        %v978 = vld [vmem:[%s4 + $0x768] sm:$0xff]
        %v979 = vld [vmem:[%s4 + $0x770] sm:$0xff]
        %v980 = vld [vmem:[%s4 + $0x778] sm:$0xff]
        %v981 = vld [vmem:[%s4 + $0x780] sm:$0xff]
        %v982 = vld [vmem:[%s4 + $0x788] sm:$0xff]
        %v983 = vld [vmem:[%s4 + $0x790] sm:$0xff]
        %v984 = vld [vmem:[%s4 + $0x798] sm:$0xff]
        %v985 = vld [vmem:[%s4 + $0x7a0] sm:$0xff]
        %v986 = vld [vmem:[%s4 + $0x7a8] sm:$0xff]
        %v987 = vld [vmem:[%s4 + $0x7b0] sm:$0xff]
        %v988 = vld [vmem:[%s4 + $0x7b8] sm:$0xff]
        %v989 = vld [vmem:[%s4 + $0x7c0] sm:$0xff]
        %v990 = vld [vmem:[%s4 + $0x7c8] sm:$0xff]
        %v991 = vld [vmem:[%s4 + $0x7d0] sm:$0xff]
        %v992 = vld [vmem:[%s4 + $0x7d8] sm:$0xff]
        %v993 = vld [vmem:[%s4 + $0x7e0] sm:$0xff]
        %v994 = vld [vmem:[%s4 + $0x7e8] sm:$0xff]
        %v995 = vld [vmem:[%s4 + $0x7f0] sm:$0xff]
        %v996 = vld [vmem:[%s4 + $0x7f8] sm:$0xff]
        %v997 = vld [vmem:[%s5] sm:$0xf]
        %v999 = vlaneseq
        %v1000 = vshrl.u32 %v999, 7
        %v1001 = vsub.s32 0, %v1000
        %v1002 = vrot.slane %v997, %v1001
        %v1003 = vlaneseq
        %v1004 = vshrl.u32 %v1003, 7
        %v1005 = vsub.s32 1, %v1004
        %v1006 = vrot.slane %v997, %v1005
        %v1007 = vlaneseq
        %v1008 = vshrl.u32 %v1007, 7
        %v1009 = vsub.s32 2, %v1008
        %v1010 = vrot.slane %v997, %v1009
        %v1011 = vlaneseq
        %v1012 = vshrl.u32 %v1011, 7
        %v1013 = vsub.s32 3, %v1012
        %v1014 = vrot.slane %v997, %v1013
        %1019 = vmatprep.subr.mxu0 %v742
        %1020 = vmatpush1.msra.mxu0 %v741
        %1021 = vmatprep.subr.mxu0 %v746
        %1022 = vmatpush1.msra.mxu0 %v745
        %1023 = vmatprep.subr.mxu0 %v750
        %1024 = vmatpush1.msra.mxu0 %v749
        %1025 = vmatprep.subr.mxu0 %v754
        %1026 = vmatpush1.msra.mxu0 %v753
        %1027 = vmatprep.subr.mxu0 %v758
        %1028 = vmatpush1.msra.mxu0 %v757
        %1029 = vmatprep.subr.mxu0 %v762
        %1030 = vmatpush1.msra.mxu0 %v761
        %1031 = vmatprep.subr.mxu0 %v766
        %1032 = vmatpush1.msra.mxu0 %v765
        %1033 = vmatprep.subr.mxu0 %v770
        %1034 = vmatpush1.msra.mxu0 %v769
        %1035 = vmatprep.subr.mxu0 %v774
        %1036 = vmatpush1.msra.mxu0 %v773
        %1037 = vmatprep.subr.mxu0 %v778
        %1038 = vmatpush1.msra.mxu0 %v777
        %1039 = vmatprep.subr.mxu0 %v782
        %1040 = vmatpush1.msra.mxu0 %v781
        %1041 = vmatprep.subr.mxu0 %v786
        %1042 = vmatpush1.msra.mxu0 %v785
        %1043 = vmatprep.subr.mxu0 %v790
        %1044 = vmatpush1.msra.mxu0 %v789
        %1045 = vmatprep.subr.mxu0 %v794
        %1046 = vmatpush1.msra.mxu0 %v793
        %1047 = vmatprep.subr.mxu0 %v798
        %1048 = vmatpush1.msra.mxu0 %v797
        %1049 = vmatprep.subr.mxu0 %v802
        %1050 = vmatpush1.msra.mxu0 %v801
        %1051 = vmatprep.subr.mxu0 %v806
        %1052 = vmatpush1.msra.mxu0 %v805
        %1053 = vmatprep.subr.mxu0 %v810
        %1054 = vmatpush1.msra.mxu0 %v809
        %1055 = vmatprep.subr.mxu0 %v814
        %1056 = vmatpush1.msra.mxu0 %v813
        %1057 = vmatprep.subr.mxu0 %v818
        %1058 = vmatpush1.msra.mxu0 %v817
        %1059 = vmatprep.subr.mxu0 %v822
        %1060 = vmatpush1.msra.mxu0 %v821
        %1061 = vmatprep.subr.mxu0 %v826
        %1062 = vmatpush1.msra.mxu0 %v825
        %1063 = vmatprep.subr.mxu0 %v830
        %1064 = vmatpush1.msra.mxu0 %v829
        %1065 = vmatprep.subr.mxu0 %v834
        %1066 = vmatpush1.msra.mxu0 %v833
        %1067 = vmatprep.subr.mxu0 %v838
        %1068 = vmatpush1.msra.mxu0 %v837
        %1069 = vmatprep.subr.mxu0 %v842
        %1070 = vmatpush1.msra.mxu0 %v841
        %1071 = vmatprep.subr.mxu0 %v846
        %1072 = vmatpush1.msra.mxu0 %v845
        %1073 = vmatprep.subr.mxu0 %v850
        %1074 = vmatpush1.msra.mxu0 %v849
        %1075 = vmatprep.subr.mxu0 %v854
        %1076 = vmatpush1.msra.mxu0 %v853
        %1077 = vmatprep.subr.mxu0 %v858
        %1078 = vmatpush1.msra.mxu0 %v857
        %1079 = vmatprep.subr.mxu0 %v862
        %1080 = vmatpush1.msra.mxu0 %v861
        %1081 = vmatprep.subr.mxu0 %v866
        %1082 = vmatpush1.msra.mxu0 %v865
        %1083 = vmatprep.mubr.f32.mxu0 %v726
        %1084 = vmatmul.mubr.f32.gmra.mrb[0].mxu0 %v725
        %v1085 = vpop.f32.mrb[0].mxu0
        %v1086 = vadd.f32 %v1002, %v1085
        %v1087 = vpop.f32.mrb[0].mxu0
        %v1088 = vadd.f32 %v1006, %v1087
        %1089 = vmatprep.mubr.f32.mxu0 %v730
        %1090 = vmatmul.mubr.f32.gmra.mrb[0].mxu0 %v729
        %v1091 = vpop.f32.mrb[0].mxu0
        %v1092 = vadd.f32 %v1002, %v1091
        %v1093 = vpop.f32.mrb[0].mxu0
        %v1094 = vadd.f32 %v1006, %v1093
        %1095 = vmatprep.mubr.f32.mxu0 %v734
        %1096 = vmatmul.mubr.f32.gmra.mrb[0].mxu0 %v733
        %v1097 = vpop.f32.mrb[0].mxu0
        %v1098 = vadd.f32 %v1002, %v1097
        %v1099 = vpop.f32.mrb[0].mxu0
        %v1100 = vadd.f32 %v1006, %v1099
        %1101 = vmatprep.mubr.f32.mxu0 %v738
        %1102 = vmatmul.mubr.f32.gmra.mrb[0].mxu0 %v737
        %v1103 = vpop.f32.mrb[0].mxu0
        %v1104 = vadd.f32 %v1002, %v1103
        %v1105 = vpop.f32.mrb[0].mxu0
        %v1106 = vadd.f32 %v1006, %v1105
        %1107 = vdwg.mxu0
        %1108 = vmatprep.subr.mxu0 %v870
        %1109 = vmatpush1.msra.mxu0 %v869
        %1110 = vmatprep.subr.mxu0 %v874
        %1111 = vmatpush1.msra.mxu0 %v873
        %1112 = vmatprep.subr.mxu0 %v878
        %1113 = vmatpush1.msra.mxu0 %v877
        %1114 = vmatprep.subr.mxu0 %v882
        %1115 = vmatpush1.msra.mxu0 %v881
        %1116 = vmatprep.subr.mxu0 %v886
        %1117 = vmatpush1.msra.mxu0 %v885
        %1118 = vmatprep.subr.mxu0 %v890
        %1119 = vmatpush1.msra.mxu0 %v889
        %1120 = vmatprep.subr.mxu0 %v894
        %1121 = vmatpush1.msra.mxu0 %v893
        %1122 = vmatprep.subr.mxu0 %v898
        %1123 = vmatpush1.msra.mxu0 %v897
        %1124 = vmatprep.subr.mxu0 %v902
        %1125 = vmatpush1.msra.mxu0 %v901
        %1126 = vmatprep.subr.mxu0 %v906
        %1127 = vmatpush1.msra.mxu0 %v905
        %1128 = vmatprep.subr.mxu0 %v910
        %1129 = vmatpush1.msra.mxu0 %v909
        %1130 = vmatprep.subr.mxu0 %v914
        %1131 = vmatpush1.msra.mxu0 %v913
        %1132 = vmatprep.subr.mxu0 %v918
        %1133 = vmatpush1.msra.mxu0 %v917
        %1134 = vmatprep.subr.mxu0 %v922
        %1135 = vmatpush1.msra.mxu0 %v921
        %1136 = vmatprep.subr.mxu0 %v926
        %1137 = vmatpush1.msra.mxu0 %v925
        %1138 = vmatprep.subr.mxu0 %v930
        %1139 = vmatpush1.msra.mxu0 %v929
        %1140 = vmatprep.subr.mxu0 %v934
        %1141 = vmatpush1.msra.mxu0 %v933
        %1142 = vmatprep.subr.mxu0 %v938
        %1143 = vmatpush1.msra.mxu0 %v937
        %1144 = vmatprep.subr.mxu0 %v942
        %1145 = vmatpush1.msra.mxu0 %v941
        %1146 = vmatprep.subr.mxu0 %v946
        %1147 = vmatpush1.msra.mxu0 %v945
        %1148 = vmatprep.subr.mxu0 %v950
        %1149 = vmatpush1.msra.mxu0 %v949
        %1150 = vmatprep.subr.mxu0 %v954
        %1151 = vmatpush1.msra.mxu0 %v953
        %1152 = vmatprep.subr.mxu0 %v958
        %1153 = vmatpush1.msra.mxu0 %v957
        %1154 = vmatprep.subr.mxu0 %v962
        %1155 = vmatpush1.msra.mxu0 %v961
        %1156 = vmatprep.subr.mxu0 %v966
        %1157 = vmatpush1.msra.mxu0 %v965
        %1158 = vmatprep.subr.mxu0 %v970
        %1159 = vmatpush1.msra.mxu0 %v969
        %1160 = vmatprep.subr.mxu0 %v974
        %1161 = vmatpush1.msra.mxu0 %v973
        %1162 = vmatprep.subr.mxu0 %v978
        %1163 = vmatpush1.msra.mxu0 %v977
        %1164 = vmatprep.subr.mxu0 %v982
        %1165 = vmatpush1.msra.mxu0 %v981
        %1166 = vmatprep.subr.mxu0 %v986
        %1167 = vmatpush1.msra.mxu0 %v985
        %1168 = vmatprep.subr.mxu0 %v990
        %1169 = vmatpush1.msra.mxu0 %v989
        %1170 = vmatprep.subr.mxu0 %v994
        %1171 = vmatpush1.msra.mxu0 %v993
        %1172 = vmatprep.mubr.f32.mxu0 %v728
        %1173 = vmatmul.mubr.f32.gmra.mrb[0].mxu0 %v727
        %v1174 = vpop.f32.mrb[0].mxu0
        %v1175 = vadd.f32 %v1086, %v1174
        %v1176 = vpop.f32.mrb[0].mxu0
        %v1177 = vadd.f32 %v1088, %v1176
        %1178 = vmatprep.mubr.f32.mxu0 %v732
        %1179 = vmatmul.mubr.f32.gmra.mrb[0].mxu0 %v731
        %v1180 = vpop.f32.mrb[0].mxu0
        %v1181 = vadd.f32 %v1092, %v1180
        %v1182 = vpop.f32.mrb[0].mxu0
        %v1183 = vadd.f32 %v1094, %v1182
        %1184 = vmatprep.mubr.f32.mxu0 %v736
        %1185 = vmatmul.mubr.f32.gmra.mrb[0].mxu0 %v735
        %v1186 = vpop.f32.mrb[0].mxu0
        %v1187 = vadd.f32 %v1098, %v1186
        %v1188 = vpop.f32.mrb[0].mxu0
        %v1189 = vadd.f32 %v1100, %v1188
        %1190 = vmatprep.mubr.f32.mxu0 %v740
        %1191 = vmatmul.mubr.f32.gmra.mrb[0].mxu0 %v739
        %v1192 = vpop.f32.mrb[0].mxu0
        %v1193 = vadd.f32 %v1104, %v1192
        %v1194 = vpop.f32.mrb[0].mxu0
        %v1195 = vadd.f32 %v1106, %v1194
        %1196 = vdwg.mxu0
        %1197 = vmatprep.subr.mxu0 %v744
        %1198 = vmatpush1.msra.mxu0 %v743
        %1199 = vmatprep.subr.mxu0 %v748
        %1200 = vmatpush1.msra.mxu0 %v747
        %1201 = vmatprep.subr.mxu0 %v752
        %1202 = vmatpush1.msra.mxu0 %v751
        %1203 = vmatprep.subr.mxu0 %v756
        %1204 = vmatpush1.msra.mxu0 %v755
        %1205 = vmatprep.subr.mxu0 %v760
        %1206 = vmatpush1.msra.mxu0 %v759
        %1207 = vmatprep.subr.mxu0 %v764
        %1208 = vmatpush1.msra.mxu0 %v763
        %1209 = vmatprep.subr.mxu0 %v768
        %1210 = vmatpush1.msra.mxu0 %v767
        %1211 = vmatprep.subr.mxu0 %v772
        %1212 = vmatpush1.msra.mxu0 %v771
        %1213 = vmatprep.subr.mxu0 %v776
        %1214 = vmatpush1.msra.mxu0 %v775
        %1215 = vmatprep.subr.mxu0 %v780
        %1216 = vmatpush1.msra.mxu0 %v779
        %1217 = vmatprep.subr.mxu0 %v784
        %1218 = vmatpush1.msra.mxu0 %v783
        %1219 = vmatprep.subr.mxu0 %v788
        %1220 = vmatpush1.msra.mxu0 %v787
        %1221 = vmatprep.subr.mxu0 %v792
        %1222 = vmatpush1.msra.mxu0 %v791
        %1223 = vmatprep.subr.mxu0 %v796
        %1224 = vmatpush1.msra.mxu0 %v795
        %1225 = vmatprep.subr.mxu0 %v800
        %1226 = vmatpush1.msra.mxu0 %v799
        %1227 = vmatprep.subr.mxu0 %v804
        %1228 = vmatpush1.msra.mxu0 %v803
        %1229 = vmatprep.subr.mxu0 %v808
        %1230 = vmatpush1.msra.mxu0 %v807
        %1231 = vmatprep.subr.mxu0 %v812
        %1232 = vmatpush1.msra.mxu0 %v811
        %1233 = vmatprep.subr.mxu0 %v816
        %1234 = vmatpush1.msra.mxu0 %v815
        %1235 = vmatprep.subr.mxu0 %v820
        %1236 = vmatpush1.msra.mxu0 %v819
        %1237 = vmatprep.subr.mxu0 %v824
        %1238 = vmatpush1.msra.mxu0 %v823
        %1239 = vmatprep.subr.mxu0 %v828
        %1240 = vmatpush1.msra.mxu0 %v827
        %1241 = vmatprep.subr.mxu0 %v832
        %1242 = vmatpush1.msra.mxu0 %v831
        %1243 = vmatprep.subr.mxu0 %v836
        %1244 = vmatpush1.msra.mxu0 %v835
        %1245 = vmatprep.subr.mxu0 %v840
        %1246 = vmatpush1.msra.mxu0 %v839
        %1247 = vmatprep.subr.mxu0 %v844
        %1248 = vmatpush1.msra.mxu0 %v843
        %1249 = vmatprep.subr.mxu0 %v848
        %1250 = vmatpush1.msra.mxu0 %v847
        %1251 = vmatprep.subr.mxu0 %v852
        %1252 = vmatpush1.msra.mxu0 %v851
        %1253 = vmatprep.subr.mxu0 %v856
        %1254 = vmatpush1.msra.mxu0 %v855
        %1255 = vmatprep.subr.mxu0 %v860
        %1256 = vmatpush1.msra.mxu0 %v859
        %1257 = vmatprep.subr.mxu0 %v864
        %1258 = vmatpush1.msra.mxu0 %v863
        %1259 = vmatprep.subr.mxu0 %v868
        %1260 = vmatpush1.msra.mxu0 %v867
        %1261 = vmatprep.mubr.f32.mxu0 %v726
        %1262 = vmatmul.mubr.f32.gmra.mrb[0].mxu0 %v725
        %v1263 = vpop.f32.mrb[0].mxu0
        %v1264 = vadd.f32 %v1010, %v1263
        %v1265 = vpop.f32.mrb[0].mxu0
        %v1266 = vadd.f32 %v1014, %v1265
        %1267 = vmatprep.mubr.f32.mxu0 %v730
        %1268 = vmatmul.mubr.f32.gmra.mrb[0].mxu0 %v729
        %v1269 = vpop.f32.mrb[0].mxu0
        %v1270 = vadd.f32 %v1010, %v1269
        %v1271 = vpop.f32.mrb[0].mxu0
        %v1272 = vadd.f32 %v1014, %v1271
        %1273 = vmatprep.mubr.f32.mxu0 %v734
        %1274 = vmatmul.mubr.f32.gmra.mrb[0].mxu0 %v733
        %v1275 = vpop.f32.mrb[0].mxu0
        %v1276 = vadd.f32 %v1010, %v1275
        %v1277 = vpop.f32.mrb[0].mxu0
        %v1278 = vadd.f32 %v1014, %v1277
        %1279 = vmatprep.mubr.f32.mxu0 %v738
        %1280 = vmatmul.mubr.f32.gmra.mrb[0].mxu0 %v737
        %v1281 = vpop.f32.mrb[0].mxu0
        %v1282 = vadd.f32 %v1010, %v1281
        %v1283 = vpop.f32.mrb[0].mxu0
        %v1284 = vadd.f32 %v1014, %v1283
        %1285 = vdwg.mxu0
        %1286 = vmatprep.subr.mxu0 %v872
        %1287 = vmatpush1.msra.mxu0 %v871
        %1288 = vmatprep.subr.mxu0 %v876
        %1289 = vmatpush1.msra.mxu0 %v875
        %1290 = vmatprep.subr.mxu0 %v880
        %1291 = vmatpush1.msra.mxu0 %v879
        %1292 = vmatprep.subr.mxu0 %v884
        %1293 = vmatpush1.msra.mxu0 %v883
        %1294 = vmatprep.subr.mxu0 %v888
        %1295 = vmatpush1.msra.mxu0 %v887
        %1296 = vmatprep.subr.mxu0 %v892
        %1297 = vmatpush1.msra.mxu0 %v891
        %1298 = vmatprep.subr.mxu0 %v896
        %1299 = vmatpush1.msra.mxu0 %v895
        %1300 = vmatprep.subr.mxu0 %v900
        %1301 = vmatpush1.msra.mxu0 %v899
        %1302 = vmatprep.subr.mxu0 %v904
        %1303 = vmatpush1.msra.mxu0 %v903
        %1304 = vmatprep.subr.mxu0 %v908
        %1305 = vmatpush1.msra.mxu0 %v907
        %1306 = vmatprep.subr.mxu0 %v912
        %1307 = vmatpush1.msra.mxu0 %v911
        %1308 = vmatprep.subr.mxu0 %v916
        %1309 = vmatpush1.msra.mxu0 %v915
        %1310 = vmatprep.subr.mxu0 %v920
        %1311 = vmatpush1.msra.mxu0 %v919
        %1312 = vmatprep.subr.mxu0 %v924
        %1313 = vmatpush1.msra.mxu0 %v923
        %1314 = vmatprep.subr.mxu0 %v928
        %1315 = vmatpush1.msra.mxu0 %v927
        %1316 = vmatprep.subr.mxu0 %v932
        %1317 = vmatpush1.msra.mxu0 %v931
        %1318 = vmatprep.subr.mxu0 %v936
        %1319 = vmatpush1.msra.mxu0 %v935
        %1320 = vmatprep.subr.mxu0 %v940
        %1321 = vmatpush1.msra.mxu0 %v939
        %1322 = vmatprep.subr.mxu0 %v944
        %1323 = vmatpush1.msra.mxu0 %v943
        %1324 = vmatprep.subr.mxu0 %v948
        %1325 = vmatpush1.msra.mxu0 %v947
        %1326 = vmatprep.subr.mxu0 %v952
        %1327 = vmatpush1.msra.mxu0 %v951
        %1328 = vmatprep.subr.mxu0 %v956
        %1329 = vmatpush1.msra.mxu0 %v955
        %1330 = vmatprep.subr.mxu0 %v960
        %1331 = vmatpush1.msra.mxu0 %v959
        %1332 = vmatprep.subr.mxu0 %v964
        %1333 = vmatpush1.msra.mxu0 %v963
        %1334 = vmatprep.subr.mxu0 %v968
        %1335 = vmatpush1.msra.mxu0 %v967
        %1336 = vmatprep.subr.mxu0 %v972
        %1337 = vmatpush1.msra.mxu0 %v971
        %1338 = vmatprep.subr.mxu0 %v976
        %1339 = vmatpush1.msra.mxu0 %v975
        %1340 = vmatprep.subr.mxu0 %v980
        %1341 = vmatpush1.msra.mxu0 %v979
        %1342 = vmatprep.subr.mxu0 %v984
        %1343 = vmatpush1.msra.mxu0 %v983
        %1344 = vmatprep.subr.mxu0 %v988
        %1345 = vmatpush1.msra.mxu0 %v987
        %1346 = vmatprep.subr.mxu0 %v992
        %1347 = vmatpush1.msra.mxu0 %v991
        %1348 = vmatprep.subr.mxu0 %v996
        %1349 = vmatpush1.msra.mxu0 %v995
        %1350 = vmatprep.mubr.f32.mxu0 %v728
        %1351 = vmatmul.mubr.f32.gmra.mrb[0].mxu0 %v727
        %v1352 = vpop.f32.mrb[0].mxu0
        %v1353 = vadd.f32 %v1264, %v1352
        %v1354 = vpop.f32.mrb[0].mxu0
        %v1355 = vadd.f32 %v1266, %v1354
        %1356 = vmatprep.mubr.f32.mxu0 %v732
        %1357 = vmatmul.mubr.f32.gmra.mrb[0].mxu0 %v731
        %v1358 = vpop.f32.mrb[0].mxu0
        %v1359 = vadd.f32 %v1270, %v1358
        %v1360 = vpop.f32.mrb[0].mxu0
        %v1361 = vadd.f32 %v1272, %v1360
        %1362 = vmatprep.mubr.f32.mxu0 %v736
        %1363 = vmatmul.mubr.f32.gmra.mrb[0].mxu0 %v735
        %v1364 = vpop.f32.mrb[0].mxu0
        %v1365 = vadd.f32 %v1276, %v1364
        %v1366 = vpop.f32.mrb[0].mxu0
        %v1367 = vadd.f32 %v1278, %v1366
        %1368 = vmatprep.mubr.f32.mxu0 %v740
        %1369 = vmatmul.mubr.f32.gmra.mrb[0].mxu0 %v739
        %v1370 = vpop.f32.mrb[0].mxu0
        %v1371 = vadd.f32 %v1282, %v1370
        %v1372 = vpop.f32.mrb[0].mxu0
        %v1373 = vadd.f32 %v1284, %v1372
        %1374 = vdwg.mxu0
        %v1375 = vmul.f32 %v1175, %v1175
        %v1376 = vmul.f32 %v1177, %v1177
        %v1377 = vmul.f32 %v1353, %v1353
        %v1378 = vmul.f32 %v1355, %v1355
        %v1379 = vmul.f32 %v1181, %v1181
        %v1380 = vmul.f32 %v1183, %v1183
        %v1381 = vmul.f32 %v1359, %v1359
        %v1382 = vmul.f32 %v1361, %v1361
        %v1383 = vmul.f32 %v1187, %v1187
        %v1384 = vmul.f32 %v1189, %v1189
        %v1385 = vmul.f32 %v1365, %v1365
        %v1386 = vmul.f32 %v1367, %v1367
        %v1387 = vmul.f32 %v1193, %v1193
        %v1388 = vmul.f32 %v1195, %v1195
        %v1389 = vmul.f32 %v1371, %v1371
        %v1390 = vmul.f32 %v1373, %v1373
        %v1391 = vmul.f32 %v1175, %v1375
        %v1392 = vmul.f32 %v1177, %v1376
        %v1393 = vmul.f32 %v1353, %v1377
        %v1394 = vmul.f32 %v1355, %v1378
        %v1395 = vmul.f32 %v1181, %v1379
        %v1396 = vmul.f32 %v1183, %v1380
        %v1397 = vmul.f32 %v1359, %v1381
        %v1398 = vmul.f32 %v1361, %v1382
        %v1399 = vmul.f32 %v1187, %v1383
        %v1400 = vmul.f32 %v1189, %v1384
        %v1401 = vmul.f32 %v1365, %v1385
        %v1402 = vmul.f32 %v1367, %v1386
        %v1403 = vmul.f32 %v1193, %v1387
        %v1404 = vmul.f32 %v1195, %v1388
        %v1405 = vmul.f32 %v1371, %v1389
        %v1406 = vmul.f32 %v1373, %v1390
        %v1407 = vmul.f32 %v1391, 0.044715
        %v1408 = vmul.f32 %v1392, 0.044715
        %v1409 = vmul.f32 %v1393, 0.044715
        %v1410 = vmul.f32 %v1394, 0.044715
        %v1411 = vmul.f32 %v1395, 0.044715
        %v1412 = vmul.f32 %v1396, 0.044715
        %v1413 = vmul.f32 %v1397, 0.044715
        %v1414 = vmul.f32 %v1398, 0.044715
        %v1415 = vmul.f32 %v1399, 0.044715
        %v1416 = vmul.f32 %v1400, 0.044715
        %v1417 = vmul.f32 %v1401, 0.044715
        %v1418 = vmul.f32 %v1402, 0.044715
        %v1419 = vmul.f32 %v1403, 0.044715
        %v1420 = vmul.f32 %v1404, 0.044715
        %v1421 = vmul.f32 %v1405, 0.044715
        %v1422 = vmul.f32 %v1406, 0.044715
        %v1423 = vadd.f32 %v1175, %v1407
        %v1424 = vadd.f32 %v1177, %v1408
        %v1425 = vadd.f32 %v1353, %v1409
        %v1426 = vadd.f32 %v1355, %v1410
        %v1427 = vadd.f32 %v1181, %v1411
        %v1428 = vadd.f32 %v1183, %v1412
        %v1429 = vadd.f32 %v1359, %v1413
        %v1430 = vadd.f32 %v1361, %v1414
        %v1431 = vadd.f32 %v1187, %v1415
        %v1432 = vadd.f32 %v1189, %v1416
        %v1433 = vadd.f32 %v1365, %v1417
        %v1434 = vadd.f32 %v1367, %v1418
        %v1435 = vadd.f32 %v1193, %v1419
        %v1436 = vadd.f32 %v1195, %v1420
        %v1437 = vadd.f32 %v1371, %v1421
        %v1438 = vadd.f32 %v1373, %v1422
        %v1439 = vmul.f32 %v1423, 0.7978846
        %v1440 = vmul.f32 %v1424, 0.7978846
        %v1441 = vmul.f32 %v1425, 0.7978846
        %v1442 = vmul.f32 %v1426, 0.7978846
        %v1443 = vmul.f32 %v1427, 0.7978846
        %v1444 = vmul.f32 %v1428, 0.7978846
        %v1445 = vmul.f32 %v1429, 0.7978846
        %v1446 = vmul.f32 %v1430, 0.7978846
        %v1447 = vmul.f32 %v1431, 0.7978846
        %v1448 = vmul.f32 %v1432, 0.7978846
        %v1449 = vmul.f32 %v1433, 0.7978846
        %v1450 = vmul.f32 %v1434, 0.7978846
        %v1451 = vmul.f32 %v1435, 0.7978846
        %v1452 = vmul.f32 %v1436, 0.7978846
        %v1453 = vmul.f32 %v1437, 0.7978846
        %v1454 = vmul.f32 %v1438, 0.7978846
        %v1455 = vtanh.pop %v1439
        %v1456 = vtanh.pop %v1440
        %v1457 = vtanh.pop %v1441
        %v1458 = vtanh.pop %v1442
        %v1459 = vtanh.pop %v1443
        %v1460 = vtanh.pop %v1444
        %v1461 = vtanh.pop %v1445
        %v1462 = vtanh.pop %v1446
        %v1463 = vtanh.pop %v1447
        %v1464 = vtanh.pop %v1448
        %v1465 = vtanh.pop %v1449
        %v1466 = vtanh.pop %v1450
        %v1467 = vtanh.pop %v1451
        %v1468 = vtanh.pop %v1452
        %v1469 = vtanh.pop %v1453
        %v1470 = vtanh.pop %v1454
        %v1471 = vadd.f32 %v1455, 1.0
        %v1472 = vadd.f32 %v1456, 1.0
        %v1473 = vadd.f32 %v1457, 1.0
        %v1474 = vadd.f32 %v1458, 1.0
        %v1475 = vadd.f32 %v1459, 1.0
        %v1476 = vadd.f32 %v1460, 1.0
        %v1477 = vadd.f32 %v1461, 1.0
        %v1478 = vadd.f32 %v1462, 1.0
        %v1479 = vadd.f32 %v1463, 1.0
        %v1480 = vadd.f32 %v1464, 1.0
        %v1481 = vadd.f32 %v1465, 1.0
        %v1482 = vadd.f32 %v1466, 1.0
        %v1483 = vadd.f32 %v1467, 1.0
        %v1484 = vadd.f32 %v1468, 1.0
        %v1485 = vadd.f32 %v1469, 1.0
        %v1486 = vadd.f32 %v1470, 1.0
        %v1487 = vmul.f32 %v1471, 0.5
        %v1488 = vmul.f32 %v1472, 0.5
        %v1489 = vmul.f32 %v1473, 0.5
        %v1490 = vmul.f32 %v1474, 0.5
        %v1491 = vmul.f32 %v1475, 0.5
        %v1492 = vmul.f32 %v1476, 0.5
        %v1493 = vmul.f32 %v1477, 0.5
        %v1494 = vmul.f32 %v1478, 0.5
        %v1495 = vmul.f32 %v1479, 0.5
        %v1496 = vmul.f32 %v1480, 0.5
        %v1497 = vmul.f32 %v1481, 0.5
        %v1498 = vmul.f32 %v1482, 0.5
        %v1499 = vmul.f32 %v1483, 0.5
        %v1500 = vmul.f32 %v1484, 0.5
        %v1501 = vmul.f32 %v1485, 0.5
        %v1502 = vmul.f32 %v1486, 0.5
        %v1503 = vmul.f32 %v1175, %v1487
        %v1504 = vmul.f32 %v1177, %v1488
        %v1505 = vmul.f32 %v1353, %v1489
        %v1506 = vmul.f32 %v1355, %v1490
        %v1507 = vmul.f32 %v1181, %v1491
        %v1508 = vmul.f32 %v1183, %v1492
        %v1509 = vmul.f32 %v1359, %v1493
        %v1510 = vmul.f32 %v1361, %v1494
        %v1511 = vmul.f32 %v1187, %v1495
        %v1512 = vmul.f32 %v1189, %v1496
        %v1513 = vmul.f32 %v1365, %v1497
        %v1514 = vmul.f32 %v1367, %v1498
        %v1515 = vmul.f32 %v1193, %v1499
        %v1516 = vmul.f32 %v1195, %v1500
        %v1517 = vmul.f32 %v1371, %v1501
        %v1518 = vmul.f32 %v1373, %v1502
        %v1519 = vld [vmem:[%s326] sm:$0xff]
        %v1520 = vld [vmem:[%s326 + $0x8] sm:$0xff]
        %v1521 = vld [vmem:[%s326 + $0x10] sm:$0xff]
        %v1522 = vld [vmem:[%s326 + $0x18] sm:$0xff]
        %v1523 = vld [vmem:[%s7] sm:$0xff]
        %v1524 = vld [vmem:[%s7 + $0x8] sm:$0xff]
        %v1525 = vld [vmem:[%s7 + $0x10] sm:$0xff]
        %v1526 = vld [vmem:[%s7 + $0x18] sm:$0xff]
        %v1527 = vld [vmem:[%s7 + $0x20] sm:$0xff]
        %vm1528 = vcmask 64512
        %v1530 = vsel %vm1528, %v1519, 0
        %v1533 = vsel %vm1528, %v1520, 0
        %v1536 = vsel %vm1528, %v1521, 0
        %v1539 = vsel %vm1528, %v1522, 0
        %1541 = vmatprep.subr.mxu0 %v1524
        %1542 = vmatpush1.msra.mxu0 %v1523
        %1543 = vmatprep.subr.mxu0 0.0
        %1544 = vmatpush1.msra.mxu0 0.0
        %1545 = vmatprep.subr.mxu0 0.0
        %1546 = vmatpush1.msra.mxu0 0.0
        %1547 = vmatprep.subr.mxu0 0.0
        %1548 = vmatpush1.msra.mxu0 0.0
        %1549 = vmatprep.subr.mxu0 0.0
        %1550 = vmatpush1.msra.mxu0 0.0
        %1551 = vmatprep.subr.mxu0 0.0
        %1552 = vmatpush1.msra.mxu0 0.0
        %1553 = vmatprep.subr.mxu0 0.0
        %1554 = vmatpush1.msra.mxu0 0.0
        %1555 = vmatprep.subr.mxu0 0.0
        %1556 = vmatpush1.msra.mxu0 0.0
        %1557 = vmatprep.subr.mxu0 0.0
        %1558 = vmatpush1.msra.mxu0 0.0
        %1559 = vmatprep.subr.mxu0 0.0
        %1560 = vmatpush1.msra.mxu0 0.0
        %1561 = vmatprep.subr.mxu0 0.0
        %1562 = vmatpush1.msra.mxu0 0.0
        %1563 = vmatprep.subr.mxu0 0.0
        %1564 = vmatpush1.msra.mxu0 0.0
        %1565 = vmatprep.subr.mxu0 0.0
        %1566 = vmatpush1.msra.mxu0 0.0
        %1567 = vmatprep.subr.mxu0 0.0
        %1568 = vmatpush1.msra.mxu0 0.0
        %1569 = vmatprep.subr.mxu0 0.0
        %1570 = vmatpush1.msra.mxu0 0.0
        %1571 = vmatprep.subr.mxu0 0.0
        %1572 = vmatpush1.msra.mxu0 0.0
        %1573 = vmatprep.subr.mxu0 0.0
        %1574 = vmatpush1.msra.mxu0 0.0
        %1575 = vmatprep.subr.mxu0 0.0
        %1576 = vmatpush1.msra.mxu0 0.0
        %1577 = vmatprep.subr.mxu0 0.0
        %1578 = vmatpush1.msra.mxu0 0.0
        %1579 = vmatprep.subr.mxu0 0.0
        %1580 = vmatpush1.msra.mxu0 0.0
        %1581 = vmatprep.subr.mxu0 0.0
        %1582 = vmatpush1.msra.mxu0 0.0
        %1583 = vmatprep.subr.mxu0 0.0
        %1584 = vmatpush1.msra.mxu0 0.0
        %1585 = vmatprep.subr.mxu0 0.0
        %1586 = vmatpush1.msra.mxu0 0.0
        %1587 = vmatprep.subr.mxu0 0.0
        %1588 = vmatpush1.msra.mxu0 0.0
        %1589 = vmatprep.subr.mxu0 0.0
        %1590 = vmatpush1.msra.mxu0 0.0
        %1591 = vmatprep.subr.mxu0 0.0
        %1592 = vmatpush1.msra.mxu0 0.0
        %1593 = vmatprep.subr.mxu0 0.0
        %1594 = vmatpush1.msra.mxu0 0.0
        %1595 = vmatprep.subr.mxu0 0.0
        %1596 = vmatpush1.msra.mxu0 0.0
        %1597 = vmatprep.subr.mxu0 0.0
        %1598 = vmatpush1.msra.mxu0 0.0
        %1599 = vmatprep.subr.mxu0 0.0
        %1600 = vmatpush1.msra.mxu0 0.0
        %1601 = vmatprep.subr.mxu0 0.0
        %1602 = vmatpush1.msra.mxu0 0.0
        %1603 = vmatprep.subr.mxu0 0.0
        %1604 = vmatpush1.msra.mxu0 0.0
        %1605 = vmatprep.mubr.f32.mxu0 0.0
        %1606 = vmatmul.mubr.f32.gmra.mrb[0].mxu0 %v1530
        %v1607 = vpop.f32.mrb[0].mxu0
        %v1608 = vadd.f32 0.0, %v1607
        %v1609 = vpop.f32.mrb[0].mxu0
        %v1610 = vadd.f32 0.0, %v1609
        %1611 = vmatprep.mubr.f32.mxu0 0.0
        %1612 = vmatmul.mubr.f32.gmra.mrb[0].mxu0 %v1533
        %v1613 = vpop.f32.mrb[0].mxu0
        %v1614 = vadd.f32 0.0, %v1613
        %v1615 = vpop.f32.mrb[0].mxu0
        %v1616 = vadd.f32 0.0, %v1615
        %1617 = vmatprep.mubr.f32.mxu0 0.0
        %1618 = vmatmul.mubr.f32.gmra.mrb[0].mxu0 %v1536
        %v1619 = vpop.f32.mrb[0].mxu0
        %v1620 = vadd.f32 0.0, %v1619
        %v1621 = vpop.f32.mrb[0].mxu0
        %v1622 = vadd.f32 0.0, %v1621
        %1623 = vmatprep.mubr.f32.mxu0 0.0
        %1624 = vmatmul.mubr.f32.gmra.mrb[0].mxu0 %v1539
        %v1625 = vpop.f32.mrb[0].mxu0
        %v1626 = vadd.f32 0.0, %v1625
        %v1627 = vpop.f32.mrb[0].mxu0
        %v1628 = vadd.f32 0.0, %v1627
        %1629 = vdwg.mxu0
        %1630 = vmatprep.subr.mxu0 %v1526
        %1631 = vmatpush1.msra.mxu0 %v1525
        %1632 = vmatprep.subr.mxu0 0.0
        %1633 = vmatpush1.msra.mxu0 0.0
        %1634 = vmatprep.subr.mxu0 0.0
        %1635 = vmatpush1.msra.mxu0 0.0
        %1636 = vmatprep.subr.mxu0 0.0
        %1637 = vmatpush1.msra.mxu0 0.0
        %1638 = vmatprep.subr.mxu0 0.0
        %1639 = vmatpush1.msra.mxu0 0.0
        %1640 = vmatprep.subr.mxu0 0.0
        %1641 = vmatpush1.msra.mxu0 0.0
        %1642 = vmatprep.subr.mxu0 0.0
        %1643 = vmatpush1.msra.mxu0 0.0
        %1644 = vmatprep.subr.mxu0 0.0
        %1645 = vmatpush1.msra.mxu0 0.0
        %1646 = vmatprep.subr.mxu0 0.0
        %1647 = vmatpush1.msra.mxu0 0.0
        %1648 = vmatprep.subr.mxu0 0.0
        %1649 = vmatpush1.msra.mxu0 0.0
        %1650 = vmatprep.subr.mxu0 0.0
        %1651 = vmatpush1.msra.mxu0 0.0
        %1652 = vmatprep.subr.mxu0 0.0
        %1653 = vmatpush1.msra.mxu0 0.0
        %1654 = vmatprep.subr.mxu0 0.0
        %1655 = vmatpush1.msra.mxu0 0.0
        %1656 = vmatprep.subr.mxu0 0.0
        %1657 = vmatpush1.msra.mxu0 0.0
        %1658 = vmatprep.subr.mxu0 0.0
        %1659 = vmatpush1.msra.mxu0 0.0
        %1660 = vmatprep.subr.mxu0 0.0
        %1661 = vmatpush1.msra.mxu0 0.0
        %1662 = vmatprep.subr.mxu0 0.0
        %1663 = vmatpush1.msra.mxu0 0.0
        %1664 = vmatprep.subr.mxu0 0.0
        %1665 = vmatpush1.msra.mxu0 0.0
        %1666 = vmatprep.subr.mxu0 0.0
        %1667 = vmatpush1.msra.mxu0 0.0
        %1668 = vmatprep.subr.mxu0 0.0
        %1669 = vmatpush1.msra.mxu0 0.0
        %1670 = vmatprep.subr.mxu0 0.0
        %1671 = vmatpush1.msra.mxu0 0.0
        %1672 = vmatprep.subr.mxu0 0.0
        %1673 = vmatpush1.msra.mxu0 0.0
        %1674 = vmatprep.subr.mxu0 0.0
        %1675 = vmatpush1.msra.mxu0 0.0
        %1676 = vmatprep.subr.mxu0 0.0
        %1677 = vmatpush1.msra.mxu0 0.0
        %1678 = vmatprep.subr.mxu0 0.0
        %1679 = vmatpush1.msra.mxu0 0.0
        %1680 = vmatprep.subr.mxu0 0.0
        %1681 = vmatpush1.msra.mxu0 0.0
        %1682 = vmatprep.subr.mxu0 0.0
        %1683 = vmatpush1.msra.mxu0 0.0
        %1684 = vmatprep.subr.mxu0 0.0
        %1685 = vmatpush1.msra.mxu0 0.0
        %1686 = vmatprep.subr.mxu0 0.0
        %1687 = vmatpush1.msra.mxu0 0.0
        %1688 = vmatprep.subr.mxu0 0.0
        %1689 = vmatpush1.msra.mxu0 0.0
        %1690 = vmatprep.subr.mxu0 0.0
        %1691 = vmatpush1.msra.mxu0 0.0
        %1692 = vmatprep.subr.mxu0 0.0
        %1693 = vmatpush1.msra.mxu0 0.0
        %1694 = vmatprep.mubr.f32.mxu0 0.0
        %1695 = vmatmul.mubr.f32.gmra.mrb[0].mxu0 %v1530
        %v1696 = vpop.f32.mrb[0].mxu0
        %v1697 = vadd.f32 0.0, %v1696
        %v1698 = vpop.f32.mrb[0].mxu0
        %v1699 = vadd.f32 0.0, %v1698
        %1700 = vmatprep.mubr.f32.mxu0 0.0
        %1701 = vmatmul.mubr.f32.gmra.mrb[0].mxu0 %v1533
        %v1702 = vpop.f32.mrb[0].mxu0
        %v1703 = vadd.f32 0.0, %v1702
        %v1704 = vpop.f32.mrb[0].mxu0
        %v1705 = vadd.f32 0.0, %v1704
        %1706 = vmatprep.mubr.f32.mxu0 0.0
        %1707 = vmatmul.mubr.f32.gmra.mrb[0].mxu0 %v1536
        %v1708 = vpop.f32.mrb[0].mxu0
        %v1709 = vadd.f32 0.0, %v1708
        %v1710 = vpop.f32.mrb[0].mxu0
        %v1711 = vadd.f32 0.0, %v1710
        %1712 = vmatprep.mubr.f32.mxu0 0.0
        %1713 = vmatmul.mubr.f32.gmra.mrb[0].mxu0 %v1539
        %v1714 = vpop.f32.mrb[0].mxu0
        %v1715 = vadd.f32 0.0, %v1714
        %v1716 = vpop.f32.mrb[0].mxu0
        %v1717 = vadd.f32 0.0, %v1716
        %1718 = vdwg.mxu0
        %1719 = vmatprep.subr.mxu0 0.0
        %1720 = vmatpush1.msra.mxu0 %v1527
        %1721 = vmatprep.subr.mxu0 0.0
        %1722 = vmatpush1.msra.mxu0 0.0
        %1723 = vmatprep.subr.mxu0 0.0
        %1724 = vmatpush1.msra.mxu0 0.0
        %1725 = vmatprep.subr.mxu0 0.0
        %1726 = vmatpush1.msra.mxu0 0.0
        %1727 = vmatprep.subr.mxu0 0.0
        %1728 = vmatpush1.msra.mxu0 0.0
        %1729 = vmatprep.subr.mxu0 0.0
        %1730 = vmatpush1.msra.mxu0 0.0
        %1731 = vmatprep.subr.mxu0 0.0
        %1732 = vmatpush1.msra.mxu0 0.0
        %1733 = vmatprep.subr.mxu0 0.0
        %1734 = vmatpush1.msra.mxu0 0.0
        %1735 = vmatprep.subr.mxu0 0.0
        %1736 = vmatpush1.msra.mxu0 0.0
        %1737 = vmatprep.subr.mxu0 0.0
        %1738 = vmatpush1.msra.mxu0 0.0
        %1739 = vmatprep.subr.mxu0 0.0
        %1740 = vmatpush1.msra.mxu0 0.0
        %1741 = vmatprep.subr.mxu0 0.0
        %1742 = vmatpush1.msra.mxu0 0.0
        %1743 = vmatprep.subr.mxu0 0.0
        %1744 = vmatpush1.msra.mxu0 0.0
        %1745 = vmatprep.subr.mxu0 0.0
        %1746 = vmatpush1.msra.mxu0 0.0
        %1747 = vmatprep.subr.mxu0 0.0
        %1748 = vmatpush1.msra.mxu0 0.0
        %1749 = vmatprep.subr.mxu0 0.0
        %1750 = vmatpush1.msra.mxu0 0.0
        %1751 = vmatprep.subr.mxu0 0.0
        %1752 = vmatpush1.msra.mxu0 0.0
        %1753 = vmatprep.subr.mxu0 0.0
        %1754 = vmatpush1.msra.mxu0 0.0
        %1755 = vmatprep.subr.mxu0 0.0
        %1756 = vmatpush1.msra.mxu0 0.0
        %1757 = vmatprep.subr.mxu0 0.0
        %1758 = vmatpush1.msra.mxu0 0.0
        %1759 = vmatprep.subr.mxu0 0.0
        %1760 = vmatpush1.msra.mxu0 0.0
        %1761 = vmatprep.subr.mxu0 0.0
        %1762 = vmatpush1.msra.mxu0 0.0
        %1763 = vmatprep.subr.mxu0 0.0
        %1764 = vmatpush1.msra.mxu0 0.0
        %1765 = vmatprep.subr.mxu0 0.0
        %1766 = vmatpush1.msra.mxu0 0.0
        %1767 = vmatprep.subr.mxu0 0.0
        %1768 = vmatpush1.msra.mxu0 0.0
        %1769 = vmatprep.subr.mxu0 0.0
        %1770 = vmatpush1.msra.mxu0 0.0
        %1771 = vmatprep.subr.mxu0 0.0
        %1772 = vmatpush1.msra.mxu0 0.0
        %1773 = vmatprep.subr.mxu0 0.0
        %1774 = vmatpush1.msra.mxu0 0.0
        %1775 = vmatprep.subr.mxu0 0.0
        %1776 = vmatpush1.msra.mxu0 0.0
        %1777 = vmatprep.subr.mxu0 0.0
        %1778 = vmatpush1.msra.mxu0 0.0
        %1779 = vmatprep.subr.mxu0 0.0
        %1780 = vmatpush1.msra.mxu0 0.0
        %1781 = vmatprep.subr.mxu0 0.0
        %1782 = vmatpush1.msra.mxu0 0.0
        %1783 = vmatprep.mubr.f32.mxu0 0.0
        %1784 = vmatmul.mubr.f32.gmra.mrb[0].mxu0 %v1530
        %v1785 = vpop.f32.mrb[0].mxu0
        %v1786 = vadd.f32 0.0, %v1785
        %v1787 = vpop.f32.mrb[0].mxu0
        %1788 = vmatprep.mubr.f32.mxu0 0.0
        %1789 = vmatmul.mubr.f32.gmra.mrb[0].mxu0 %v1533
        %v1790 = vpop.f32.mrb[0].mxu0
        %v1791 = vadd.f32 0.0, %v1790
        %v1792 = vpop.f32.mrb[0].mxu0
        %1793 = vmatprep.mubr.f32.mxu0 0.0
        %1794 = vmatmul.mubr.f32.gmra.mrb[0].mxu0 %v1536
        %v1795 = vpop.f32.mrb[0].mxu0
        %v1796 = vadd.f32 0.0, %v1795
        %v1797 = vpop.f32.mrb[0].mxu0
        %1798 = vmatprep.mubr.f32.mxu0 0.0
        %1799 = vmatmul.mubr.f32.gmra.mrb[0].mxu0 %v1539
        %v1800 = vpop.f32.mrb[0].mxu0
        %v1801 = vadd.f32 0.0, %v1800
        %v1802 = vpop.f32.mrb[0].mxu0
        %1803 = vdwg.mxu0
        %v1804 = vmul.f32 %v1608, %v1503
        %v1805 = vmul.f32 %v1610, %v1504
        %v1806 = vmul.f32 %v1697, %v1505
        %v1807 = vmul.f32 %v1699, %v1506
        %v1808 = vmul.f32 %v1614, %v1507
        %v1809 = vmul.f32 %v1616, %v1508
        %v1810 = vmul.f32 %v1703, %v1509
        %v1811 = vmul.f32 %v1705, %v1510
        %v1812 = vmul.f32 %v1620, %v1511
        %v1813 = vmul.f32 %v1622, %v1512
        %v1814 = vmul.f32 %v1709, %v1513
        %v1815 = vmul.f32 %v1711, %v1514
        %v1816 = vmul.f32 %v1626, %v1515
        %v1817 = vmul.f32 %v1628, %v1516
        %v1818 = vmul.f32 %v1715, %v1517
        %v1819 = vmul.f32 %v1717, %v1518
        %v1820 = vld [vmem:[%s6] sm:$0xff]
        %v1821 = vld [vmem:[%s6 + $0x8] sm:$0xff]
        %v1822 = vld [vmem:[%s6 + $0x10] sm:$0xff]
        %v1823 = vld [vmem:[%s6 + $0x18] sm:$0xff]
        %v1824 = vld [vmem:[%s6 + $0x20] sm:$0xff]
        %v1825 = vld [vmem:[%s6 + $0x28] sm:$0xff]
        %v1826 = vld [vmem:[%s6 + $0x30] sm:$0xff]
        %v1827 = vld [vmem:[%s6 + $0x38] sm:$0xff]
        %v1828 = vld [vmem:[%s6 + $0x40] sm:$0xff]
        %v1829 = vld [vmem:[%s6 + $0x48] sm:$0xff]
        %v1830 = vld [vmem:[%s6 + $0x50] sm:$0xff]
        %v1831 = vld [vmem:[%s6 + $0x58] sm:$0xff]
        %v1832 = vld [vmem:[%s6 + $0x60] sm:$0xff]
        %v1833 = vld [vmem:[%s6 + $0x68] sm:$0xff]
        %v1834 = vld [vmem:[%s6 + $0x70] sm:$0xff]
        %v1835 = vld [vmem:[%s6 + $0x78] sm:$0xff]
        %v1836 = vld [vmem:[%s6 + $0x80] sm:$0xff]
        %v1837 = vld [vmem:[%s6 + $0x88] sm:$0xff]
        %v1838 = vld [vmem:[%s6 + $0x90] sm:$0xff]
        %v1839 = vld [vmem:[%s6 + $0x98] sm:$0xff]
        %v1840 = vld [vmem:[%s6 + $0xa0] sm:$0xff]
        %v1841 = vld [vmem:[%s6 + $0xa8] sm:$0xff]
        %v1842 = vld [vmem:[%s6 + $0xb0] sm:$0xff]
        %v1843 = vld [vmem:[%s6 + $0xb8] sm:$0xff]
        %v1844 = vld [vmem:[%s6 + $0xc0] sm:$0xff]
        %v1845 = vld [vmem:[%s6 + $0xc8] sm:$0xff]
        %v1846 = vld [vmem:[%s6 + $0xd0] sm:$0xff]
        %v1847 = vld [vmem:[%s6 + $0xd8] sm:$0xff]
        %v1848 = vld [vmem:[%s6 + $0xe0] sm:$0xff]
        %v1849 = vld [vmem:[%s6 + $0xe8] sm:$0xff]
        %v1850 = vld [vmem:[%s6 + $0xf0] sm:$0xff]
        %v1851 = vld [vmem:[%s6 + $0xf8] sm:$0xff]
        %v1852 = vld [vmem:[%s6 + $0x100] sm:$0xff]
        %v1853 = vld [vmem:[%s6 + $0x108] sm:$0xff]
        %v1854 = vld [vmem:[%s6 + $0x110] sm:$0xff]
        %v1855 = vld [vmem:[%s6 + $0x118] sm:$0xff]
        %v1856 = vld [vmem:[%s6 + $0x120] sm:$0xff]
        %v1857 = vld [vmem:[%s6 + $0x128] sm:$0xff]
        %v1858 = vld [vmem:[%s6 + $0x130] sm:$0xff]
        %v1859 = vld [vmem:[%s6 + $0x138] sm:$0xff]
        %v1860 = vld [vmem:[%s6 + $0x140] sm:$0xff]
        %v1861 = vld [vmem:[%s6 + $0x148] sm:$0xff]
        %v1862 = vld [vmem:[%s6 + $0x150] sm:$0xff]
        %v1863 = vld [vmem:[%s6 + $0x158] sm:$0xff]
        %v1864 = vld [vmem:[%s6 + $0x160] sm:$0xff]
        %v1865 = vld [vmem:[%s6 + $0x168] sm:$0xff]
        %v1866 = vld [vmem:[%s6 + $0x170] sm:$0xff]
        %v1867 = vld [vmem:[%s6 + $0x178] sm:$0xff]
        %v1868 = vld [vmem:[%s6 + $0x180] sm:$0xff]
        %v1869 = vld [vmem:[%s6 + $0x188] sm:$0xff]
        %v1870 = vld [vmem:[%s6 + $0x190] sm:$0xff]
        %v1871 = vld [vmem:[%s6 + $0x198] sm:$0xff]
        %v1872 = vld [vmem:[%s6 + $0x1a0] sm:$0xff]
        %v1873 = vld [vmem:[%s6 + $0x1a8] sm:$0xff]
        %v1874 = vld [vmem:[%s6 + $0x1b0] sm:$0xff]
        %v1875 = vld [vmem:[%s6 + $0x1b8] sm:$0xff]
        %v1876 = vld [vmem:[%s6 + $0x1c0] sm:$0xff]
        %v1877 = vld [vmem:[%s6 + $0x1c8] sm:$0xff]
        %v1878 = vld [vmem:[%s6 + $0x1d0] sm:$0xff]
        %v1879 = vld [vmem:[%s6 + $0x1d8] sm:$0xff]
        %v1880 = vld [vmem:[%s6 + $0x1e0] sm:$0xff]
        %v1881 = vld [vmem:[%s6 + $0x1e8] sm:$0xff]
        %v1882 = vld [vmem:[%s6 + $0x1f0] sm:$0xff]
        %v1883 = vld [vmem:[%s6 + $0x1f8] sm:$0xff]
        %1884 = vmatprep.subr.mxu0 0.0
        %1885 = vmatpush1.msra.mxu0 %v1820
        %1886 = vmatprep.subr.mxu0 0.0
        %1887 = vmatpush1.msra.mxu0 %v1821
        %1888 = vmatprep.subr.mxu0 0.0
        %1889 = vmatpush1.msra.mxu0 %v1822
        %1890 = vmatprep.subr.mxu0 0.0
        %1891 = vmatpush1.msra.mxu0 %v1823
        %1892 = vmatprep.subr.mxu0 0.0
        %1893 = vmatpush1.msra.mxu0 %v1824
        %1894 = vmatprep.subr.mxu0 0.0
        %1895 = vmatpush1.msra.mxu0 %v1825
        %1896 = vmatprep.subr.mxu0 0.0
        %1897 = vmatpush1.msra.mxu0 %v1826
        %1898 = vmatprep.subr.mxu0 0.0
        %1899 = vmatpush1.msra.mxu0 %v1827
        %1900 = vmatprep.subr.mxu0 0.0
        %1901 = vmatpush1.msra.mxu0 %v1828
        %1902 = vmatprep.subr.mxu0 0.0
        %1903 = vmatpush1.msra.mxu0 %v1829
        %1904 = vmatprep.subr.mxu0 0.0
        %1905 = vmatpush1.msra.mxu0 %v1830
        %1906 = vmatprep.subr.mxu0 0.0
        %1907 = vmatpush1.msra.mxu0 %v1831
        %1908 = vmatprep.subr.mxu0 0.0
        %1909 = vmatpush1.msra.mxu0 %v1832
        %1910 = vmatprep.subr.mxu0 0.0
        %1911 = vmatpush1.msra.mxu0 %v1833
        %1912 = vmatprep.subr.mxu0 0.0
        %1913 = vmatpush1.msra.mxu0 %v1834
        %1914 = vmatprep.subr.mxu0 0.0
        %1915 = vmatpush1.msra.mxu0 %v1835
        %1916 = vmatprep.subr.mxu0 0.0
        %1917 = vmatpush1.msra.mxu0 %v1836
        %1918 = vmatprep.subr.mxu0 0.0
        %1919 = vmatpush1.msra.mxu0 %v1837
        %1920 = vmatprep.subr.mxu0 0.0
        %1921 = vmatpush1.msra.mxu0 %v1838
        %1922 = vmatprep.subr.mxu0 0.0
        %1923 = vmatpush1.msra.mxu0 %v1839
        %1924 = vmatprep.subr.mxu0 0.0
        %1925 = vmatpush1.msra.mxu0 %v1840
        %1926 = vmatprep.subr.mxu0 0.0
        %1927 = vmatpush1.msra.mxu0 %v1841
        %1928 = vmatprep.subr.mxu0 0.0
        %1929 = vmatpush1.msra.mxu0 %v1842
        %1930 = vmatprep.subr.mxu0 0.0
        %1931 = vmatpush1.msra.mxu0 %v1843
        %1932 = vmatprep.subr.mxu0 0.0
        %1933 = vmatpush1.msra.mxu0 %v1844
        %1934 = vmatprep.subr.mxu0 0.0
        %1935 = vmatpush1.msra.mxu0 %v1845
        %1936 = vmatprep.subr.mxu0 0.0
        %1937 = vmatpush1.msra.mxu0 %v1846
        %1938 = vmatprep.subr.mxu0 0.0
        %1939 = vmatpush1.msra.mxu0 %v1847
        %1940 = vmatprep.subr.mxu0 0.0
        %1941 = vmatpush1.msra.mxu0 %v1848
        %1942 = vmatprep.subr.mxu0 0.0
        %1943 = vmatpush1.msra.mxu0 %v1849
        %1944 = vmatprep.subr.mxu0 0.0
        %1945 = vmatpush1.msra.mxu0 %v1850
        %1946 = vmatprep.subr.mxu0 0.0
        %1947 = vmatpush1.msra.mxu0 %v1851
        %1948 = vmatprep.mubr.f32.mxu0 %v1805
        %1949 = vmatmul.mubr.f32.gmra.mrb[0].mxu0 %v1804
        %v1950 = vpop.f32.mrb[0].mxu0
        %v1951 = vadd.f32 %v1786, %v1950
        %v1952 = vpop.f32.mrb[0].mxu0
        %1953 = vmatprep.mubr.f32.mxu0 %v1809
        %1954 = vmatmul.mubr.f32.gmra.mrb[0].mxu0 %v1808
        %v1955 = vpop.f32.mrb[0].mxu0
        %v1956 = vadd.f32 %v1791, %v1955
        %v1957 = vpop.f32.mrb[0].mxu0
        %1958 = vmatprep.mubr.f32.mxu0 %v1813
        %1959 = vmatmul.mubr.f32.gmra.mrb[0].mxu0 %v1812
        %v1960 = vpop.f32.mrb[0].mxu0
        %v1961 = vadd.f32 %v1796, %v1960
        %v1962 = vpop.f32.mrb[0].mxu0
        %1963 = vmatprep.mubr.f32.mxu0 %v1817
        %1964 = vmatmul.mubr.f32.gmra.mrb[0].mxu0 %v1816
        %v1965 = vpop.f32.mrb[0].mxu0
        %v1966 = vadd.f32 %v1801, %v1965
        %v1967 = vpop.f32.mrb[0].mxu0
        %1968 = vdwg.mxu0
        %1969 = vmatprep.subr.mxu0 0.0
        %1970 = vmatpush1.msra.mxu0 %v1852
        %1971 = vmatprep.subr.mxu0 0.0
        %1972 = vmatpush1.msra.mxu0 %v1853
        %1973 = vmatprep.subr.mxu0 0.0
        %1974 = vmatpush1.msra.mxu0 %v1854
        %1975 = vmatprep.subr.mxu0 0.0
        %1976 = vmatpush1.msra.mxu0 %v1855
        %1977 = vmatprep.subr.mxu0 0.0
        %1978 = vmatpush1.msra.mxu0 %v1856
        %1979 = vmatprep.subr.mxu0 0.0
        %1980 = vmatpush1.msra.mxu0 %v1857
        %1981 = vmatprep.subr.mxu0 0.0
        %1982 = vmatpush1.msra.mxu0 %v1858
        %1983 = vmatprep.subr.mxu0 0.0
        %1984 = vmatpush1.msra.mxu0 %v1859
        %1985 = vmatprep.subr.mxu0 0.0
        %1986 = vmatpush1.msra.mxu0 %v1860
        %1987 = vmatprep.subr.mxu0 0.0
        %1988 = vmatpush1.msra.mxu0 %v1861
        %1989 = vmatprep.subr.mxu0 0.0
        %1990 = vmatpush1.msra.mxu0 %v1862
        %1991 = vmatprep.subr.mxu0 0.0
        %1992 = vmatpush1.msra.mxu0 %v1863
        %1993 = vmatprep.subr.mxu0 0.0
        %1994 = vmatpush1.msra.mxu0 %v1864
        %1995 = vmatprep.subr.mxu0 0.0
        %1996 = vmatpush1.msra.mxu0 %v1865
        %1997 = vmatprep.subr.mxu0 0.0
        %1998 = vmatpush1.msra.mxu0 %v1866
        %1999 = vmatprep.subr.mxu0 0.0
        %2000 = vmatpush1.msra.mxu0 %v1867
        %2001 = vmatprep.subr.mxu0 0.0
        %2002 = vmatpush1.msra.mxu0 %v1868
        %2003 = vmatprep.subr.mxu0 0.0
        %2004 = vmatpush1.msra.mxu0 %v1869
        %2005 = vmatprep.subr.mxu0 0.0
        %2006 = vmatpush1.msra.mxu0 %v1870
        %2007 = vmatprep.subr.mxu0 0.0
        %2008 = vmatpush1.msra.mxu0 %v1871
        %2009 = vmatprep.subr.mxu0 0.0
        %2010 = vmatpush1.msra.mxu0 %v1872
        %2011 = vmatprep.subr.mxu0 0.0
        %2012 = vmatpush1.msra.mxu0 %v1873
        %2013 = vmatprep.subr.mxu0 0.0
        %2014 = vmatpush1.msra.mxu0 %v1874
        %2015 = vmatprep.subr.mxu0 0.0
        %2016 = vmatpush1.msra.mxu0 %v1875
        %2017 = vmatprep.subr.mxu0 0.0
        %2018 = vmatpush1.msra.mxu0 %v1876
        %2019 = vmatprep.subr.mxu0 0.0
        %2020 = vmatpush1.msra.mxu0 %v1877
        %2021 = vmatprep.subr.mxu0 0.0
        %2022 = vmatpush1.msra.mxu0 %v1878
        %2023 = vmatprep.subr.mxu0 0.0
        %2024 = vmatpush1.msra.mxu0 %v1879
        %2025 = vmatprep.subr.mxu0 0.0
        %2026 = vmatpush1.msra.mxu0 %v1880
        %2027 = vmatprep.subr.mxu0 0.0
        %2028 = vmatpush1.msra.mxu0 %v1881
        %2029 = vmatprep.subr.mxu0 0.0
        %2030 = vmatpush1.msra.mxu0 %v1882
        %2031 = vmatprep.subr.mxu0 0.0
        %2032 = vmatpush1.msra.mxu0 %v1883
        %2033 = vmatprep.mubr.f32.mxu0 %v1807
        %2034 = vmatmul.mubr.f32.gmra.mrb[0].mxu0 %v1806
        %v2035 = vpop.f32.mrb[0].mxu0
        %v2036 = vadd.f32 %v1951, %v2035
        %v2037 = vpop.f32.mrb[0].mxu0
        %2038 = vmatprep.mubr.f32.mxu0 %v1811
        %2039 = vmatmul.mubr.f32.gmra.mrb[0].mxu0 %v1810
        %v2040 = vpop.f32.mrb[0].mxu0
        %v2041 = vadd.f32 %v1956, %v2040
        %v2042 = vpop.f32.mrb[0].mxu0
        %2043 = vmatprep.mubr.f32.mxu0 %v1815
        %2044 = vmatmul.mubr.f32.gmra.mrb[0].mxu0 %v1814
        %v2045 = vpop.f32.mrb[0].mxu0
        %v2046 = vadd.f32 %v1961, %v2045
        %v2047 = vpop.f32.mrb[0].mxu0
        %2048 = vmatprep.mubr.f32.mxu0 %v1819
        %2049 = vmatmul.mubr.f32.gmra.mrb[0].mxu0 %v1818
        %v2050 = vpop.f32.mrb[0].mxu0
        %v2051 = vadd.f32 %v1966, %v2050
        %v2052 = vpop.f32.mrb[0].mxu0
        %2053 = vdwg.mxu0
        %v2054 = vadd.f32 %v2036, %v329
        %v2055 = vadd.f32 %v2041, %v330
        %v2056 = vadd.f32 %v2046, %v331
        %v2057 = vadd.f32 %v2051, %v332
        %2058 = vst [vmem:[%s315] sm:$0xff] %v2054
        %2059 = vst [vmem:[%s315 + $0x8] sm:$0xff] %v2055
        %2060 = vst [vmem:[%s315 + $0x10] sm:$0xff] %v2056
        %2061 = vst [vmem:[%s315 + $0x18] sm:$0xff] %v2057
        %s2062 = sand.u32 %s208, 1
        %s2063 = scalar_lea.sflag [#allocation3], %s2062
        %s2064 = sand.u32 %s208, 1
        %s2065 = smul.addr %s2064, 32
        %s2066 = scalar_lea.vmem [#allocation2], %s2065
        // Predicated region
        $region53: #{moe_forward.1} parent=51 // pred_check
          %p2067 = pneg %p218
        $region54: #{moe_forward.1} parent=51 // pred_check_branch
          %2069 = sbr.rel (%p2067) target = $region56
        $region55: #{moe_forward.1} parent=51 // pred_region
          %s2070 = smul.u32 4, %s22
          %s2072 = ssub.s32 512, 512
          %2073 = vsyncadd %s2063, %s2072
          %s2074 = smul.addr %s2070, 128
          %s2075 = scalar_lea.hbm %s8, %s2074
          %s2076 = sshll.u32 %s2066, 4
          %s2077 = int_to_ptr.vmem [resolvable:$true] %s2076
          %2082 = dma.vmem_to_hbm [thread:$0]  %s2077, 512, %s2075, %s2063, 128, 128, 8
        $region56: #{moe_forward.1} parent=51 // pred_fallthru
          _
      $region52: #{moe_forward.1} parent=5 // pred_fallthru
        _
      %p2083 = scmp.le.s32.totalorder 2, %s17
      // Predicated region
      $region57: #{moe_forward.1} parent=5 // pred_check
        %p2084 = pneg %p2083
      $region58: #{moe_forward.1} parent=5 // pred_check_branch
        %2086 = sbr.rel (%p2084) target = $region60
      $region59: #{moe_forward.1} parent=5 // pred_region
        %s2087 = ssub.s32 %s17, 2
        // Predicated region
        $region61: #{moe_forward.1} parent=59 // pred_check
          %p2088 = pneg %p224
        $region62: #{moe_forward.1} parent=59 // pred_check_branch
          %2090 = sbr.rel (%p2088) target = $region64
        $region63: #{moe_forward.1} parent=59 // pred_region
          %s2091 = sand.u32 %s209, 1
          %s2092 = scalar_lea.sflag [#allocation3], %s2091
          %s2093 = sand.u32 %s209, 1
          %s2094 = smul.addr %s2093, 32
          %s2095 = scalar_lea.vmem [#allocation2], %s2094
          %2096 = dma.done %s2092, 512
        $region64: #{moe_forward.1} parent=59 // pred_fallthru
          _
      $region60: #{moe_forward.1} parent=5 // pred_fallthru
        _
    $region6: #{moe_forward.1} parent=1 // loop_footer
      %s21 = sadd.s32 1, %s17
    $region7: #{moe_forward.1} parent=1 // loop_footer_branch
      %16 = sbr.rel target = $region3
    $region8: #{moe_forward.1} parent=1 // loop_exit
      _
    %2097 = vsyncpa [#allocation3], 1
    %s2098 = scalar_lea.sflag [#allocation3], 1
    %2099 = vsyncpa %s2098, 1

// kernel: moe_forward.1
$region0: #{moe_forward.1}
  #allocation0 [shape = 'u32[]', space=smem, size = 0x4, offset = 0x4, fixed_abs, tag = 'smem constant byte address 0x4 - core index']
  #allocation1 [shape = 'u32[144,128]{1,0:T(1,128)}', space=vmem, size = 0x12000, scoped, tag = 'internal scratch']
  %s0 = inlined_call_operand.vmem [shape: f32[64,128], index: 0, kind: input, shape index: {}]
  %s1 = inlined_call_operand.vmem [shape: f32[64,8], index: 1, kind: input, shape index: {}]
  %s2 = inlined_call_operand.vmem [shape: f32[128,512], index: 2, kind: input, shape index: {}]
  %s3 = inlined_call_operand.vmem [shape: f32[1,512], index: 3, kind: input, shape index: {}]
  %s4 = inlined_call_operand.vmem [shape: f32[1,512,512], index: 4, kind: input, shape index: {}]
  %s5 = inlined_call_operand.vmem [shape: f32[1,1,512], index: 5, kind: input, shape index: {}]
  %s6 = inlined_call_operand.vmem [shape: f32[512,128], index: 6, kind: input, shape index: {}]
  %s7 = inlined_call_operand.vmem [shape: f32[8,640], index: 7, kind: input, shape index: {}]
  %s8 = inlined_call_operand.hbm [shape: f32[64,128], index: 8, kind: output, shape index: {}]
  %s9 = sld [smem:[#allocation0]]
  $region65: #{moe_forward.1} parent=0
    _
  %s11 = ssub.s32 1, %s9
  %s12 = scalar_select 0, %s11, %s9
  $region1: #{moe_forward.1} parent=0
    #allocation2 [shape = 'u8[32768]{0}', space=vmem, size = 0x8000, scoped, tag = 'output window, operand 0']
    #allocation3 [shape = 's32[2]{0}', space=sflag, size = 0x8, scoped, tag = 'scoped memory for moe_forward.1']
    %13 = vsyncpa [#allocation3], 0
    %s14 = scalar_lea.sflag [#allocation3], 1
    %15 = vsyncpa %s14, 0
    loop: start=0, step=1, limit=4
    $region2: #{moe_forward.1} parent=1 // loop_pre_header
      _
    $region3: #{moe_forward.1} parent=1 // loop_header
      %s17 = sphi 0, %s21
      %p18 = scmp.ge.s32.totalorder %s17, 4
      %s27 = sphi 0, %s29
      %s30 = sphi 0, %s27
      %s31 = sphi 0, %s30
      %s47 = sphi 0, %s31
      %s53 = sphi 0, %s55
      %s56 = sphi 0, %s53
      %s57 = sphi 0, %s56
      %s73 = sphi 0, %s57
      %s77 = sphi 0, %s77
      %s79 = sphi 0, %s77
      %s80 = sphi 0, %s79
      %s94 = sphi 0, %s80
      %s98 = sphi 0, %s98
      %s100 = sphi 0, %s98
      %s101 = sphi 0, %s100
      %s115 = sphi 0, %s101
      %s119 = sphi 0, %s119
      %s121 = sphi 0, %s119
      %s122 = sphi 0, %s121
      %s136 = sphi 0, %s122
      %s140 = sphi 0, %s140
      %s142 = sphi 0, %s140
      %s143 = sphi 0, %s142
      %s157 = sphi 0, %s143
      %s161 = sphi 0, %s161
      %s163 = sphi 0, %s161
      %s164 = sphi 0, %s163
      %s178 = sphi 0, %s164
      %s182 = sphi 0, %s182
      %s184 = sphi 0, %s182
      %s185 = sphi 0, %s184
      %s199 = sphi 0, %s185
      %s205 = sphi 0, %s207
      %s208 = sphi 0, %s205
      %s209 = sphi 0, %s208
      %s225 = sphi 0, %s209
    $region4: #{moe_forward.1} parent=1 // loop_header_branch
      %20 = sbr.rel (%p18) target = $region8
    $region5: #{moe_forward.1} parent=1 // loop_body
      %s22 = ssub.s32 %s17, 1
      %s23 = ssub.s32 %s17, 2
      %s24 = sadd.s32 %s17, 1
      %s25 = ssub.s32 %s17, %s24
      %p26 = scmp.eq.s32.totalorder %s25, 0
      %s28 = sadd.s32 %s27, 1
      %s29 = scalar_select %p26, %s27, %s28
      %p32 = pneg %p26
      %p33 = scmp.eq.s32.totalorder %s17, 1
      %p34 = por %p32, %p33
      %p35 = scmp.ne.s32.totalorder %s27, %s30
      %p36 = scmp.eq.s32.totalorder %s17, 0
      %p37 = por %p35, %p36
      %p38 = scmp.ne.s32.totalorder %s27, %s30
      %p39 = scmp.eq.s32.totalorder %s22, 1
      %p40 = por %p38, %p39
      %p41 = scmp.ne.s32.totalorder %s30, %s31
      %p42 = scmp.eq.s32.totalorder %s22, 0
      %p43 = por %p41, %p42
      %p44 = scmp.ne.s32.totalorder %s30, %s31
      %p45 = scmp.eq.s32.totalorder %s23, 1
      %p46 = por %p44, %p45
      %p48 = scmp.ne.s32.totalorder %s31, %s47
      %p49 = scmp.eq.s32.totalorder %s23, 0
      %p50 = por %p48, %p49
      %s51 = ssub.s32 %s17, %s24
      %p52 = scmp.eq.s32.totalorder %s51, 0
      %s54 = sadd.s32 %s53, 1
      %s55 = scalar_select %p52, %s53, %s54
      %p58 = pneg %p52
      %p59 = scmp.eq.s32.totalorder %s17, 1
      %p60 = por %p58, %p59
      %p61 = scmp.ne.s32.totalorder %s53, %s56
      %p62 = scmp.eq.s32.totalorder %s17, 0
      %p63 = por %p61, %p62
      %p64 = scmp.ne.s32.totalorder %s53, %s56
      %p65 = scmp.eq.s32.totalorder %s22, 1
      %p66 = por %p64, %p65
      %p67 = scmp.ne.s32.totalorder %s56, %s57
      %p68 = scmp.eq.s32.totalorder %s22, 0
      %p69 = por %p67, %p68
      %p70 = scmp.ne.s32.totalorder %s56, %s57
      %p71 = scmp.eq.s32.totalorder %s23, 1
      %p72 = por %p70, %p71
      %p74 = scmp.ne.s32.totalorder %s57, %s73
      %p75 = scmp.eq.s32.totalorder %s23, 0
      %p76 = por %p74, %p75
      %s78 = sadd.s32 %s77, 1
      %p81 = scmp.eq.s32.totalorder %s17, 1
      %p82 = scmp.ne.s32.totalorder %s77, %s79
      %p83 = scmp.eq.s32.totalorder %s17, 0
      %p84 = por %p82, %p83
      %p85 = scmp.ne.s32.totalorder %s77, %s79
      %p86 = scmp.eq.s32.totalorder %s22, 1
      %p87 = por %p85, %p86
      %p88 = scmp.ne.s32.totalorder %s79, %s80
      %p89 = scmp.eq.s32.totalorder %s22, 0
      %p90 = por %p88, %p89
      %p91 = scmp.ne.s32.totalorder %s79, %s80
      %p92 = scmp.eq.s32.totalorder %s23, 1
      %p93 = por %p91, %p92
      %p95 = scmp.ne.s32.totalorder %s80, %s94
      %p96 = scmp.eq.s32.totalorder %s23, 0
      %p97 = por %p95, %p96
      %s99 = sadd.s32 %s98, 1
      %p102 = scmp.eq.s32.totalorder %s17, 1
      %p103 = scmp.ne.s32.totalorder %s98, %s100
      %p104 = scmp.eq.s32.totalorder %s17, 0
      %p105 = por %p103, %p104
      %p106 = scmp.ne.s32.totalorder %s98, %s100
      %p107 = scmp.eq.s32.totalorder %s22, 1
      %p108 = por %p106, %p107
      %p109 = scmp.ne.s32.totalorder %s100, %s101
      %p110 = scmp.eq.s32.totalorder %s22, 0
      %p111 = por %p109, %p110
      %p112 = scmp.ne.s32.totalorder %s100, %s101
      %p113 = scmp.eq.s32.totalorder %s23, 1
      %p114 = por %p112, %p113
      %p116 = scmp.ne.s32.totalorder %s101, %s115
      %p117 = scmp.eq.s32.totalorder %s23, 0
      %p118 = por %p116, %p117
      %s120 = sadd.s32 %s119, 1
      %p123 = scmp.eq.s32.totalorder %s17, 1
      %p124 = scmp.ne.s32.totalorder %s119, %s121
      %p125 = scmp.eq.s32.totalorder %s17, 0
      %p126 = por %p124, %p125
      %p127 = scmp.ne.s32.totalorder %s119, %s121
      %p128 = scmp.eq.s32.totalorder %s22, 1
      %p129 = por %p127, %p128
      %p130 = scmp.ne.s32.totalorder %s121, %s122
      %p131 = scmp.eq.s32.totalorder %s22, 0
      %p132 = por %p130, %p131
      %p133 = scmp.ne.s32.totalorder %s121, %s122
      %p134 = scmp.eq.s32.totalorder %s23, 1
      %p135 = por %p133, %p134
      %p137 = scmp.ne.s32.totalorder %s122, %s136
      %p138 = scmp.eq.s32.totalorder %s23, 0
      %p139 = por %p137, %p138
      %s141 = sadd.s32 %s140, 1
      %p144 = scmp.eq.s32.totalorder %s17, 1
      %p145 = scmp.ne.s32.totalorder %s140, %s142
      %p146 = scmp.eq.s32.totalorder %s17, 0
      %p147 = por %p145, %p146
      %p148 = scmp.ne.s32.totalorder %s140, %s142
      %p149 = scmp.eq.s32.totalorder %s22, 1
      %p150 = por %p148, %p149
      %p151 = scmp.ne.s32.totalorder %s142, %s143
      %p152 = scmp.eq.s32.totalorder %s22, 0
      %p153 = por %p151, %p152
      %p154 = scmp.ne.s32.totalorder %s142, %s143
      %p155 = scmp.eq.s32.totalorder %s23, 1
      %p156 = por %p154, %p155
      %p158 = scmp.ne.s32.totalorder %s143, %s157
      %p159 = scmp.eq.s32.totalorder %s23, 0
      %p160 = por %p158, %p159
      %s162 = sadd.s32 %s161, 1
      %p165 = scmp.eq.s32.totalorder %s17, 1
      %p166 = scmp.ne.s32.totalorder %s161, %s163
      %p167 = scmp.eq.s32.totalorder %s17, 0
      %p168 = por %p166, %p167
      %p169 = scmp.ne.s32.totalorder %s161, %s163
      %p170 = scmp.eq.s32.totalorder %s22, 1
      %p171 = por %p169, %p170
      %p172 = scmp.ne.s32.totalorder %s163, %s164
      %p173 = scmp.eq.s32.totalorder %s22, 0
      %p174 = por %p172, %p173
      %p175 = scmp.ne.s32.totalorder %s163, %s164
      %p176 = scmp.eq.s32.totalorder %s23, 1
      %p177 = por %p175, %p176
      %p179 = scmp.ne.s32.totalorder %s164, %s178
      %p180 = scmp.eq.s32.totalorder %s23, 0
      %p181 = por %p179, %p180
      %s183 = sadd.s32 %s182, 1
      %p186 = scmp.eq.s32.totalorder %s17, 1
      %p187 = scmp.ne.s32.totalorder %s182, %s184
      %p188 = scmp.eq.s32.totalorder %s17, 0
      %p189 = por %p187, %p188
      %p190 = scmp.ne.s32.totalorder %s182, %s184
      %p191 = scmp.eq.s32.totalorder %s22, 1
      %p192 = por %p190, %p191
      %p193 = scmp.ne.s32.totalorder %s184, %s185
      %p194 = scmp.eq.s32.totalorder %s22, 0
      %p195 = por %p193, %p194
      %p196 = scmp.ne.s32.totalorder %s184, %s185
      %p197 = scmp.eq.s32.totalorder %s23, 1
      %p198 = por %p196, %p197
      %p200 = scmp.ne.s32.totalorder %s185, %s199
      %p201 = scmp.eq.s32.totalorder %s23, 0
      %p202 = por %p200, %p201
      %s203 = ssub.s32 %s17, %s24
      %p204 = scmp.eq.s32.totalorder %s203, 0
      %s206 = sadd.s32 %s205, 1
      %s207 = scalar_select %p204, %s205, %s206
      %p210 = pneg %p204
      %p211 = scmp.eq.s32.totalorder %s17, 1
      %p212 = por %p210, %p211
      %p213 = scmp.ne.s32.totalorder %s205, %s208
      %p214 = scmp.eq.s32.totalorder %s17, 0
      %p215 = por %p213, %p214
      %p216 = scmp.ne.s32.totalorder %s205, %s208
      %p217 = scmp.eq.s32.totalorder %s22, 1
      %p218 = por %p216, %p217
      %p219 = scmp.ne.s32.totalorder %s208, %s209
      %p220 = scmp.eq.s32.totalorder %s22, 0
      %p221 = por %p219, %p220
      %p222 = scmp.ne.s32.totalorder %s208, %s209
      %p223 = scmp.eq.s32.totalorder %s23, 1
      %p224 = por %p222, %p223
      %p226 = scmp.ne.s32.totalorder %s209, %s225
      %p227 = scmp.eq.s32.totalorder %s23, 0
      %p228 = por %p226, %p227
      %p229 = scmp.le.s32.totalorder 1, %s17
      %p230 = scmp.lt.s32.totalorder %s17, 3
      %p231 = pnand %p229, %p230
      %p232 = pneg %p231
      // Predicated region
      $region9: #{moe_forward.1} parent=5 // pred_check
        _
      $region10: #{moe_forward.1} parent=5 // pred_check_branch
        %234 = sbr.rel (%p231) target = $region12
      $region11: #{moe_forward.1} parent=5 // pred_region
        %s235 = ssub.s32 %s17, 1
        // Predicated region
        $region13: #{moe_forward.1} parent=11 // pred_check
          %p236 = pneg %p90
        $region14: #{moe_forward.1} parent=11 // pred_check_branch
          %238 = sbr.rel (%p236) target = $region16
        $region15: #{moe_forward.1} parent=11 // pred_region
          _
        $region16: #{moe_forward.1} parent=11 // pred_fallthru
          _
        // Predicated region
        $region17: #{moe_forward.1} parent=11 // pred_check
          %p239 = pneg %p111
        $region18: #{moe_forward.1} parent=11 // pred_check_branch
          %241 = sbr.rel (%p239) target = $region20
        $region19: #{moe_forward.1} parent=11 // pred_region
          _
        $region20: #{moe_forward.1} parent=11 // pred_fallthru
          _
        // Predicated region
        $region21: #{moe_forward.1} parent=11 // pred_check
          %p242 = pneg %p132
        $region22: #{moe_forward.1} parent=11 // pred_check_branch
          %244 = sbr.rel (%p242) target = $region24
        $region23: #{moe_forward.1} parent=11 // pred_region
          _
        $region24: #{moe_forward.1} parent=11 // pred_fallthru
          _
        // Predicated region
        $region25: #{moe_forward.1} parent=11 // pred_check
          %p245 = pneg %p153
        $region26: #{moe_forward.1} parent=11 // pred_check_branch
          %247 = sbr.rel (%p245) target = $region28
        $region27: #{moe_forward.1} parent=11 // pred_region
          _
        $region28: #{moe_forward.1} parent=11 // pred_fallthru
          _
        // Predicated region
        $region29: #{moe_forward.1} parent=11 // pred_check
          %p248 = pneg %p174
        $region30: #{moe_forward.1} parent=11 // pred_check_branch
          %250 = sbr.rel (%p248) target = $region32
        $region31: #{moe_forward.1} parent=11 // pred_region
          _
        $region32: #{moe_forward.1} parent=11 // pred_fallthru
          _
        // Predicated region
        $region33: #{moe_forward.1} parent=11 // pred_check
          %p251 = pneg %p195
        $region34: #{moe_forward.1} parent=11 // pred_check_branch
          %253 = sbr.rel (%p251) target = $region36
        $region35: #{moe_forward.1} parent=11 // pred_region
          _
        $region36: #{moe_forward.1} parent=11 // pred_fallthru
          _
      $region12: #{moe_forward.1} parent=5 // pred_fallthru
        _
      %p254 = scmp.lt.s32.totalorder %s17, 2
      // Predicated region
      $region37: #{moe_forward.1} parent=5 // pred_check
        %p255 = pneg %p254
      $region38: #{moe_forward.1} parent=5 // pred_check_branch
        %257 = sbr.rel (%p255) target = $region40
      $region39: #{moe_forward.1} parent=5 // pred_region
        // Predicated region
        $region41: #{moe_forward.1} parent=39 // pred_check
          %p258 = pneg %p37
        $region42: #{moe_forward.1} parent=39 // pred_check_branch
          %260 = sbr.rel (%p258) target = $region44
        $region43: #{moe_forward.1} parent=39 // pred_region
          %s261 = smul.u32 4, %s17
          %p262 = scmp.lt.s32.totalorder %s261, 7
          %s263 = scalar_select %p262, %s261, 7
          %s264 = smul.addr %s263, 8
          %s265 = scalar_lea.vmem %s0, %s264
          %s266 = smul.u32 4, %s17
        $region44: #{moe_forward.1} parent=39 // pred_fallthru
          _
        // Predicated region
        $region45: #{moe_forward.1} parent=39 // pred_check
          %p267 = pneg %p63
        $region46: #{moe_forward.1} parent=39 // pred_check_branch
          %269 = sbr.rel (%p267) target = $region48
        $region47: #{moe_forward.1} parent=39 // pred_region
          %s270 = smul.u32 4, %s17
          %p271 = scmp.lt.s32.totalorder %s270, 7
          %s272 = scalar_select %p271, %s270, 7
          %s273 = smul.addr %s272, 8
          %s274 = scalar_lea.vmem %s1, %s273
          %s275 = smul.u32 4, %s17
        $region48: #{moe_forward.1} parent=39 // pred_fallthru
          _
      $region40: #{moe_forward.1} parent=5 // pred_fallthru
        _
      %p276 = scmp.le.s32.totalorder 1, %s17
      %p277 = scmp.lt.s32.totalorder %s17, 3
      %p278 = pnand %p276, %p277
      %p279 = pneg %p278
      // Predicated region
      $region49: #{moe_forward.1} parent=5 // pred_check
        _
      $region50: #{moe_forward.1} parent=5 // pred_check_branch
        %281 = sbr.rel (%p278) target = $region52
      $region51: #{moe_forward.1} parent=5 // pred_region
        %s282 = ssub.s32 %s17, 1
        %s283 = smul.u32 4, %s22
        %p284 = scmp.lt.s32.totalorder %s283, 7
        %s285 = scalar_select %p284, %s283, 7
        %s286 = smul.addr %s285, 8
        %s287 = scalar_lea.vmem %s0, %s286
        %p288 = pneg %p43
        %p289 = pneg %p40
        %s290 = smul.u32 4, %s22
        %p291 = scmp.lt.s32.totalorder %s290, 7
        %s292 = scalar_select %p291, %s290, 7
        %s293 = smul.addr %s292, 8
        %s294 = scalar_lea.vmem %s1, %s293
        %p295 = pneg %p69
        %p296 = pneg %p66
        %p297 = pneg %p90
        %p298 = pneg %p87
        %p299 = pneg %p111
        %p300 = pneg %p108
        %p301 = pneg %p132
        %p302 = pneg %p129
        %p303 = pneg %p153
        %p304 = pneg %p150
        %p305 = pneg %p174
        %p306 = pneg %p171
        %p307 = pneg %p195
        %p308 = pneg %p192
        %p309 = pneg %p221
        %p310 = pneg %p218
        %s311 = sand.u32 %s208, 1
        %s312 = scalar_lea.sflag [#allocation3], %s311
        %s313 = sand.u32 %s208, 1
        %s314 = smul.addr %s313, 32
        %s315 = scalar_lea.vmem [#allocation2], %s314
        %s316 = smul.u32 4, %s22
        %p317 = scmp.lt.s32.totalorder %s316, 7
        %s318 = scalar_select %p317, %s316, 7
        %s319 = smul.addr %s318, 8
        %s320 = scalar_lea.vmem %s0, %s319
        %s321 = smul.u32 4, %s22
        %s322 = smul.u32 4, %s22
        %p323 = scmp.lt.s32.totalorder %s322, 7
        %s324 = scalar_select %p323, %s322, 7
        %s325 = smul.addr %s324, 8
        %s326 = scalar_lea.vmem %s1, %s325
        %s327 = smul.u32 4, %s22
        %s328 = smul.u32 4, %s22
        %v329 = vld [vmem:[%s320] sm:$0xff]
        %v330 = vld [vmem:[%s320 + $0x8] sm:$0xff]
        %v331 = vld [vmem:[%s320 + $0x10] sm:$0xff]
        %v332 = vld [vmem:[%s320 + $0x18] sm:$0xff]
        %v333 = vld [vmem:[%s2] sm:$0xff]
        %v334 = vld [vmem:[%s2 + $0x8] sm:$0xff]
        %v335 = vld [vmem:[%s2 + $0x10] sm:$0xff]
        %v336 = vld [vmem:[%s2 + $0x18] sm:$0xff]
        %v337 = vld [vmem:[%s2 + $0x20] sm:$0xff]
        %v338 = vld [vmem:[%s2 + $0x28] sm:$0xff]
        %v339 = vld [vmem:[%s2 + $0x30] sm:$0xff]
        %v340 = vld [vmem:[%s2 + $0x38] sm:$0xff]
        %v341 = vld [vmem:[%s2 + $0x40] sm:$0xff]
        %v342 = vld [vmem:[%s2 + $0x48] sm:$0xff]
        %v343 = vld [vmem:[%s2 + $0x50] sm:$0xff]
        %v344 = vld [vmem:[%s2 + $0x58] sm:$0xff]
        %v345 = vld [vmem:[%s2 + $0x60] sm:$0xff]
        %v346 = vld [vmem:[%s2 + $0x68] sm:$0xff]
        %v347 = vld [vmem:[%s2 + $0x70] sm:$0xff]
        %v348 = vld [vmem:[%s2 + $0x78] sm:$0xff]
        %v349 = vld [vmem:[%s2 + $0x80] sm:$0xff]
        %v350 = vld [vmem:[%s2 + $0x88] sm:$0xff]
        %v351 = vld [vmem:[%s2 + $0x90] sm:$0xff]
        %v352 = vld [vmem:[%s2 + $0x98] sm:$0xff]
        %v353 = vld [vmem:[%s2 + $0xa0] sm:$0xff]
        %v354 = vld [vmem:[%s2 + $0xa8] sm:$0xff]
        %v355 = vld [vmem:[%s2 + $0xb0] sm:$0xff]
        %v356 = vld [vmem:[%s2 + $0xb8] sm:$0xff]
        %v357 = vld [vmem:[%s2 + $0xc0] sm:$0xff]
        %v358 = vld [vmem:[%s2 + $0xc8] sm:$0xff]
        %v359 = vld [vmem:[%s2 + $0xd0] sm:$0xff]
        %v360 = vld [vmem:[%s2 + $0xd8] sm:$0xff]
        %v361 = vld [vmem:[%s2 + $0xe0] sm:$0xff]
        %v362 = vld [vmem:[%s2 + $0xe8] sm:$0xff]
        %v363 = vld [vmem:[%s2 + $0xf0] sm:$0xff]
        %v364 = vld [vmem:[%s2 + $0xf8] sm:$0xff]
        %v365 = vld [vmem:[%s2 + $0x100] sm:$0xff]
        %v366 = vld [vmem:[%s2 + $0x108] sm:$0xff]
        %v367 = vld [vmem:[%s2 + $0x110] sm:$0xff]
        %v368 = vld [vmem:[%s2 + $0x118] sm:$0xff]
        %v369 = vld [vmem:[%s2 + $0x120] sm:$0xff]
        %v370 = vld [vmem:[%s2 + $0x128] sm:$0xff]
        %v371 = vld [vmem:[%s2 + $0x130] sm:$0xff]
        %v372 = vld [vmem:[%s2 + $0x138] sm:$0xff]
        %v373 = vld [vmem:[%s2 + $0x140] sm:$0xff]
        %v374 = vld [vmem:[%s2 + $0x148] sm:$0xff]
        %v375 = vld [vmem:[%s2 + $0x150] sm:$0xff]
        %v376 = vld [vmem:[%s2 + $0x158] sm:$0xff]
        %v377 = vld [vmem:[%s2 + $0x160] sm:$0xff]
        %v378 = vld [vmem:[%s2 + $0x168] sm:$0xff]
        %v379 = vld [vmem:[%s2 + $0x170] sm:$0xff]
        %v380 = vld [vmem:[%s2 + $0x178] sm:$0xff]
        %v381 = vld [vmem:[%s2 + $0x180] sm:$0xff]
        %v382 = vld [vmem:[%s2 + $0x188] sm:$0xff]
        %v383 = vld [vmem:[%s2 + $0x190] sm:$0xff]
        %v384 = vld [vmem:[%s2 + $0x198] sm:$0xff]
        %v385 = vld [vmem:[%s2 + $0x1a0] sm:$0xff]
        %v386 = vld [vmem:[%s2 + $0x1a8] sm:$0xff]
        %v387 = vld [vmem:[%s2 + $0x1b0] sm:$0xff]
        %v388 = vld [vmem:[%s2 + $0x1b8] sm:$0xff]
        %v389 = vld [vmem:[%s2 + $0x1c0] sm:$0xff]
        %v390 = vld [vmem:[%s2 + $0x1c8] sm:$0xff]
        %v391 = vld [vmem:[%s2 + $0x1d0] sm:$0xff]
        %v392 = vld [vmem:[%s2 + $0x1d8] sm:$0xff]
        %v393 = vld [vmem:[%s2 + $0x1e0] sm:$0xff]
        %v394 = vld [vmem:[%s2 + $0x1e8] sm:$0xff]
        %v395 = vld [vmem:[%s2 + $0x1f0] sm:$0xff]
        %v396 = vld [vmem:[%s2 + $0x1f8] sm:$0xff]
        %v397 = vld [vmem:[%s3] sm:$0xf]
        %v399 = vlaneseq
        %v400 = vshrl.u32 %v399, 7
        %v401 = vsub.s32 0, %v400
        %v402 = vrot.slane %v397, %v401
        %v403 = vlaneseq
        %v404 = vshrl.u32 %v403, 7
        %v405 = vsub.s32 1, %v404
        %v406 = vrot.slane %v397, %v405
        %v407 = vlaneseq
        %v408 = vshrl.u32 %v407, 7
        %v409 = vsub.s32 2, %v408
        %v410 = vrot.slane %v397, %v409
        %v411 = vlaneseq
        %v412 = vshrl.u32 %v411, 7
        %v413 = vsub.s32 3, %v412
        %v414 = vrot.slane %v397, %v413
        %419 = vmatprep.subr.mxu0 %v334
        %420 = vmatpush1.msra.mxu0 %v333
        %421 = vmatprep.subr.mxu0 %v338
        %422 = vmatpush1.msra.mxu0 %v337
        %423 = vmatprep.subr.mxu0 %v342
        %424 = vmatpush1.msra.mxu0 %v341
        %425 = vmatprep.subr.mxu0 %v346
        %426 = vmatpush1.msra.mxu0 %v345
        %427 = vmatprep.subr.mxu0 %v350
        %428 = vmatpush1.msra.mxu0 %v349
        %429 = vmatprep.subr.mxu0 %v354
        %430 = vmatpush1.msra.mxu0 %v353
        %431 = vmatprep.subr.mxu0 %v358
        %432 = vmatpush1.msra.mxu0 %v357
        %433 = vmatprep.subr.mxu0 %v362
        %434 = vmatpush1.msra.mxu0 %v361
        %435 = vmatprep.subr.mxu0 %v366
        %436 = vmatpush1.msra.mxu0 %v365
        %437 = vmatprep.subr.mxu0 %v370
        %438 = vmatpush1.msra.mxu0 %v369
        %439 = vmatprep.subr.mxu0 %v374
        %440 = vmatpush1.msra.mxu0 %v373
        %441 = vmatprep.subr.mxu0 %v378
        %442 = vmatpush1.msra.mxu0 %v377
        %443 = vmatprep.subr.mxu0 %v382
        %444 = vmatpush1.msra.mxu0 %v381
        %445 = vmatprep.subr.mxu0 %v386
        %446 = vmatpush1.msra.mxu0 %v385
        %447 = vmatprep.subr.mxu0 %v390
        %448 = vmatpush1.msra.mxu0 %v389
        %449 = vmatprep.subr.mxu0 %v394
        %450 = vmatpush1.msra.mxu0 %v393
        %451 = vmatprep.subr.mxu0 0.0
        %452 = vmatpush1.msra.mxu0 0.0
        %453 = vmatprep.subr.mxu0 0.0
        %454 = vmatpush1.msra.mxu0 0.0
        %455 = vmatprep.subr.mxu0 0.0
        %456 = vmatpush1.msra.mxu0 0.0
        %457 = vmatprep.subr.mxu0 0.0
        %458 = vmatpush1.msra.mxu0 0.0
        %459 = vmatprep.subr.mxu0 0.0
        %460 = vmatpush1.msra.mxu0 0.0
        %461 = vmatprep.subr.mxu0 0.0
        %462 = vmatpush1.msra.mxu0 0.0
        %463 = vmatprep.subr.mxu0 0.0
        %464 = vmatpush1.msra.mxu0 0.0
        %465 = vmatprep.subr.mxu0 0.0
        %466 = vmatpush1.msra.mxu0 0.0
        %467 = vmatprep.subr.mxu0 0.0
        %468 = vmatpush1.msra.mxu0 0.0
        %469 = vmatprep.subr.mxu0 0.0
        %470 = vmatpush1.msra.mxu0 0.0
        %471 = vmatprep.subr.mxu0 0.0
        %472 = vmatpush1.msra.mxu0 0.0
        %473 = vmatprep.subr.mxu0 0.0
        %474 = vmatpush1.msra.mxu0 0.0
        %475 = vmatprep.subr.mxu0 0.0
        %476 = vmatpush1.msra.mxu0 0.0
        %477 = vmatprep.subr.mxu0 0.0
        %478 = vmatpush1.msra.mxu0 0.0
        %479 = vmatprep.subr.mxu0 0.0
        %480 = vmatpush1.msra.mxu0 0.0
        %481 = vmatprep.subr.mxu0 0.0
        %482 = vmatpush1.msra.mxu0 0.0
        %483 = vmatprep.mubr.f32.mxu0 0.0
        %484 = vmatmul.mubr.f32.gmra.mrb[0].mxu0 %v329
        %v485 = vpop.f32.mrb[0].mxu0
        %v486 = vadd.f32 %v402, %v485
        %v487 = vpop.f32.mrb[0].mxu0
        %v488 = vadd.f32 %v406, %v487
        %489 = vmatprep.mubr.f32.mxu0 0.0
        %490 = vmatmul.mubr.f32.gmra.mrb[0].mxu0 %v330
        %v491 = vpop.f32.mrb[0].mxu0
        %v492 = vadd.f32 %v402, %v491
        %v493 = vpop.f32.mrb[0].mxu0
        %v494 = vadd.f32 %v406, %v493
        %495 = vmatprep.mubr.f32.mxu0 0.0
        %496 = vmatmul.mubr.f32.gmra.mrb[0].mxu0 %v331
        %v497 = vpop.f32.mrb[0].mxu0
        %v498 = vadd.f32 %v402, %v497
        %v499 = vpop.f32.mrb[0].mxu0
        %v500 = vadd.f32 %v406, %v499
        %501 = vmatprep.mubr.f32.mxu0 0.0
        %502 = vmatmul.mubr.f32.gmra.mrb[0].mxu0 %v332
        %v503 = vpop.f32.mrb[0].mxu0
        %v504 = vadd.f32 %v402, %v503
        %v505 = vpop.f32.mrb[0].mxu0
        %v506 = vadd.f32 %v406, %v505
        %507 = vdwg.mxu0
        %508 = vmatprep.subr.mxu0 %v336
        %509 = vmatpush1.msra.mxu0 %v335
        %510 = vmatprep.subr.mxu0 %v340
        %511 = vmatpush1.msra.mxu0 %v339
        %512 = vmatprep.subr.mxu0 %v344
        %513 = vmatpush1.msra.mxu0 %v343
        %514 = vmatprep.subr.mxu0 %v348
        %515 = vmatpush1.msra.mxu0 %v347
        %516 = vmatprep.subr.mxu0 %v352
        %517 = vmatpush1.msra.mxu0 %v351
        %518 = vmatprep.subr.mxu0 %v356
        %519 = vmatpush1.msra.mxu0 %v355
        %520 = vmatprep.subr.mxu0 %v360
        %521 = vmatpush1.msra.mxu0 %v359
        %522 = vmatprep.subr.mxu0 %v364
        %523 = vmatpush1.msra.mxu0 %v363
        %524 = vmatprep.subr.mxu0 %v368
        %525 = vmatpush1.msra.mxu0 %v367
        %526 = vmatprep.subr.mxu0 %v372
        %527 = vmatpush1.msra.mxu0 %v371
        %528 = vmatprep.subr.mxu0 %v376
        %529 = vmatpush1.msra.mxu0 %v375
        %530 = vmatprep.subr.mxu0 %v380
        %531 = vmatpush1.msra.mxu0 %v379
        %532 = vmatprep.subr.mxu0 %v384
        %533 = vmatpush1.msra.mxu0 %v383
        %534 = vmatprep.subr.mxu0 %v388
        %535 = vmatpush1.msra.mxu0 %v387
        %536 = vmatprep.subr.mxu0 %v392
        %537 = vmatpush1.msra.mxu0 %v391
        %538 = vmatprep.subr.mxu0 %v396
        %539 = vmatpush1.msra.mxu0 %v395
        %540 = vmatprep.subr.mxu0 0.0
        %541 = vmatpush1.msra.mxu0 0.0
        %542 = vmatprep.subr.mxu0 0.0
        %543 = vmatpush1.msra.mxu0 0.0
        %544 = vmatprep.subr.mxu0 0.0
        %545 = vmatpush1.msra.mxu0 0.0
        %546 = vmatprep.subr.mxu0 0.0
        %547 = vmatpush1.msra.mxu0 0.0
        %548 = vmatprep.subr.mxu0 0.0
        %549 = vmatpush1.msra.mxu0 0.0
        %550 = vmatprep.subr.mxu0 0.0
        %551 = vmatpush1.msra.mxu0 0.0
        %552 = vmatprep.subr.mxu0 0.0
        %553 = vmatpush1.msra.mxu0 0.0
        %554 = vmatprep.subr.mxu0 0.0
        %555 = vmatpush1.msra.mxu0 0.0
        %556 = vmatprep.subr.mxu0 0.0
        %557 = vmatpush1.msra.mxu0 0.0
        %558 = vmatprep.subr.mxu0 0.0
        %559 = vmatpush1.msra.mxu0 0.0
        %560 = vmatprep.subr.mxu0 0.0
        %561 = vmatpush1.msra.mxu0 0.0
        %562 = vmatprep.subr.mxu0 0.0
        %563 = vmatpush1.msra.mxu0 0.0
        %564 = vmatprep.subr.mxu0 0.0
        %565 = vmatpush1.msra.mxu0 0.0
        %566 = vmatprep.subr.mxu0 0.0
        %567 = vmatpush1.msra.mxu0 0.0
        %568 = vmatprep.subr.mxu0 0.0
        %569 = vmatpush1.msra.mxu0 0.0
        %570 = vmatprep.subr.mxu0 0.0
        %571 = vmatpush1.msra.mxu0 0.0
        %572 = vmatprep.mubr.f32.mxu0 0.0
        %573 = vmatmul.mubr.f32.gmra.mrb[0].mxu0 %v329
        %v574 = vpop.f32.mrb[0].mxu0
        %v575 = vadd.f32 %v410, %v574
        %v576 = vpop.f32.mrb[0].mxu0
        %v577 = vadd.f32 %v414, %v576
        %578 = vmatprep.mubr.f32.mxu0 0.0
        %579 = vmatmul.mubr.f32.gmra.mrb[0].mxu0 %v330
        %v580 = vpop.f32.mrb[0].mxu0
        %v581 = vadd.f32 %v410, %v580
        %v582 = vpop.f32.mrb[0].mxu0
        %v583 = vadd.f32 %v414, %v582
        %584 = vmatprep.mubr.f32.mxu0 0.0
        %585 = vmatmul.mubr.f32.gmra.mrb[0].mxu0 %v331
        %v586 = vpop.f32.mrb[0].mxu0
        %v587 = vadd.f32 %v410, %v586
        %v588 = vpop.f32.mrb[0].mxu0
        %v589 = vadd.f32 %v414, %v588
        %590 = vmatprep.mubr.f32.mxu0 0.0
        %591 = vmatmul.mubr.f32.gmra.mrb[0].mxu0 %v332
        %v592 = vpop.f32.mrb[0].mxu0
        %v593 = vadd.f32 %v410, %v592
        %v594 = vpop.f32.mrb[0].mxu0
        %v595 = vadd.f32 %v414, %v594
        %596 = vdwg.mxu0
        %v597 = vmul.f32 %v486, %v486
        %v598 = vmul.f32 %v488, %v488
        %v599 = vmul.f32 %v575, %v575
        %v600 = vmul.f32 %v577, %v577
        %v601 = vmul.f32 %v492, %v492
        %v602 = vmul.f32 %v494, %v494
        %v603 = vmul.f32 %v581, %v581
        %v604 = vmul.f32 %v583, %v583
        %v605 = vmul.f32 %v498, %v498
        %v606 = vmul.f32 %v500, %v500
        %v607 = vmul.f32 %v587, %v587
        %v608 = vmul.f32 %v589, %v589
        %v609 = vmul.f32 %v504, %v504
        %v610 = vmul.f32 %v506, %v506
        %v611 = vmul.f32 %v593, %v593
        %v612 = vmul.f32 %v595, %v595
        %v613 = vmul.f32 %v486, %v597
        %v614 = vmul.f32 %v488, %v598
        %v615 = vmul.f32 %v575, %v599
        %v616 = vmul.f32 %v577, %v600
        %v617 = vmul.f32 %v492, %v601
        %v618 = vmul.f32 %v494, %v602
        %v619 = vmul.f32 %v581, %v603
        %v620 = vmul.f32 %v583, %v604
        %v621 = vmul.f32 %v498, %v605
        %v622 = vmul.f32 %v500, %v606
        %v623 = vmul.f32 %v587, %v607
        %v624 = vmul.f32 %v589, %v608
        %v625 = vmul.f32 %v504, %v609
        %v626 = vmul.f32 %v506, %v610
        %v627 = vmul.f32 %v593, %v611
        %v628 = vmul.f32 %v595, %v612
        %v629 = vmul.f32 %v613, 0.044715
        %v630 = vmul.f32 %v614, 0.044715
        %v631 = vmul.f32 %v615, 0.044715
        %v632 = vmul.f32 %v616, 0.044715
        %v633 = vmul.f32 %v617, 0.044715
        %v634 = vmul.f32 %v618, 0.044715
        %v635 = vmul.f32 %v619, 0.044715
        %v636 = vmul.f32 %v620, 0.044715
        %v637 = vmul.f32 %v621, 0.044715
        %v638 = vmul.f32 %v622, 0.044715
        %v639 = vmul.f32 %v623, 0.044715
        %v640 = vmul.f32 %v624, 0.044715
        %v641 = vmul.f32 %v625, 0.044715
        %v642 = vmul.f32 %v626, 0.044715
        %v643 = vmul.f32 %v627, 0.044715
        %v644 = vmul.f32 %v628, 0.044715
        %v645 = vadd.f32 %v486, %v629
        %v646 = vadd.f32 %v488, %v630
        %v647 = vadd.f32 %v575, %v631
        %v648 = vadd.f32 %v577, %v632
        %v649 = vadd.f32 %v492, %v633
        %v650 = vadd.f32 %v494, %v634
        %v651 = vadd.f32 %v581, %v635
        %v652 = vadd.f32 %v583, %v636
        %v653 = vadd.f32 %v498, %v637
        %v654 = vadd.f32 %v500, %v638
        %v655 = vadd.f32 %v587, %v639
        %v656 = vadd.f32 %v589, %v640
        %v657 = vadd.f32 %v504, %v641
        %v658 = vadd.f32 %v506, %v642
        %v659 = vadd.f32 %v593, %v643
        %v660 = vadd.f32 %v595, %v644
        %v661 = vmul.f32 %v645, 0.7978846
        %v662 = vmul.f32 %v646, 0.7978846
        %v663 = vmul.f32 %v647, 0.7978846
        %v664 = vmul.f32 %v648, 0.7978846
        %v665 = vmul.f32 %v649, 0.7978846
        %v666 = vmul.f32 %v650, 0.7978846
        %v667 = vmul.f32 %v651, 0.7978846
        %v668 = vmul.f32 %v652, 0.7978846
        %v669 = vmul.f32 %v653, 0.7978846
        %v670 = vmul.f32 %v654, 0.7978846
        %v671 = vmul.f32 %v655, 0.7978846
        %v672 = vmul.f32 %v656, 0.7978846
        %v673 = vmul.f32 %v657, 0.7978846
        %v674 = vmul.f32 %v658, 0.7978846
        %v675 = vmul.f32 %v659, 0.7978846
        %v676 = vmul.f32 %v660, 0.7978846
        %v677 = vtanh.pop %v661
        %v678 = vtanh.pop %v662
        %v679 = vtanh.pop %v663
        %v680 = vtanh.pop %v664
        %v681 = vtanh.pop %v665
        %v682 = vtanh.pop %v666
        %v683 = vtanh.pop %v667
        %v684 = vtanh.pop %v668
        %v685 = vtanh.pop %v669
        %v686 = vtanh.pop %v670
        %v687 = vtanh.pop %v671
        %v688 = vtanh.pop %v672
        %v689 = vtanh.pop %v673
        %v690 = vtanh.pop %v674
        %v691 = vtanh.pop %v675
        %v692 = vtanh.pop %v676
        %v693 = vadd.f32 %v677, 1.0
        %v694 = vadd.f32 %v678, 1.0
        %v695 = vadd.f32 %v679, 1.0
        %v696 = vadd.f32 %v680, 1.0
        %v697 = vadd.f32 %v681, 1.0
        %v698 = vadd.f32 %v682, 1.0
        %v699 = vadd.f32 %v683, 1.0
        %v700 = vadd.f32 %v684, 1.0
        %v701 = vadd.f32 %v685, 1.0
        %v702 = vadd.f32 %v686, 1.0
        %v703 = vadd.f32 %v687, 1.0
        %v704 = vadd.f32 %v688, 1.0
        %v705 = vadd.f32 %v689, 1.0
        %v706 = vadd.f32 %v690, 1.0
        %v707 = vadd.f32 %v691, 1.0
        %v708 = vadd.f32 %v692, 1.0
        %v709 = vmul.f32 %v693, 0.5
        %v710 = vmul.f32 %v694, 0.5
        %v711 = vmul.f32 %v695, 0.5
        %v712 = vmul.f32 %v696, 0.5
        %v713 = vmul.f32 %v697, 0.5
        %v714 = vmul.f32 %v698, 0.5
        %v715 = vmul.f32 %v699, 0.5
        %v716 = vmul.f32 %v700, 0.5
        %v717 = vmul.f32 %v701, 0.5
        %v718 = vmul.f32 %v702, 0.5
        %v719 = vmul.f32 %v703, 0.5
        %v720 = vmul.f32 %v704, 0.5
        %v721 = vmul.f32 %v705, 0.5
        %v722 = vmul.f32 %v706, 0.5
        %v723 = vmul.f32 %v707, 0.5
        %v724 = vmul.f32 %v708, 0.5
        %v725 = vmul.f32 %v486, %v709
        %v726 = vmul.f32 %v488, %v710
        %v727 = vmul.f32 %v575, %v711
        %v728 = vmul.f32 %v577, %v712
        %v729 = vmul.f32 %v492, %v713
        %v730 = vmul.f32 %v494, %v714
        %v731 = vmul.f32 %v581, %v715
        %v732 = vmul.f32 %v583, %v716
        %v733 = vmul.f32 %v498, %v717
        %v734 = vmul.f32 %v500, %v718
        %v735 = vmul.f32 %v587, %v719
        %v736 = vmul.f32 %v589, %v720
        %v737 = vmul.f32 %v504, %v721
        %v738 = vmul.f32 %v506, %v722
        %v739 = vmul.f32 %v593, %v723
        %v740 = vmul.f32 %v595, %v724
        %v741 = vld [vmem:[%s4] sm:$0xff]
        %v742 = vld [vmem:[%s4 + $0x8] sm:$0xff]
        %v743 = vld [vmem:[%s4 + $0x10] sm:$0xff]
        %v744 = vld [vmem:[%s4 + $0x18] sm:$0xff]
        %v745 = vld [vmem:[%s4 + $0x20] sm:$0xff]
        %v746 = vld [vmem:[%s4 + $0x28] sm:$0xff]
        %v747 = vld [vmem:[%s4 + $0x30] sm:$0xff]
        %v748 = vld [vmem:[%s4 + $0x38] sm:$0xff]
        %v749 = vld [vmem:[%s4 + $0x40] sm:$0xff]
        %v750 = vld [vmem:[%s4 + $0x48] sm:$0xff]
        %v751 = vld [vmem:[%s4 + $0x50] sm:$0xff]
        %v752 = vld [vmem:[%s4 + $0x58] sm:$0xff]
        %v753 = vld [vmem:[%s4 + $0x60] sm:$0xff]
        %v754 = vld [vmem:[%s4 + $0x68] sm:$0xff]
        %v755 = vld [vmem:[%s4 + $0x70] sm:$0xff]
        %v756 = vld [vmem:[%s4 + $0x78] sm:$0xff]
        %v757 = vld [vmem:[%s4 + $0x80] sm:$0xff]
        %v758 = vld [vmem:[%s4 + $0x88] sm:$0xff]
        %v759 = vld [vmem:[%s4 + $0x90] sm:$0xff]
        %v760 = vld [vmem:[%s4 + $0x98] sm:$0xff]
        %v761 = vld [vmem:[%s4 + $0xa0] sm:$0xff]
        %v762 = vld [vmem:[%s4 + $0xa8] sm:$0xff]
        %v763 = vld [vmem:[%s4 + $0xb0] sm:$0xff]
        %v764 = vld [vmem:[%s4 + $0xb8] sm:$0xff]
        %v765 = vld [vmem:[%s4 + $0xc0] sm:$0xff]
        %v766 = vld [vmem:[%s4 + $0xc8] sm:$0xff]
        %v767 = vld [vmem:[%s4 + $0xd0] sm:$0xff]
        %v768 = vld [vmem:[%s4 + $0xd8] sm:$0xff]
        %v769 = vld [vmem:[%s4 + $0xe0] sm:$0xff]
        %v770 = vld [vmem:[%s4 + $0xe8] sm:$0xff]
        %v771 = vld [vmem:[%s4 + $0xf0] sm:$0xff]
        %v772 = vld [vmem:[%s4 + $0xf8] sm:$0xff]
        %v773 = vld [vmem:[%s4 + $0x100] sm:$0xff]
        %v774 = vld [vmem:[%s4 + $0x108] sm:$0xff]
        %v775 = vld [vmem:[%s4 + $0x110] sm:$0xff]
        %v776 = vld [vmem:[%s4 + $0x118] sm:$0xff]
        %v777 = vld [vmem:[%s4 + $0x120] sm:$0xff]
        %v778 = vld [vmem:[%s4 + $0x128] sm:$0xff]
        %v779 = vld [vmem:[%s4 + $0x130] sm:$0xff]
        %v780 = vld [vmem:[%s4 + $0x138] sm:$0xff]
        %v781 = vld [vmem:[%s4 + $0x140] sm:$0xff]
        %v782 = vld [vmem:[%s4 + $0x148] sm:$0xff]
        %v783 = vld [vmem:[%s4 + $0x150] sm:$0xff]
        %v784 = vld [vmem:[%s4 + $0x158] sm:$0xff]
        %v785 = vld [vmem:[%s4 + $0x160] sm:$0xff]
        %v786 = vld [vmem:[%s4 + $0x168] sm:$0xff]
        %v787 = vld [vmem:[%s4 + $0x170] sm:$0xff]
        %v788 = vld [vmem:[%s4 + $0x178] sm:$0xff]
        %v789 = vld [vmem:[%s4 + $0x180] sm:$0xff]
        %v790 = vld [vmem:[%s4 + $0x188] sm:$0xff]
        %v791 = vld [vmem:[%s4 + $0x190] sm:$0xff]
        %v792 = vld [vmem:[%s4 + $0x198] sm:$0xff]
        %v793 = vld [vmem:[%s4 + $0x1a0] sm:$0xff]
        %v794 = vld [vmem:[%s4 + $0x1a8] sm:$0xff]
        %v795 = vld [vmem:[%s4 + $0x1b0] sm:$0xff]
        %v796 = vld [vmem:[%s4 + $0x1b8] sm:$0xff]
        %v797 = vld [vmem:[%s4 + $0x1c0] sm:$0xff]
        %v798 = vld [vmem:[%s4 + $0x1c8] sm:$0xff]
        %v799 = vld [vmem:[%s4 + $0x1d0] sm:$0xff]
        %v800 = vld [vmem:[%s4 + $0x1d8] sm:$0xff]
        %v801 = vld [vmem:[%s4 + $0x1e0] sm:$0xff]
        %v802 = vld [vmem:[%s4 + $0x1e8] sm:$0xff]
        %v803 = vld [vmem:[%s4 + $0x1f0] sm:$0xff]
        %v804 = vld [vmem:[%s4 + $0x1f8] sm:$0xff]
        %v805 = vld [vmem:[%s4 + $0x200] sm:$0xff]
        %v806 = vld [vmem:[%s4 + $0x208] sm:$0xff]
        %v807 = vld [vmem:[%s4 + $0x210] sm:$0xff]
        %v808 = vld [vmem:[%s4 + $0x218] sm:$0xff]
        %v809 = vld [vmem:[%s4 + $0x220] sm:$0xff]
        %v810 = vld [vmem:[%s4 + $0x228] sm:$0xff]
        %v811 = vld [vmem:[%s4 + $0x230] sm:$0xff]
        %v812 = vld [vmem:[%s4 + $0x238] sm:$0xff]
        %v813 = vld [vmem:[%s4 + $0x240] sm:$0xff]
        %v814 = vld [vmem:[%s4 + $0x248] sm:$0xff]
        %v815 = vld [vmem:[%s4 + $0x250] sm:$0xff]
        %v816 = vld [vmem:[%s4 + $0x258] sm:$0xff]
        %v817 = vld [vmem:[%s4 + $0x260] sm:$0xff]
        %v818 = vld [vmem:[%s4 + $0x268] sm:$0xff]
        %v819 = vld [vmem:[%s4 + $0x270] sm:$0xff]
        %v820 = vld [vmem:[%s4 + $0x278] sm:$0xff]
        %v821 = vld [vmem:[%s4 + $0x280] sm:$0xff]
        %v822 = vld [vmem:[%s4 + $0x288] sm:$0xff]
        %v823 = vld [vmem:[%s4 + $0x290] sm:$0xff]
        %v824 = vld [vmem:[%s4 + $0x298] sm:$0xff]
        %v825 = vld [vmem:[%s4 + $0x2a0] sm:$0xff]
        %v826 = vld [vmem:[%s4 + $0x2a8] sm:$0xff]
        %v827 = vld [vmem:[%s4 + $0x2b0] sm:$0xff]
        %v828 = vld [vmem:[%s4 + $0x2b8] sm:$0xff]
        %v829 = vld [vmem:[%s4 + $0x2c0] sm:$0xff]
        %v830 = vld [vmem:[%s4 + $0x2c8] sm:$0xff]
        %v831 = vld [vmem:[%s4 + $0x2d0] sm:$0xff]
        %v832 = vld [vmem:[%s4 + $0x2d8] sm:$0xff]
        %v833 = vld [vmem:[%s4 + $0x2e0] sm:$0xff]
        %v834 = vld [vmem:[%s4 + $0x2e8] sm:$0xff]
        %v835 = vld [vmem:[%s4 + $0x2f0] sm:$0xff]
        %v836 = vld [vmem:[%s4 + $0x2f8] sm:$0xff]
        %v837 = vld [vmem:[%s4 + $0x300] sm:$0xff]
        %v838 = vld [vmem:[%s4 + $0x308] sm:$0xff]
        %v839 = vld [vmem:[%s4 + $0x310] sm:$0xff]
        %v840 = vld [vmem:[%s4 + $0x318] sm:$0xff]
        %v841 = vld [vmem:[%s4 + $0x320] sm:$0xff]
        %v842 = vld [vmem:[%s4 + $0x328] sm:$0xff]
        %v843 = vld [vmem:[%s4 + $0x330] sm:$0xff]
        %v844 = vld [vmem:[%s4 + $0x338] sm:$0xff]
        %v845 = vld [vmem:[%s4 + $0x340] sm:$0xff]
        %v846 = vld [vmem:[%s4 + $0x348] sm:$0xff]
        %v847 = vld [vmem:[%s4 + $0x350] sm:$0xff]
        %v848 = vld [vmem:[%s4 + $0x358] sm:$0xff]
        %v849 = vld [vmem:[%s4 + $0x360] sm:$0xff]
        %v850 = vld [vmem:[%s4 + $0x368] sm:$0xff]
        %v851 = vld [vmem:[%s4 + $0x370] sm:$0xff]
        %v852 = vld [vmem:[%s4 + $0x378] sm:$0xff]
        %v853 = vld [vmem:[%s4 + $0x380] sm:$0xff]
        %v854 = vld [vmem:[%s4 + $0x388] sm:$0xff]
        %v855 = vld [vmem:[%s4 + $0x390] sm:$0xff]
        %v856 = vld [vmem:[%s4 + $0x398] sm:$0xff]
        %v857 = vld [vmem:[%s4 + $0x3a0] sm:$0xff]
        %v858 = vld [vmem:[%s4 + $0x3a8] sm:$0xff]
        %v859 = vld [vmem:[%s4 + $0x3b0] sm:$0xff]
        %v860 = vld [vmem:[%s4 + $0x3b8] sm:$0xff]
        %v861 = vld [vmem:[%s4 + $0x3c0] sm:$0xff]
        %v862 = vld [vmem:[%s4 + $0x3c8] sm:$0xff]
        %v863 = vld [vmem:[%s4 + $0x3d0] sm:$0xff]
        %v864 = vld [vmem:[%s4 + $0x3d8] sm:$0xff]
        %v865 = vld [vmem:[%s4 + $0x3e0] sm:$0xff]
        %v866 = vld [vmem:[%s4 + $0x3e8] sm:$0xff]
        %v867 = vld [vmem:[%s4 + $0x3f0] sm:$0xff]
        %v868 = vld [vmem:[%s4 + $0x3f8] sm:$0xff]
        %v869 = vld [vmem:[%s4 + $0x400] sm:$0xff]
        %v870 = vld [vmem:[%s4 + $0x408] sm:$0xff]
        %v871 = vld [vmem:[%s4 + $0x410] sm:$0xff]
        %v872 = vld [vmem:[%s4 + $0x418] sm:$0xff]
        %v873 = vld [vmem:[%s4 + $0x420] sm:$0xff]
        %v874 = vld [vmem:[%s4 + $0x428] sm:$0xff]
        %v875 = vld [vmem:[%s4 + $0x430] sm:$0xff]
        %v876 = vld [vmem:[%s4 + $0x438] sm:$0xff]
        %v877 = vld [vmem:[%s4 + $0x440] sm:$0xff]
        %v878 = vld [vmem:[%s4 + $0x448] sm:$0xff]
        %v879 = vld [vmem:[%s4 + $0x450] sm:$0xff]
        %v880 = vld [vmem:[%s4 + $0x458] sm:$0xff]
        %v881 = vld [vmem:[%s4 + $0x460] sm:$0xff]
        %v882 = vld [vmem:[%s4 + $0x468] sm:$0xff]
        %v883 = vld [vmem:[%s4 + $0x470] sm:$0xff]
        %v884 = vld [vmem:[%s4 + $0x478] sm:$0xff]
        %v885 = vld [vmem:[%s4 + $0x480] sm:$0xff]
        %v886 = vld [vmem:[%s4 + $0x488] sm:$0xff]
        %v887 = vld [vmem:[%s4 + $0x490] sm:$0xff]
        %v888 = vld [vmem:[%s4 + $0x498] sm:$0xff]
        %v889 = vld [vmem:[%s4 + $0x4a0] sm:$0xff]
        %v890 = vld [vmem:[%s4 + $0x4a8] sm:$0xff]
        %v891 = vld [vmem:[%s4 + $0x4b0] sm:$0xff]
        %v892 = vld [vmem:[%s4 + $0x4b8] sm:$0xff]
        %v893 = vld [vmem:[%s4 + $0x4c0] sm:$0xff]
        %v894 = vld [vmem:[%s4 + $0x4c8] sm:$0xff]
        %v895 = vld [vmem:[%s4 + $0x4d0] sm:$0xff]
        %v896 = vld [vmem:[%s4 + $0x4d8] sm:$0xff]
        %v897 = vld [vmem:[%s4 + $0x4e0] sm:$0xff]
        %v898 = vld [vmem:[%s4 + $0x4e8] sm:$0xff]
        %v899 = vld [vmem:[%s4 + $0x4f0] sm:$0xff]
        %v900 = vld [vmem:[%s4 + $0x4f8] sm:$0xff]
        %v901 = vld [vmem:[%s4 + $0x500] sm:$0xff]
        %v902 = vld [vmem:[%s4 + $0x508] sm:$0xff]
        %v903 = vld [vmem:[%s4 + $0x510] sm:$0xff]
        %v904 = vld [vmem:[%s4 + $0x518] sm:$0xff]
        %v905 = vld [vmem:[%s4 + $0x520] sm:$0xff]
        %v906 = vld [vmem:[%s4 + $0x528] sm:$0xff]
        %v907 = vld [vmem:[%s4 + $0x530] sm:$0xff]
        %v908 = vld [vmem:[%s4 + $0x538] sm:$0xff]
        %v909 = vld [vmem:[%s4 + $0x540] sm:$0xff]
        %v910 = vld [vmem:[%s4 + $0x548] sm:$0xff]
        %v911 = vld [vmem:[%s4 + $0x550] sm:$0xff]
        %v912 = vld [vmem:[%s4 + $0x558] sm:$0xff]
        %v913 = vld [vmem:[%s4 + $0x560] sm:$0xff]
        %v914 = vld [vmem:[%s4 + $0x568] sm:$0xff]
        %v915 = vld [vmem:[%s4 + $0x570] sm:$0xff]
        %v916 = vld [vmem:[%s4 + $0x578] sm:$0xff]
        %v917 = vld [vmem:[%s4 + $0x580] sm:$0xff]
        %v918 = vld [vmem:[%s4 + $0x588] sm:$0xff]
        %v919 = vld [vmem:[%s4 + $0x590] sm:$0xff]
        %v920 = vld [vmem:[%s4 + $0x598] sm:$0xff]
        %v921 = vld [vmem:[%s4 + $0x5a0] sm:$0xff]
        %v922 = vld [vmem:[%s4 + $0x5a8] sm:$0xff]
        %v923 = vld [vmem:[%s4 + $0x5b0] sm:$0xff]
        %v924 = vld [vmem:[%s4 + $0x5b8] sm:$0xff]
        %v925 = vld [vmem:[%s4 + $0x5c0] sm:$0xff]
        %v926 = vld [vmem:[%s4 + $0x5c8] sm:$0xff]
        %v927 = vld [vmem:[%s4 + $0x5d0] sm:$0xff]
        %v928 = vld [vmem:[%s4 + $0x5d8] sm:$0xff]
        %v929 = vld [vmem:[%s4 + $0x5e0] sm:$0xff]
        %v930 = vld [vmem:[%s4 + $0x5e8] sm:$0xff]
        %v931 = vld [vmem:[%s4 + $0x5f0] sm:$0xff]
        %v932 = vld [vmem:[%s4 + $0x5f8] sm:$0xff]
        %v933 = vld [vmem:[%s4 + $0x600] sm:$0xff]
        %v934 = vld [vmem:[%s4 + $0x608] sm:$0xff]
        %v935 = vld [vmem:[%s4 + $0x610] sm:$0xff]
        %v936 = vld [vmem:[%s4 + $0x618] sm:$0xff]
        %v937 = vld [vmem:[%s4 + $0x620] sm:$0xff]
        %v938 = vld [vmem:[%s4 + $0x628] sm:$0xff]
        %v939 = vld [vmem:[%s4 + $0x630] sm:$0xff]
        %v940 = vld [vmem:[%s4 + $0x638] sm:$0xff]
        %v941 = vld [vmem:[%s4 + $0x640] sm:$0xff]
        %v942 = vld [vmem:[%s4 + $0x648] sm:$0xff]
        %v943 = vld [vmem:[%s4 + $0x650] sm:$0xff]
        %v944 = vld [vmem:[%s4 + $0x658] sm:$0xff]
        %v945 = vld [vmem:[%s4 + $0x660] sm:$0xff]
        %v946 = vld [vmem:[%s4 + $0x668] sm:$0xff]
        %v947 = vld [vmem:[%s4 + $0x670] sm:$0xff]
        %v948 = vld [vmem:[%s4 + $0x678] sm:$0xff]
        %v949 = vld [vmem:[%s4 + $0x680] sm:$0xff]
        %v950 = vld [vmem:[%s4 + $0x688] sm:$0xff]
        %v951 = vld [vmem:[%s4 + $0x690] sm:$0xff]
        %v952 = vld [vmem:[%s4 + $0x698] sm:$0xff]
        %v953 = vld [vmem:[%s4 + $0x6a0] sm:$0xff]
        %v954 = vld [vmem:[%s4 + $0x6a8] sm:$0xff]
        %v955 = vld [vmem:[%s4 + $0x6b0] sm:$0xff]
        %v956 = vld [vmem:[%s4 + $0x6b8] sm:$0xff]
        %v957 = vld [vmem:[%s4 + $0x6c0] sm:$0xff]
        %v958 = vld [vmem:[%s4 + $0x6c8] sm:$0xff]
        %v959 = vld [vmem:[%s4 + $0x6d0] sm:$0xff]
        %v960 = vld [vmem:[%s4 + $0x6d8] sm:$0xff]
        %v961 = vld [vmem:[%s4 + $0x6e0] sm:$0xff]
        %v962 = vld [vmem:[%s4 + $0x6e8] sm:$0xff]
        %v963 = vld [vmem:[%s4 + $0x6f0] sm:$0xff]
        %v964 = vld [vmem:[%s4 + $0x6f8] sm:$0xff]
        %v965 = vld [vmem:[%s4 + $0x700] sm:$0xff]
        %v966 = vld [vmem:[%s4 + $0x708] sm:$0xff]
        %v967 = vld [vmem:[%s4 + $0x710] sm:$0xff]
        %v968 = vld [vmem:[%s4 + $0x718] sm:$0xff]
        %v969 = vld [vmem:[%s4 + $0x720] sm:$0xff]
        %v970 = vld [vmem:[%s4 + $0x728] sm:$0xff]
        %v971 = vld [vmem:[%s4 + $0x730] sm:$0xff]
        %v972 = vld [vmem:[%s4 + $0x738] sm:$0xff]
        %v973 = vld [vmem:[%s4 + $0x740] sm:$0xff]
        %v974 = vld [vmem:[%s4 + $0x748] sm:$0xff]
        %v975 = vld [vmem:[%s4 + $0x750] sm:$0xff]
        %v976 = vld [vmem:[%s4 + $0x758] sm:$0xff]
        %v977 = vld [vmem:[%s4 + $0x760] sm:$0xff]
        %v978 = vld [vmem:[%s4 + $0x768] sm:$0xff]
        %v979 = vld [vmem:[%s4 + $0x770] sm:$0xff]
        %v980 = vld [vmem:[%s4 + $0x778] sm:$0xff]
        %v981 = vld [vmem:[%s4 + $0x780] sm:$0xff]
        %v982 = vld [vmem:[%s4 + $0x788] sm:$0xff]
        %v983 = vld [vmem:[%s4 + $0x790] sm:$0xff]
        %v984 = vld [vmem:[%s4 + $0x798] sm:$0xff]
        %v985 = vld [vmem:[%s4 + $0x7a0] sm:$0xff]
        %v986 = vld [vmem:[%s4 + $0x7a8] sm:$0xff]
        %v987 = vld [vmem:[%s4 + $0x7b0] sm:$0xff]
        %v988 = vld [vmem:[%s4 + $0x7b8] sm:$0xff]
        %v989 = vld [vmem:[%s4 + $0x7c0] sm:$0xff]
        %v990 = vld [vmem:[%s4 + $0x7c8] sm:$0xff]
        %v991 = vld [vmem:[%s4 + $0x7d0] sm:$0xff]
        %v992 = vld [vmem:[%s4 + $0x7d8] sm:$0xff]
        %v993 = vld [vmem:[%s4 + $0x7e0] sm:$0xff]
        %v994 = vld [vmem:[%s4 + $0x7e8] sm:$0xff]
        %v995 = vld [vmem:[%s4 + $0x7f0] sm:$0xff]
        %v996 = vld [vmem:[%s4 + $0x7f8] sm:$0xff]
        %v997 = vld [vmem:[%s5] sm:$0xf]
        %v999 = vlaneseq
        %v1000 = vshrl.u32 %v999, 7
        %v1001 = vsub.s32 0, %v1000
        %v1002 = vrot.slane %v997, %v1001
        %v1003 = vlaneseq
        %v1004 = vshrl.u32 %v1003, 7
        %v1005 = vsub.s32 1, %v1004
        %v1006 = vrot.slane %v997, %v1005
        %v1007 = vlaneseq
        %v1008 = vshrl.u32 %v1007, 7
        %v1009 = vsub.s32 2, %v1008
        %v1010 = vrot.slane %v997, %v1009
        %v1011 = vlaneseq
        %v1012 = vshrl.u32 %v1011, 7
        %v1013 = vsub.s32 3, %v1012
        %v1014 = vrot.slane %v997, %v1013
        %1019 = vmatprep.subr.mxu0 %v742
        %1020 = vmatpush1.msra.mxu0 %v741
        %1021 = vmatprep.subr.mxu0 %v746
        %1022 = vmatpush1.msra.mxu0 %v745
        %1023 = vmatprep.subr.mxu0 %v750
        %1024 = vmatpush1.msra.mxu0 %v749
        %1025 = vmatprep.subr.mxu0 %v754
        %1026 = vmatpush1.msra.mxu0 %v753
        %1027 = vmatprep.subr.mxu0 %v758
        %1028 = vmatpush1.msra.mxu0 %v757
        %1029 = vmatprep.subr.mxu0 %v762
        %1030 = vmatpush1.msra.mxu0 %v761
        %1031 = vmatprep.subr.mxu0 %v766
        %1032 = vmatpush1.msra.mxu0 %v765
        %1033 = vmatprep.subr.mxu0 %v770
        %1034 = vmatpush1.msra.mxu0 %v769
        %1035 = vmatprep.subr.mxu0 %v774
        %1036 = vmatpush1.msra.mxu0 %v773
        %1037 = vmatprep.subr.mxu0 %v778
        %1038 = vmatpush1.msra.mxu0 %v777
        %1039 = vmatprep.subr.mxu0 %v782
        %1040 = vmatpush1.msra.mxu0 %v781
        %1041 = vmatprep.subr.mxu0 %v786
        %1042 = vmatpush1.msra.mxu0 %v785
        %1043 = vmatprep.subr.mxu0 %v790
        %1044 = vmatpush1.msra.mxu0 %v789
        %1045 = vmatprep.subr.mxu0 %v794
        %1046 = vmatpush1.msra.mxu0 %v793
        %1047 = vmatprep.subr.mxu0 %v798
        %1048 = vmatpush1.msra.mxu0 %v797
        %1049 = vmatprep.subr.mxu0 %v802
        %1050 = vmatpush1.msra.mxu0 %v801
        %1051 = vmatprep.subr.mxu0 %v806
        %1052 = vmatpush1.msra.mxu0 %v805
        %1053 = vmatprep.subr.mxu0 %v810
        %1054 = vmatpush1.msra.mxu0 %v809
        %1055 = vmatprep.subr.mxu0 %v814
        %1056 = vmatpush1.msra.mxu0 %v813
        %1057 = vmatprep.subr.mxu0 %v818
        %1058 = vmatpush1.msra.mxu0 %v817
        %1059 = vmatprep.subr.mxu0 %v822
        %1060 = vmatpush1.msra.mxu0 %v821
        %1061 = vmatprep.subr.mxu0 %v826
        %1062 = vmatpush1.msra.mxu0 %v825
        %1063 = vmatprep.subr.mxu0 %v830
        %1064 = vmatpush1.msra.mxu0 %v829
        %1065 = vmatprep.subr.mxu0 %v834
        %1066 = vmatpush1.msra.mxu0 %v833
        %1067 = vmatprep.subr.mxu0 %v838
        %1068 = vmatpush1.msra.mxu0 %v837
        %1069 = vmatprep.subr.mxu0 %v842
        %1070 = vmatpush1.msra.mxu0 %v841
        %1071 = vmatprep.subr.mxu0 %v846
        %1072 = vmatpush1.msra.mxu0 %v845
        %1073 = vmatprep.subr.mxu0 %v850
        %1074 = vmatpush1.msra.mxu0 %v849
        %1075 = vmatprep.subr.mxu0 %v854
        %1076 = vmatpush1.msra.mxu0 %v853
        %1077 = vmatprep.subr.mxu0 %v858
        %1078 = vmatpush1.msra.mxu0 %v857
        %1079 = vmatprep.subr.mxu0 %v862
        %1080 = vmatpush1.msra.mxu0 %v861
        %1081 = vmatprep.subr.mxu0 %v866
        %1082 = vmatpush1.msra.mxu0 %v865
        %1083 = vmatprep.mubr.f32.mxu0 %v726
        %1084 = vmatmul.mubr.f32.gmra.mrb[0].mxu0 %v725
        %v1085 = vpop.f32.mrb[0].mxu0
        %v1086 = vadd.f32 %v1002, %v1085
        %v1087 = vpop.f32.mrb[0].mxu0
        %v1088 = vadd.f32 %v1006, %v1087
        %1089 = vmatprep.mubr.f32.mxu0 %v730
        %1090 = vmatmul.mubr.f32.gmra.mrb[0].mxu0 %v729
        %v1091 = vpop.f32.mrb[0].mxu0
        %v1092 = vadd.f32 %v1002, %v1091
        %v1093 = vpop.f32.mrb[0].mxu0
        %v1094 = vadd.f32 %v1006, %v1093
        %1095 = vmatprep.mubr.f32.mxu0 %v734
        %1096 = vmatmul.mubr.f32.gmra.mrb[0].mxu0 %v733
        %v1097 = vpop.f32.mrb[0].mxu0
        %v1098 = vadd.f32 %v1002, %v1097
        %v1099 = vpop.f32.mrb[0].mxu0
        %v1100 = vadd.f32 %v1006, %v1099
        %1101 = vmatprep.mubr.f32.mxu0 %v738
        %1102 = vmatmul.mubr.f32.gmra.mrb[0].mxu0 %v737
        %v1103 = vpop.f32.mrb[0].mxu0
        %v1104 = vadd.f32 %v1002, %v1103
        %v1105 = vpop.f32.mrb[0].mxu0
        %v1106 = vadd.f32 %v1006, %v1105
        %1107 = vdwg.mxu0
        %1108 = vmatprep.subr.mxu0 %v870
        %1109 = vmatpush1.msra.mxu0 %v869
        %1110 = vmatprep.subr.mxu0 %v874
        %1111 = vmatpush1.msra.mxu0 %v873
        %1112 = vmatprep.subr.mxu0 %v878
        %1113 = vmatpush1.msra.mxu0 %v877
        %1114 = vmatprep.subr.mxu0 %v882
        %1115 = vmatpush1.msra.mxu0 %v881
        %1116 = vmatprep.subr.mxu0 %v886
        %1117 = vmatpush1.msra.mxu0 %v885
        %1118 = vmatprep.subr.mxu0 %v890
        %1119 = vmatpush1.msra.mxu0 %v889
        %1120 = vmatprep.subr.mxu0 %v894
        %1121 = vmatpush1.msra.mxu0 %v893
        %1122 = vmatprep.subr.mxu0 %v898
        %1123 = vmatpush1.msra.mxu0 %v897
        %1124 = vmatprep.subr.mxu0 %v902
        %1125 = vmatpush1.msra.mxu0 %v901
        %1126 = vmatprep.subr.mxu0 %v906
        %1127 = vmatpush1.msra.mxu0 %v905
        %1128 = vmatprep.subr.mxu0 %v910
        %1129 = vmatpush1.msra.mxu0 %v909
        %1130 = vmatprep.subr.mxu0 %v914
        %1131 = vmatpush1.msra.mxu0 %v913
        %1132 = vmatprep.subr.mxu0 %v918
        %1133 = vmatpush1.msra.mxu0 %v917
        %1134 = vmatprep.subr.mxu0 %v922
        %1135 = vmatpush1.msra.mxu0 %v921
        %1136 = vmatprep.subr.mxu0 %v926
        %1137 = vmatpush1.msra.mxu0 %v925
        %1138 = vmatprep.subr.mxu0 %v930
        %1139 = vmatpush1.msra.mxu0 %v929
        %1140 = vmatprep.subr.mxu0 %v934
        %1141 = vmatpush1.msra.mxu0 %v933
        %1142 = vmatprep.subr.mxu0 %v938
        %1143 = vmatpush1.msra.mxu0 %v937
        %1144 = vmatprep.subr.mxu0 %v942
        %1145 = vmatpush1.msra.mxu0 %v941
        %1146 = vmatprep.subr.mxu0 %v946
        %1147 = vmatpush1.msra.mxu0 %v945
        %1148 = vmatprep.subr.mxu0 %v950
        %1149 = vmatpush1.msra.mxu0 %v949
        %1150 = vmatprep.subr.mxu0 %v954
        %1151 = vmatpush1.msra.mxu0 %v953
        %1152 = vmatprep.subr.mxu0 %v958
        %1153 = vmatpush1.msra.mxu0 %v957
        %1154 = vmatprep.subr.mxu0 %v962
        %1155 = vmatpush1.msra.mxu0 %v961
        %1156 = vmatprep.subr.mxu0 %v966
        %1157 = vmatpush1.msra.mxu0 %v965
        %1158 = vmatprep.subr.mxu0 %v970
        %1159 = vmatpush1.msra.mxu0 %v969
        %1160 = vmatprep.subr.mxu0 %v974
        %1161 = vmatpush1.msra.mxu0 %v973
        %1162 = vmatprep.subr.mxu0 %v978
        %1163 = vmatpush1.msra.mxu0 %v977
        %1164 = vmatprep.subr.mxu0 %v982
        %1165 = vmatpush1.msra.mxu0 %v981
        %1166 = vmatprep.subr.mxu0 %v986
        %1167 = vmatpush1.msra.mxu0 %v985
        %1168 = vmatprep.subr.mxu0 %v990
        %1169 = vmatpush1.msra.mxu0 %v989
        %1170 = vmatprep.subr.mxu0 %v994
        %1171 = vmatpush1.msra.mxu0 %v993
        %1172 = vmatprep.mubr.f32.mxu0 %v728
        %1173 = vmatmul.mubr.f32.gmra.mrb[0].mxu0 %v727
        %v1174 = vpop.f32.mrb[0].mxu0
        %v1175 = vadd.f32 %v1086, %v1174
        %v1176 = vpop.f32.mrb[0].mxu0
        %v1177 = vadd.f32 %v1088, %v1176
        %1178 = vmatprep.mubr.f32.mxu0 %v732
        %1179 = vmatmul.mubr.f32.gmra.mrb[0].mxu0 %v731
        %v1180 = vpop.f32.mrb[0].mxu0
        %v1181 = vadd.f32 %v1092, %v1180
        %v1182 = vpop.f32.mrb[0].mxu0
        %v1183 = vadd.f32 %v1094, %v1182
        %1184 = vmatprep.mubr.f32.mxu0 %v736
        %1185 = vmatmul.mubr.f32.gmra.mrb[0].mxu0 %v735
        %v1186 = vpop.f32.mrb[0].mxu0
        %v1187 = vadd.f32 %v1098, %v1186
        %v1188 = vpop.f32.mrb[0].mxu0
        %v1189 = vadd.f32 %v1100, %v1188
        %1190 = vmatprep.mubr.f32.mxu0 %v740
        %1191 = vmatmul.mubr.f32.gmra.mrb[0].mxu0 %v739
        %v1192 = vpop.f32.mrb[0].mxu0
        %v1193 = vadd.f32 %v1104, %v1192
        %v1194 = vpop.f32.mrb[0].mxu0
        %v1195 = vadd.f32 %v1106, %v1194
        %1196 = vdwg.mxu0
        %1197 = vmatprep.subr.mxu0 %v744
        %1198 = vmatpush1.msra.mxu0 %v743
        %1199 = vmatprep.subr.mxu0 %v748
        %1200 = vmatpush1.msra.mxu0 %v747
        %1201 = vmatprep.subr.mxu0 %v752
        %1202 = vmatpush1.msra.mxu0 %v751
        %1203 = vmatprep.subr.mxu0 %v756
        %1204 = vmatpush1.msra.mxu0 %v755
        %1205 = vmatprep.subr.mxu0 %v760
        %1206 = vmatpush1.msra.mxu0 %v759
        %1207 = vmatprep.subr.mxu0 %v764
        %1208 = vmatpush1.msra.mxu0 %v763
        %1209 = vmatprep.subr.mxu0 %v768
        %1210 = vmatpush1.msra.mxu0 %v767
        %1211 = vmatprep.subr.mxu0 %v772
        %1212 = vmatpush1.msra.mxu0 %v771
        %1213 = vmatprep.subr.mxu0 %v776
        %1214 = vmatpush1.msra.mxu0 %v775
        %1215 = vmatprep.subr.mxu0 %v780
        %1216 = vmatpush1.msra.mxu0 %v779
        %1217 = vmatprep.subr.mxu0 %v784
        %1218 = vmatpush1.msra.mxu0 %v783
        %1219 = vmatprep.subr.mxu0 %v788
        %1220 = vmatpush1.msra.mxu0 %v787
        %1221 = vmatprep.subr.mxu0 %v792
        %1222 = vmatpush1.msra.mxu0 %v791
        %1223 = vmatprep.subr.mxu0 %v796
        %1224 = vmatpush1.msra.mxu0 %v795
        %1225 = vmatprep.subr.mxu0 %v800
        %1226 = vmatpush1.msra.mxu0 %v799
        %1227 = vmatprep.subr.mxu0 %v804
        %1228 = vmatpush1.msra.mxu0 %v803
        %1229 = vmatprep.subr.mxu0 %v808
        %1230 = vmatpush1.msra.mxu0 %v807
        %1231 = vmatprep.subr.mxu0 %v812
        %1232 = vmatpush1.msra.mxu0 %v811
        %1233 = vmatprep.subr.mxu0 %v816
        %1234 = vmatpush1.msra.mxu0 %v815
        %1235 = vmatprep.subr.mxu0 %v820
        %1236 = vmatpush1.msra.mxu0 %v819
        %1237 = vmatprep.subr.mxu0 %v824
        %1238 = vmatpush1.msra.mxu0 %v823
        %1239 = vmatprep.subr.mxu0 %v828
        %1240 = vmatpush1.msra.mxu0 %v827
        %1241 = vmatprep.subr.mxu0 %v832
        %1242 = vmatpush1.msra.mxu0 %v831
        %1243 = vmatprep.subr.mxu0 %v836
        %1244 = vmatpush1.msra.mxu0 %v835
        %1245 = vmatprep.subr.mxu0 %v840
        %1246 = vmatpush1.msra.mxu0 %v839
        %1247 = vmatprep.subr.mxu0 %v844
        %1248 = vmatpush1.msra.mxu0 %v843
        %1249 = vmatprep.subr.mxu0 %v848
        %1250 = vmatpush1.msra.mxu0 %v847
        %1251 = vmatprep.subr.mxu0 %v852
        %1252 = vmatpush1.msra.mxu0 %v851
        %1253 = vmatprep.subr.mxu0 %v856
        %1254 = vmatpush1.msra.mxu0 %v855
        %1255 = vmatprep.subr.mxu0 %v860
        %1256 = vmatpush1.msra.mxu0 %v859
        %1257 = vmatprep.subr.mxu0 %v864
        %1258 = vmatpush1.msra.mxu0 %v863
        %1259 = vmatprep.subr.mxu0 %v868
        %1260 = vmatpush1.msra.mxu0 %v867
        %1261 = vmatprep.mubr.f32.mxu0 %v726
        %1262 = vmatmul.mubr.f32.gmra.mrb[0].mxu0 %v725
        %v1263 = vpop.f32.mrb[0].mxu0
        %v1264 = vadd.f32 %v1010, %v1263
        %v1265 = vpop.f32.mrb[0].mxu0
        %v1266 = vadd.f32 %v1014, %v1265
        %1267 = vmatprep.mubr.f32.mxu0 %v730
        %1268 = vmatmul.mubr.f32.gmra.mrb[0].mxu0 %v729
        %v1269 = vpop.f32.mrb[0].mxu0
        %v1270 = vadd.f32 %v1010, %v1269
        %v1271 = vpop.f32.mrb[0].mxu0
        %v1272 = vadd.f32 %v1014, %v1271
        %1273 = vmatprep.mubr.f32.mxu0 %v734
        %1274 = vmatmul.mubr.f32.gmra.mrb[0].mxu0 %v733
        %v1275 = vpop.f32.mrb[0].mxu0
        %v1276 = vadd.f32 %v1010, %v1275
        %v1277 = vpop.f32.mrb[0].mxu0
        %v1278 = vadd.f32 %v1014, %v1277
        %1279 = vmatprep.mubr.f32.mxu0 %v738
        %1280 = vmatmul.mubr.f32.gmra.mrb[0].mxu0 %v737
        %v1281 = vpop.f32.mrb[0].mxu0
        %v1282 = vadd.f32 %v1010, %v1281
        %v1283 = vpop.f32.mrb[0].mxu0
        %v1284 = vadd.f32 %v1014, %v1283
        %1285 = vdwg.mxu0
        %1286 = vmatprep.subr.mxu0 %v872
        %1287 = vmatpush1.msra.mxu0 %v871
        %1288 = vmatprep.subr.mxu0 %v876
        %1289 = vmatpush1.msra.mxu0 %v875
        %1290 = vmatprep.subr.mxu0 %v880
        %1291 = vmatpush1.msra.mxu0 %v879
        %1292 = vmatprep.subr.mxu0 %v884
        %1293 = vmatpush1.msra.mxu0 %v883
        %1294 = vmatprep.subr.mxu0 %v888
        %1295 = vmatpush1.msra.mxu0 %v887
        %1296 = vmatprep.subr.mxu0 %v892
        %1297 = vmatpush1.msra.mxu0 %v891
        %1298 = vmatprep.subr.mxu0 %v896
        %1299 = vmatpush1.msra.mxu0 %v895
        %1300 = vmatprep.subr.mxu0 %v900
        %1301 = vmatpush1.msra.mxu0 %v899
        %1302 = vmatprep.subr.mxu0 %v904
        %1303 = vmatpush1.msra.mxu0 %v903
        %1304 = vmatprep.subr.mxu0 %v908
        %1305 = vmatpush1.msra.mxu0 %v907
        %1306 = vmatprep.subr.mxu0 %v912
        %1307 = vmatpush1.msra.mxu0 %v911
        %1308 = vmatprep.subr.mxu0 %v916
        %1309 = vmatpush1.msra.mxu0 %v915
        %1310 = vmatprep.subr.mxu0 %v920
        %1311 = vmatpush1.msra.mxu0 %v919
        %1312 = vmatprep.subr.mxu0 %v924
        %1313 = vmatpush1.msra.mxu0 %v923
        %1314 = vmatprep.subr.mxu0 %v928
        %1315 = vmatpush1.msra.mxu0 %v927
        %1316 = vmatprep.subr.mxu0 %v932
        %1317 = vmatpush1.msra.mxu0 %v931
        %1318 = vmatprep.subr.mxu0 %v936
        %1319 = vmatpush1.msra.mxu0 %v935
        %1320 = vmatprep.subr.mxu0 %v940
        %1321 = vmatpush1.msra.mxu0 %v939
        %1322 = vmatprep.subr.mxu0 %v944
        %1323 = vmatpush1.msra.mxu0 %v943
        %1324 = vmatprep.subr.mxu0 %v948
        %1325 = vmatpush1.msra.mxu0 %v947
        %1326 = vmatprep.subr.mxu0 %v952
        %1327 = vmatpush1.msra.mxu0 %v951
        %1328 = vmatprep.subr.mxu0 %v956
        %1329 = vmatpush1.msra.mxu0 %v955
        %1330 = vmatprep.subr.mxu0 %v960
        %1331 = vmatpush1.msra.mxu0 %v959
        %1332 = vmatprep.subr.mxu0 %v964
        %1333 = vmatpush1.msra.mxu0 %v963
        %1334 = vmatprep.subr.mxu0 %v968
        %1335 = vmatpush1.msra.mxu0 %v967
        %1336 = vmatprep.subr.mxu0 %v972
        %1337 = vmatpush1.msra.mxu0 %v971
        %1338 = vmatprep.subr.mxu0 %v976
        %1339 = vmatpush1.msra.mxu0 %v975
        %1340 = vmatprep.subr.mxu0 %v980
        %1341 = vmatpush1.msra.mxu0 %v979
        %1342 = vmatprep.subr.mxu0 %v984
        %1343 = vmatpush1.msra.mxu0 %v983
        %1344 = vmatprep.subr.mxu0 %v988
        %1345 = vmatpush1.msra.mxu0 %v987
        %1346 = vmatprep.subr.mxu0 %v992
        %1347 = vmatpush1.msra.mxu0 %v991
        %1348 = vmatprep.subr.mxu0 %v996
        %1349 = vmatpush1.msra.mxu0 %v995
        %1350 = vmatprep.mubr.f32.mxu0 %v728
        %1351 = vmatmul.mubr.f32.gmra.mrb[0].mxu0 %v727
        %v1352 = vpop.f32.mrb[0].mxu0
        %v1353 = vadd.f32 %v1264, %v1352
        %v1354 = vpop.f32.mrb[0].mxu0
        %v1355 = vadd.f32 %v1266, %v1354
        %1356 = vmatprep.mubr.f32.mxu0 %v732
        %1357 = vmatmul.mubr.f32.gmra.mrb[0].mxu0 %v731
        %v1358 = vpop.f32.mrb[0].mxu0
        %v1359 = vadd.f32 %v1270, %v1358
        %v1360 = vpop.f32.mrb[0].mxu0
        %v1361 = vadd.f32 %v1272, %v1360
        %1362 = vmatprep.mubr.f32.mxu0 %v736
        %1363 = vmatmul.mubr.f32.gmra.mrb[0].mxu0 %v735
        %v1364 = vpop.f32.mrb[0].mxu0
        %v1365 = vadd.f32 %v1276, %v1364
        %v1366 = vpop.f32.mrb[0].mxu0
        %v1367 = vadd.f32 %v1278, %v1366
        %1368 = vmatprep.mubr.f32.mxu0 %v740
        %1369 = vmatmul.mubr.f32.gmra.mrb[0].mxu0 %v739
        %v1370 = vpop.f32.mrb[0].mxu0
        %v1371 = vadd.f32 %v1282, %v1370
        %v1372 = vpop.f32.mrb[0].mxu0
        %v1373 = vadd.f32 %v1284, %v1372
        %1374 = vdwg.mxu0
        %v1375 = vmul.f32 %v1175, %v1175
        %v1376 = vmul.f32 %v1177, %v1177
        %v1377 = vmul.f32 %v1353, %v1353
        %v1378 = vmul.f32 %v1355, %v1355
        %v1379 = vmul.f32 %v1181, %v1181
        %v1380 = vmul.f32 %v1183, %v1183
        %v1381 = vmul.f32 %v1359, %v1359
        %v1382 = vmul.f32 %v1361, %v1361
        %v1383 = vmul.f32 %v1187, %v1187
        %v1384 = vmul.f32 %v1189, %v1189
        %v1385 = vmul.f32 %v1365, %v1365
        %v1386 = vmul.f32 %v1367, %v1367
        %v1387 = vmul.f32 %v1193, %v1193
        %v1388 = vmul.f32 %v1195, %v1195
        %v1389 = vmul.f32 %v1371, %v1371
        %v1390 = vmul.f32 %v1373, %v1373
        %v1391 = vmul.f32 %v1175, %v1375
        %v1392 = vmul.f32 %v1177, %v1376
        %v1393 = vmul.f32 %v1353, %v1377
        %v1394 = vmul.f32 %v1355, %v1378
        %v1395 = vmul.f32 %v1181, %v1379
        %v1396 = vmul.f32 %v1183, %v1380
        %v1397 = vmul.f32 %v1359, %v1381
        %v1398 = vmul.f32 %v1361, %v1382
        %v1399 = vmul.f32 %v1187, %v1383
        %v1400 = vmul.f32 %v1189, %v1384
        %v1401 = vmul.f32 %v1365, %v1385
        %v1402 = vmul.f32 %v1367, %v1386
        %v1403 = vmul.f32 %v1193, %v1387
        %v1404 = vmul.f32 %v1195, %v1388
        %v1405 = vmul.f32 %v1371, %v1389
        %v1406 = vmul.f32 %v1373, %v1390
        %v1407 = vmul.f32 %v1391, 0.044715
        %v1408 = vmul.f32 %v1392, 0.044715
        %v1409 = vmul.f32 %v1393, 0.044715
        %v1410 = vmul.f32 %v1394, 0.044715
        %v1411 = vmul.f32 %v1395, 0.044715
        %v1412 = vmul.f32 %v1396, 0.044715
        %v1413 = vmul.f32 %v1397, 0.044715
        %v1414 = vmul.f32 %v1398, 0.044715
        %v1415 = vmul.f32 %v1399, 0.044715
        %v1416 = vmul.f32 %v1400, 0.044715
        %v1417 = vmul.f32 %v1401, 0.044715
        %v1418 = vmul.f32 %v1402, 0.044715
        %v1419 = vmul.f32 %v1403, 0.044715
        %v1420 = vmul.f32 %v1404, 0.044715
        %v1421 = vmul.f32 %v1405, 0.044715
        %v1422 = vmul.f32 %v1406, 0.044715
        %v1423 = vadd.f32 %v1175, %v1407
        %v1424 = vadd.f32 %v1177, %v1408
        %v1425 = vadd.f32 %v1353, %v1409
        %v1426 = vadd.f32 %v1355, %v1410
        %v1427 = vadd.f32 %v1181, %v1411
        %v1428 = vadd.f32 %v1183, %v1412
        %v1429 = vadd.f32 %v1359, %v1413
        %v1430 = vadd.f32 %v1361, %v1414
        %v1431 = vadd.f32 %v1187, %v1415
        %v1432 = vadd.f32 %v1189, %v1416
        %v1433 = vadd.f32 %v1365, %v1417
        %v1434 = vadd.f32 %v1367, %v1418
        %v1435 = vadd.f32 %v1193, %v1419
        %v1436 = vadd.f32 %v1195, %v1420
        %v1437 = vadd.f32 %v1371, %v1421
        %v1438 = vadd.f32 %v1373, %v1422
        %v1439 = vmul.f32 %v1423, 0.7978846
        %v1440 = vmul.f32 %v1424, 0.7978846
        %v1441 = vmul.f32 %v1425, 0.7978846
        %v1442 = vmul.f32 %v1426, 0.7978846
        %v1443 = vmul.f32 %v1427, 0.7978846
        %v1444 = vmul.f32 %v1428, 0.7978846
        %v1445 = vmul.f32 %v1429, 0.7978846
        %v1446 = vmul.f32 %v1430, 0.7978846
        %v1447 = vmul.f32 %v1431, 0.7978846
        %v1448 = vmul.f32 %v1432, 0.7978846
        %v1449 = vmul.f32 %v1433, 0.7978846
        %v1450 = vmul.f32 %v1434, 0.7978846
        %v1451 = vmul.f32 %v1435, 0.7978846
        %v1452 = vmul.f32 %v1436, 0.7978846
        %v1453 = vmul.f32 %v1437, 0.7978846
        %v1454 = vmul.f32 %v1438, 0.7978846
        %v1455 = vtanh.pop %v1439
        %v1456 = vtanh.pop %v1440
        %v1457 = vtanh.pop %v1441
        %v1458 = vtanh.pop %v1442
        %v1459 = vtanh.pop %v1443
        %v1460 = vtanh.pop %v1444
        %v1461 = vtanh.pop %v1445
        %v1462 = vtanh.pop %v1446
        %v1463 = vtanh.pop %v1447
        %v1464 = vtanh.pop %v1448
        %v1465 = vtanh.pop %v1449
        %v1466 = vtanh.pop %v1450
        %v1467 = vtanh.pop %v1451
        %v1468 = vtanh.pop %v1452
        %v1469 = vtanh.pop %v1453
        %v1470 = vtanh.pop %v1454
        %v1471 = vadd.f32 %v1455, 1.0
        %v1472 = vadd.f32 %v1456, 1.0
        %v1473 = vadd.f32 %v1457, 1.0
        %v1474 = vadd.f32 %v1458, 1.0
        %v1475 = vadd.f32 %v1459, 1.0
        %v1476 = vadd.f32 %v1460, 1.0
        %v1477 = vadd.f32 %v1461, 1.0
        %v1478 = vadd.f32 %v1462, 1.0
        %v1479 = vadd.f32 %v1463, 1.0
        %v1480 = vadd.f32 %v1464, 1.0
        %v1481 = vadd.f32 %v1465, 1.0
        %v1482 = vadd.f32 %v1466, 1.0
        %v1483 = vadd.f32 %v1467, 1.0
        %v1484 = vadd.f32 %v1468, 1.0
        %v1485 = vadd.f32 %v1469, 1.0
        %v1486 = vadd.f32 %v1470, 1.0
        %v1487 = vmul.f32 %v1471, 0.5
        %v1488 = vmul.f32 %v1472, 0.5
        %v1489 = vmul.f32 %v1473, 0.5
        %v1490 = vmul.f32 %v1474, 0.5
        %v1491 = vmul.f32 %v1475, 0.5
        %v1492 = vmul.f32 %v1476, 0.5
        %v1493 = vmul.f32 %v1477, 0.5
        %v1494 = vmul.f32 %v1478, 0.5
        %v1495 = vmul.f32 %v1479, 0.5
        %v1496 = vmul.f32 %v1480, 0.5
        %v1497 = vmul.f32 %v1481, 0.5
        %v1498 = vmul.f32 %v1482, 0.5
        %v1499 = vmul.f32 %v1483, 0.5
        %v1500 = vmul.f32 %v1484, 0.5
        %v1501 = vmul.f32 %v1485, 0.5
        %v1502 = vmul.f32 %v1486, 0.5
        %v1503 = vmul.f32 %v1175, %v1487
        %v1504 = vmul.f32 %v1177, %v1488
        %v1505 = vmul.f32 %v1353, %v1489
        %v1506 = vmul.f32 %v1355, %v1490
        %v1507 = vmul.f32 %v1181, %v1491
        %v1508 = vmul.f32 %v1183, %v1492
        %v1509 = vmul.f32 %v1359, %v1493
        %v1510 = vmul.f32 %v1361, %v1494
        %v1511 = vmul.f32 %v1187, %v1495
        %v1512 = vmul.f32 %v1189, %v1496
        %v1513 = vmul.f32 %v1365, %v1497
        %v1514 = vmul.f32 %v1367, %v1498
        %v1515 = vmul.f32 %v1193, %v1499
        %v1516 = vmul.f32 %v1195, %v1500
        %v1517 = vmul.f32 %v1371, %v1501
        %v1518 = vmul.f32 %v1373, %v1502
        %v1519 = vld [vmem:[%s326] sm:$0xff]
        %v1520 = vld [vmem:[%s326 + $0x8] sm:$0xff]
        %v1521 = vld [vmem:[%s326 + $0x10] sm:$0xff]
        %v1522 = vld [vmem:[%s326 + $0x18] sm:$0xff]
        %v1523 = vld [vmem:[%s7] sm:$0xff]
        %v1524 = vld [vmem:[%s7 + $0x8] sm:$0xff]
        %v1525 = vld [vmem:[%s7 + $0x10] sm:$0xff]
        %v1526 = vld [vmem:[%s7 + $0x18] sm:$0xff]
        %v1527 = vld [vmem:[%s7 + $0x20] sm:$0xff]
        %vm1528 = vcmask 64512
        %v1530 = vsel %vm1528, %v1519, 0
        %v1533 = vsel %vm1528, %v1520, 0
        %v1536 = vsel %vm1528, %v1521, 0
        %v1539 = vsel %vm1528, %v1522, 0
        %1541 = vmatprep.subr.mxu0 %v1524
        %1542 = vmatpush1.msra.mxu0 %v1523
        %1543 = vmatprep.subr.mxu0 0.0
        %1544 = vmatpush1.msra.mxu0 0.0
        %1545 = vmatprep.subr.mxu0 0.0
        %1546 = vmatpush1.msra.mxu0 0.0
        %1547 = vmatprep.subr.mxu0 0.0
        %1548 = vmatpush1.msra.mxu0 0.0
        %1549 = vmatprep.subr.mxu0 0.0
        %1550 = vmatpush1.msra.mxu0 0.0
        %1551 = vmatprep.subr.mxu0 0.0
        %1552 = vmatpush1.msra.mxu0 0.0
        %1553 = vmatprep.subr.mxu0 0.0
        %1554 = vmatpush1.msra.mxu0 0.0
        %1555 = vmatprep.subr.mxu0 0.0
        %1556 = vmatpush1.msra.mxu0 0.0
        %1557 = vmatprep.subr.mxu0 0.0
        %1558 = vmatpush1.msra.mxu0 0.0
        %1559 = vmatprep.subr.mxu0 0.0
        %1560 = vmatpush1.msra.mxu0 0.0
        %1561 = vmatprep.subr.mxu0 0.0
        %1562 = vmatpush1.msra.mxu0 0.0
        %1563 = vmatprep.subr.mxu0 0.0
        %1564 = vmatpush1.msra.mxu0 0.0
        %1565 = vmatprep.subr.mxu0 0.0
        %1566 = vmatpush1.msra.mxu0 0.0
        %1567 = vmatprep.subr.mxu0 0.0
        %1568 = vmatpush1.msra.mxu0 0.0
        %1569 = vmatprep.subr.mxu0 0.0
        %1570 = vmatpush1.msra.mxu0 0.0
        %1571 = vmatprep.subr.mxu0 0.0
        %1572 = vmatpush1.msra.mxu0 0.0
        %1573 = vmatprep.subr.mxu0 0.0
        %1574 = vmatpush1.msra.mxu0 0.0
        %1575 = vmatprep.subr.mxu0 0.0
        %1576 = vmatpush1.msra.mxu0 0.0
        %1577 = vmatprep.subr.mxu0 0.0
        %1578 = vmatpush1.msra.mxu0 0.0
        %1579 = vmatprep.subr.mxu0 0.0
        %1580 = vmatpush1.msra.mxu0 0.0
        %1581 = vmatprep.subr.mxu0 0.0
        %1582 = vmatpush1.msra.mxu0 0.0
        %1583 = vmatprep.subr.mxu0 0.0
        %1584 = vmatpush1.msra.mxu0 0.0
        %1585 = vmatprep.subr.mxu0 0.0
        %1586 = vmatpush1.msra.mxu0 0.0
        %1587 = vmatprep.subr.mxu0 0.0
        %1588 = vmatpush1.msra.mxu0 0.0
        %1589 = vmatprep.subr.mxu0 0.0
        %1590 = vmatpush1.msra.mxu0 0.0
        %1591 = vmatprep.subr.mxu0 0.0
        %1592 = vmatpush1.msra.mxu0 0.0
        %1593 = vmatprep.subr.mxu0 0.0
        %1594 = vmatpush1.msra.mxu0 0.0
        %1595 = vmatprep.subr.mxu0 0.0
        %1596 = vmatpush1.msra.mxu0 0.0
        %1597 = vmatprep.subr.mxu0 0.0
        %1598 = vmatpush1.msra.mxu0 0.0
        %1599 = vmatprep.subr.mxu0 0.0
        %1600 = vmatpush1.msra.mxu0 0.0
        %1601 = vmatprep.subr.mxu0 0.0
        %1602 = vmatpush1.msra.mxu0 0.0
        %1603 = vmatprep.subr.mxu0 0.0
        %1604 = vmatpush1.msra.mxu0 0.0
        %1605 = vmatprep.mubr.f32.mxu0 0.0
        %1606 = vmatmul.mubr.f32.gmra.mrb[0].mxu0 %v1530
        %v1607 = vpop.f32.mrb[0].mxu0
        %v1608 = vadd.f32 0.0, %v1607
        %v1609 = vpop.f32.mrb[0].mxu0
        %v1610 = vadd.f32 0.0, %v1609
        %1611 = vmatprep.mubr.f32.mxu0 0.0
        %1612 = vmatmul.mubr.f32.gmra.mrb[0].mxu0 %v1533
        %v1613 = vpop.f32.mrb[0].mxu0
        %v1614 = vadd.f32 0.0, %v1613
        %v1615 = vpop.f32.mrb[0].mxu0
        %v1616 = vadd.f32 0.0, %v1615
        %1617 = vmatprep.mubr.f32.mxu0 0.0
        %1618 = vmatmul.mubr.f32.gmra.mrb[0].mxu0 %v1536
        %v1619 = vpop.f32.mrb[0].mxu0
        %v1620 = vadd.f32 0.0, %v1619
        %v1621 = vpop.f32.mrb[0].mxu0
        %v1622 = vadd.f32 0.0, %v1621
        %1623 = vmatprep.mubr.f32.mxu0 0.0
        %1624 = vmatmul.mubr.f32.gmra.mrb[0].mxu0 %v1539
        %v1625 = vpop.f32.mrb[0].mxu0
        %v1626 = vadd.f32 0.0, %v1625
        %v1627 = vpop.f32.mrb[0].mxu0
        %v1628 = vadd.f32 0.0, %v1627
        %1629 = vdwg.mxu0
        %1630 = vmatprep.subr.mxu0 %v1526
        %1631 = vmatpush1.msra.mxu0 %v1525
        %1632 = vmatprep.subr.mxu0 0.0
        %1633 = vmatpush1.msra.mxu0 0.0
        %1634 = vmatprep.subr.mxu0 0.0
        %1635 = vmatpush1.msra.mxu0 0.0
        %1636 = vmatprep.subr.mxu0 0.0
        %1637 = vmatpush1.msra.mxu0 0.0
        %1638 = vmatprep.subr.mxu0 0.0
        %1639 = vmatpush1.msra.mxu0 0.0
        %1640 = vmatprep.subr.mxu0 0.0
        %1641 = vmatpush1.msra.mxu0 0.0
        %1642 = vmatprep.subr.mxu0 0.0
        %1643 = vmatpush1.msra.mxu0 0.0
        %1644 = vmatprep.subr.mxu0 0.0
        %1645 = vmatpush1.msra.mxu0 0.0
        %1646 = vmatprep.subr.mxu0 0.0
        %1647 = vmatpush1.msra.mxu0 0.0
        %1648 = vmatprep.subr.mxu0 0.0
        %1649 = vmatpush1.msra.mxu0 0.0
        %1650 = vmatprep.subr.mxu0 0.0
        %1651 = vmatpush1.msra.mxu0 0.0
        %1652 = vmatprep.subr.mxu0 0.0
        %1653 = vmatpush1.msra.mxu0 0.0
        %1654 = vmatprep.subr.mxu0 0.0
        %1655 = vmatpush1.msra.mxu0 0.0
        %1656 = vmatprep.subr.mxu0 0.0
        %1657 = vmatpush1.msra.mxu0 0.0
        %1658 = vmatprep.subr.mxu0 0.0
        %1659 = vmatpush1.msra.mxu0 0.0
        %1660 = vmatprep.subr.mxu0 0.0
        %1661 = vmatpush1.msra.mxu0 0.0
        %1662 = vmatprep.subr.mxu0 0.0
        %1663 = vmatpush1.msra.mxu0 0.0
        %1664 = vmatprep.subr.mxu0 0.0
        %1665 = vmatpush1.msra.mxu0 0.0
        %1666 = vmatprep.subr.mxu0 0.0
        %1667 = vmatpush1.msra.mxu0 0.0
        %1668 = vmatprep.subr.mxu0 0.0
        %1669 = vmatpush1.msra.mxu0 0.0
        %1670 = vmatprep.subr.mxu0 0.0
        %1671 = vmatpush1.msra.mxu0 0.0
        %1672 = vmatprep.subr.mxu0 0.0
        %1673 = vmatpush1.msra.mxu0 0.0
        %1674 = vmatprep.subr.mxu0 0.0
        %1675 = vmatpush1.msra.mxu0 0.0
        %1676 = vmatprep.subr.mxu0 0.0
        %1677 = vmatpush1.msra.mxu0 0.0
        %1678 = vmatprep.subr.mxu0 0.0
        %1679 = vmatpush1.msra.mxu0 0.0
        %1680 = vmatprep.subr.mxu0 0.0
        %1681 = vmatpush1.msra.mxu0 0.0
        %1682 = vmatprep.subr.mxu0 0.0
        %1683 = vmatpush1.msra.mxu0 0.0
        %1684 = vmatprep.subr.mxu0 0.0
        %1685 = vmatpush1.msra.mxu0 0.0
        %1686 = vmatprep.subr.mxu0 0.0
        %1687 = vmatpush1.msra.mxu0 0.0
        %1688 = vmatprep.subr.mxu0 0.0
        %1689 = vmatpush1.msra.mxu0 0.0
        %1690 = vmatprep.subr.mxu0 0.0
        %1691 = vmatpush1.msra.mxu0 0.0
        %1692 = vmatprep.subr.mxu0 0.0
        %1693 = vmatpush1.msra.mxu0 0.0
        %1694 = vmatprep.mubr.f32.mxu0 0.0
        %1695 = vmatmul.mubr.f32.gmra.mrb[0].mxu0 %v1530
        %v1696 = vpop.f32.mrb[0].mxu0
        %v1697 = vadd.f32 0.0, %v1696
        %v1698 = vpop.f32.mrb[0].mxu0
        %v1699 = vadd.f32 0.0, %v1698
        %1700 = vmatprep.mubr.f32.mxu0 0.0
        %1701 = vmatmul.mubr.f32.gmra.mrb[0].mxu0 %v1533
        %v1702 = vpop.f32.mrb[0].mxu0
        %v1703 = vadd.f32 0.0, %v1702
        %v1704 = vpop.f32.mrb[0].mxu0
        %v1705 = vadd.f32 0.0, %v1704
        %1706 = vmatprep.mubr.f32.mxu0 0.0
        %1707 = vmatmul.mubr.f32.gmra.mrb[0].mxu0 %v1536
        %v1708 = vpop.f32.mrb[0].mxu0
        %v1709 = vadd.f32 0.0, %v1708
        %v1710 = vpop.f32.mrb[0].mxu0
        %v1711 = vadd.f32 0.0, %v1710
        %1712 = vmatprep.mubr.f32.mxu0 0.0
        %1713 = vmatmul.mubr.f32.gmra.mrb[0].mxu0 %v1539
        %v1714 = vpop.f32.mrb[0].mxu0
        %v1715 = vadd.f32 0.0, %v1714
        %v1716 = vpop.f32.mrb[0].mxu0
        %v1717 = vadd.f32 0.0, %v1716
        %1718 = vdwg.mxu0
        %1719 = vmatprep.subr.mxu0 0.0
        %1720 = vmatpush1.msra.mxu0 %v1527
        %1721 = vmatprep.subr.mxu0 0.0
        %1722 = vmatpush1.msra.mxu0 0.0
        %1723 = vmatprep.subr.mxu0 0.0
        %1724 = vmatpush1.msra.mxu0 0.0
        %1725 = vmatprep.subr.mxu0 0.0
        %1726 = vmatpush1.msra.mxu0 0.0
        %1727 = vmatprep.subr.mxu0 0.0
        %1728 = vmatpush1.msra.mxu0 0.0
        %1729 = vmatprep.subr.mxu0 0.0
        %1730 = vmatpush1.msra.mxu0 0.0
        %1731 = vmatprep.subr.mxu0 0.0
        %1732 = vmatpush1.msra.mxu0 0.0
        %1733 = vmatprep.subr.mxu0 0.0
        %1734 = vmatpush1.msra.mxu0 0.0
        %1735 = vmatprep.subr.mxu0 0.0
        %1736 = vmatpush1.msra.mxu0 0.0
        %1737 = vmatprep.subr.mxu0 0.0
        %1738 = vmatpush1.msra.mxu0 0.0
        %1739 = vmatprep.subr.mxu0 0.0
        %1740 = vmatpush1.msra.mxu0 0.0
        %1741 = vmatprep.subr.mxu0 0.0
        %1742 = vmatpush1.msra.mxu0 0.0
        %1743 = vmatprep.subr.mxu0 0.0
        %1744 = vmatpush1.msra.mxu0 0.0
        %1745 = vmatprep.subr.mxu0 0.0
        %1746 = vmatpush1.msra.mxu0 0.0
        %1747 = vmatprep.subr.mxu0 0.0
        %1748 = vmatpush1.msra.mxu0 0.0
        %1749 = vmatprep.subr.mxu0 0.0
        %1750 = vmatpush1.msra.mxu0 0.0
        %1751 = vmatprep.subr.mxu0 0.0
        %1752 = vmatpush1.msra.mxu0 0.0
        %1753 = vmatprep.subr.mxu0 0.0
        %1754 = vmatpush1.msra.mxu0 0.0
        %1755 = vmatprep.subr.mxu0 0.0
        %1756 = vmatpush1.msra.mxu0 0.0
        %1757 = vmatprep.subr.mxu0 0.0
        %1758 = vmatpush1.msra.mxu0 0.0
        %1759 = vmatprep.subr.mxu0 0.0
        %1760 = vmatpush1.msra.mxu0 0.0
        %1761 = vmatprep.subr.mxu0 0.0
        %1762 = vmatpush1.msra.mxu0 0.0
        %1763 = vmatprep.subr.mxu0 0.0
        %1764 = vmatpush1.msra.mxu0 0.0
        %1765 = vmatprep.subr.mxu0 0.0
        %1766 = vmatpush1.msra.mxu0 0.0
        %1767 = vmatprep.subr.mxu0 0.0
        %1768 = vmatpush1.msra.mxu0 0.0
        %1769 = vmatprep.subr.mxu0 0.0
        %1770 = vmatpush1.msra.mxu0 0.0
        %1771 = vmatprep.subr.mxu0 0.0
        %1772 = vmatpush1.msra.mxu0 0.0
        %1773 = vmatprep.subr.mxu0 0.0
        %1774 = vmatpush1.msra.mxu0 0.0
        %1775 = vmatprep.subr.mxu0 0.0
        %1776 = vmatpush1.msra.mxu0 0.0
        %1777 = vmatprep.subr.mxu0 0.0
        %1778 = vmatpush1.msra.mxu0 0.0
        %1779 = vmatprep.subr.mxu0 0.0
        %1780 = vmatpush1.msra.mxu0 0.0
        %1781 = vmatprep.subr.mxu0 0.0
        %1782 = vmatpush1.msra.mxu0 0.0
        %1783 = vmatprep.mubr.f32.mxu0 0.0
        %1784 = vmatmul.mubr.f32.gmra.mrb[0].mxu0 %v1530
        %v1785 = vpop.f32.mrb[0].mxu0
        %v1786 = vadd.f32 0.0, %v1785
        %v1787 = vpop.f32.mrb[0].mxu0
        %1788 = vmatprep.mubr.f32.mxu0 0.0
        %1789 = vmatmul.mubr.f32.gmra.mrb[0].mxu0 %v1533
        %v1790 = vpop.f32.mrb[0].mxu0
        %v1791 = vadd.f32 0.0, %v1790
        %v1792 = vpop.f32.mrb[0].mxu0
        %1793 = vmatprep.mubr.f32.mxu0 0.0
        %1794 = vmatmul.mubr.f32.gmra.mrb[0].mxu0 %v1536
        %v1795 = vpop.f32.mrb[0].mxu0
        %v1796 = vadd.f32 0.0, %v1795
        %v1797 = vpop.f32.mrb[0].mxu0
        %1798 = vmatprep.mubr.f32.mxu0 0.0
        %1799 = vmatmul.mubr.f32.gmra.mrb[0].mxu0 %v1539
        %v1800 = vpop.f32.mrb[0].mxu0
        %v1801 = vadd.f32 0.0, %v1800
        %v1802 = vpop.f32.mrb[0].mxu0
        %1803 = vdwg.mxu0
        %v1804 = vmul.f32 %v1608, %v1503
        %v1805 = vmul.f32 %v1610, %v1504
        %v1806 = vmul.f32 %v1697, %v1505
        %v1807 = vmul.f32 %v1699, %v1506
        %v1808 = vmul.f32 %v1614, %v1507
        %v1809 = vmul.f32 %v1616, %v1508
        %v1810 = vmul.f32 %v1703, %v1509
        %v1811 = vmul.f32 %v1705, %v1510
        %v1812 = vmul.f32 %v1620, %v1511
        %v1813 = vmul.f32 %v1622, %v1512
        %v1814 = vmul.f32 %v1709, %v1513
        %v1815 = vmul.f32 %v1711, %v1514
        %v1816 = vmul.f32 %v1626, %v1515
        %v1817 = vmul.f32 %v1628, %v1516
        %v1818 = vmul.f32 %v1715, %v1517
        %v1819 = vmul.f32 %v1717, %v1518
        %v1820 = vld [vmem:[%s6] sm:$0xff]
        %v1821 = vld [vmem:[%s6 + $0x8] sm:$0xff]
        %v1822 = vld [vmem:[%s6 + $0x10] sm:$0xff]
        %v1823 = vld [vmem:[%s6 + $0x18] sm:$0xff]
        %v1824 = vld [vmem:[%s6 + $0x20] sm:$0xff]
        %v1825 = vld [vmem:[%s6 + $0x28] sm:$0xff]
        %v1826 = vld [vmem:[%s6 + $0x30] sm:$0xff]
        %v1827 = vld [vmem:[%s6 + $0x38] sm:$0xff]
        %v1828 = vld [vmem:[%s6 + $0x40] sm:$0xff]
        %v1829 = vld [vmem:[%s6 + $0x48] sm:$0xff]
        %v1830 = vld [vmem:[%s6 + $0x50] sm:$0xff]
        %v1831 = vld [vmem:[%s6 + $0x58] sm:$0xff]
        %v1832 = vld [vmem:[%s6 + $0x60] sm:$0xff]
        %v1833 = vld [vmem:[%s6 + $0x68] sm:$0xff]
        %v1834 = vld [vmem:[%s6 + $0x70] sm:$0xff]
        %v1835 = vld [vmem:[%s6 + $0x78] sm:$0xff]
        %v1836 = vld [vmem:[%s6 + $0x80] sm:$0xff]
        %v1837 = vld [vmem:[%s6 + $0x88] sm:$0xff]
        %v1838 = vld [vmem:[%s6 + $0x90] sm:$0xff]
        %v1839 = vld [vmem:[%s6 + $0x98] sm:$0xff]
        %v1840 = vld [vmem:[%s6 + $0xa0] sm:$0xff]
        %v1841 = vld [vmem:[%s6 + $0xa8] sm:$0xff]
        %v1842 = vld [vmem:[%s6 + $0xb0] sm:$0xff]
        %v1843 = vld [vmem:[%s6 + $0xb8] sm:$0xff]
        %v1844 = vld [vmem:[%s6 + $0xc0] sm:$0xff]
        %v1845 = vld [vmem:[%s6 + $0xc8] sm:$0xff]
        %v1846 = vld [vmem:[%s6 + $0xd0] sm:$0xff]
        %v1847 = vld [vmem:[%s6 + $0xd8] sm:$0xff]
        %v1848 = vld [vmem:[%s6 + $0xe0] sm:$0xff]
        %v1849 = vld [vmem:[%s6 + $0xe8] sm:$0xff]
        %v1850 = vld [vmem:[%s6 + $0xf0] sm:$0xff]
        %v1851 = vld [vmem:[%s6 + $0xf8] sm:$0xff]
        %v1852 = vld [vmem:[%s6 + $0x100] sm:$0xff]
        %v1853 = vld [vmem:[%s6 + $0x108] sm:$0xff]
        %v1854 = vld [vmem:[%s6 + $0x110] sm:$0xff]
        %v1855 = vld [vmem:[%s6 + $0x118] sm:$0xff]
        %v1856 = vld [vmem:[%s6 + $0x120] sm:$0xff]
        %v1857 = vld [vmem:[%s6 + $0x128] sm:$0xff]
        %v1858 = vld [vmem:[%s6 + $0x130] sm:$0xff]
        %v1859 = vld [vmem:[%s6 + $0x138] sm:$0xff]
        %v1860 = vld [vmem:[%s6 + $0x140] sm:$0xff]
        %v1861 = vld [vmem:[%s6 + $0x148] sm:$0xff]
        %v1862 = vld [vmem:[%s6 + $0x150] sm:$0xff]
        %v1863 = vld [vmem:[%s6 + $0x158] sm:$0xff]
        %v1864 = vld [vmem:[%s6 + $0x160] sm:$0xff]
        %v1865 = vld [vmem:[%s6 + $0x168] sm:$0xff]
        %v1866 = vld [vmem:[%s6 + $0x170] sm:$0xff]
        %v1867 = vld [vmem:[%s6 + $0x178] sm:$0xff]
        %v1868 = vld [vmem:[%s6 + $0x180] sm:$0xff]
        %v1869 = vld [vmem:[%s6 + $0x188] sm:$0xff]
        %v1870 = vld [vmem:[%s6 + $0x190] sm:$0xff]
        %v1871 = vld [vmem:[%s6 + $0x198] sm:$0xff]
        %v1872 = vld [vmem:[%s6 + $0x1a0] sm:$0xff]
        %v1873 = vld [vmem:[%s6 + $0x1a8] sm:$0xff]
        %v1874 = vld [vmem:[%s6 + $0x1b0] sm:$0xff]
        %v1875 = vld [vmem:[%s6 + $0x1b8] sm:$0xff]
        %v1876 = vld [vmem:[%s6 + $0x1c0] sm:$0xff]
        %v1877 = vld [vmem:[%s6 + $0x1c8] sm:$0xff]
        %v1878 = vld [vmem:[%s6 + $0x1d0] sm:$0xff]
        %v1879 = vld [vmem:[%s6 + $0x1d8] sm:$0xff]
        %v1880 = vld [vmem:[%s6 + $0x1e0] sm:$0xff]
        %v1881 = vld [vmem:[%s6 + $0x1e8] sm:$0xff]
        %v1882 = vld [vmem:[%s6 + $0x1f0] sm:$0xff]
        %v1883 = vld [vmem:[%s6 + $0x1f8] sm:$0xff]
        %1884 = vmatprep.subr.mxu0 0.0
        %1885 = vmatpush1.msra.mxu0 %v1820
        %1886 = vmatprep.subr.mxu0 0.0
        %1887 = vmatpush1.msra.mxu0 %v1821
        %1888 = vmatprep.subr.mxu0 0.0
        %1889 = vmatpush1.msra.mxu0 %v1822
        %1890 = vmatprep.subr.mxu0 0.0
        %1891 = vmatpush1.msra.mxu0 %v1823
        %1892 = vmatprep.subr.mxu0 0.0
        %1893 = vmatpush1.msra.mxu0 %v1824
        %1894 = vmatprep.subr.mxu0 0.0
        %1895 = vmatpush1.msra.mxu0 %v1825
        %1896 = vmatprep.subr.mxu0 0.0
        %1897 = vmatpush1.msra.mxu0 %v1826
        %1898 = vmatprep.subr.mxu0 0.0
        %1899 = vmatpush1.msra.mxu0 %v1827
        %1900 = vmatprep.subr.mxu0 0.0
        %1901 = vmatpush1.msra.mxu0 %v1828
        %1902 = vmatprep.subr.mxu0 0.0
        %1903 = vmatpush1.msra.mxu0 %v1829
        %1904 = vmatprep.subr.mxu0 0.0
        %1905 = vmatpush1.msra.mxu0 %v1830
        %1906 = vmatprep.subr.mxu0 0.0
        %1907 = vmatpush1.msra.mxu0 %v1831
        %1908 = vmatprep.subr.mxu0 0.0
        %1909 = vmatpush1.msra.mxu0 %v1832
        %1910 = vmatprep.subr.mxu0 0.0
        %1911 = vmatpush1.msra.mxu0 %v1833
        %1912 = vmatprep.subr.mxu0 0.0
        %1913 = vmatpush1.msra.mxu0 %v1834
        %1914 = vmatprep.subr.mxu0 0.0
        %1915 = vmatpush1.msra.mxu0 %v1835
        %1916 = vmatprep.subr.mxu0 0.0
        %1917 = vmatpush1.msra.mxu0 %v1836
        %1918 = vmatprep.subr.mxu0 0.0
        %1919 = vmatpush1.msra.mxu0 %v1837
        %1920 = vmatprep.subr.mxu0 0.0
        %1921 = vmatpush1.msra.mxu0 %v1838
        %1922 = vmatprep.subr.mxu0 0.0
        %1923 = vmatpush1.msra.mxu0 %v1839
        %1924 = vmatprep.subr.mxu0 0.0
        %1925 = vmatpush1.msra.mxu0 %v1840
        %1926 = vmatprep.subr.mxu0 0.0
        %1927 = vmatpush1.msra.mxu0 %v1841
        %1928 = vmatprep.subr.mxu0 0.0
        %1929 = vmatpush1.msra.mxu0 %v1842
        %1930 = vmatprep.subr.mxu0 0.0
        %1931 = vmatpush1.msra.mxu0 %v1843
        %1932 = vmatprep.subr.mxu0 0.0
        %1933 = vmatpush1.msra.mxu0 %v1844
        %1934 = vmatprep.subr.mxu0 0.0
        %1935 = vmatpush1.msra.mxu0 %v1845
        %1936 = vmatprep.subr.mxu0 0.0
        %1937 = vmatpush1.msra.mxu0 %v1846
        %1938 = vmatprep.subr.mxu0 0.0
        %1939 = vmatpush1.msra.mxu0 %v1847
        %1940 = vmatprep.subr.mxu0 0.0
        %1941 = vmatpush1.msra.mxu0 %v1848
        %1942 = vmatprep.subr.mxu0 0.0
        %1943 = vmatpush1.msra.mxu0 %v1849
        %1944 = vmatprep.subr.mxu0 0.0
        %1945 = vmatpush1.msra.mxu0 %v1850
        %1946 = vmatprep.subr.mxu0 0.0
        %1947 = vmatpush1.msra.mxu0 %v1851
        %1948 = vmatprep.mubr.f32.mxu0 %v1805
        %1949 = vmatmul.mubr.f32.gmra.mrb[0].mxu0 %v1804
        %v1950 = vpop.f32.mrb[0].mxu0
        %v1951 = vadd.f32 %v1786, %v1950
        %v1952 = vpop.f32.mrb[0].mxu0
        %1953 = vmatprep.mubr.f32.mxu0 %v1809
        %1954 = vmatmul.mubr.f32.gmra.mrb[0].mxu0 %v1808
        %v1955 = vpop.f32.mrb[0].mxu0
        %v1956 = vadd.f32 %v1791, %v1955
        %v1957 = vpop.f32.mrb[0].mxu0
        %1958 = vmatprep.mubr.f32.mxu0 %v1813
        %1959 = vmatmul.mubr.f32.gmra.mrb[0].mxu0 %v1812
        %v1960 = vpop.f32.mrb[0].mxu0
        %v1961 = vadd.f32 %v1796, %v1960
        %v1962 = vpop.f32.mrb[0].mxu0
        %1963 = vmatprep.mubr.f32.mxu0 %v1817
        %1964 = vmatmul.mubr.f32.gmra.mrb[0].mxu0 %v1816
        %v1965 = vpop.f32.mrb[0].mxu0
        %v1966 = vadd.f32 %v1801, %v1965
        %v1967 = vpop.f32.mrb[0].mxu0
        %1968 = vdwg.mxu0
        %1969 = vmatprep.subr.mxu0 0.0
        %1970 = vmatpush1.msra.mxu0 %v1852
        %1971 = vmatprep.subr.mxu0 0.0
        %1972 = vmatpush1.msra.mxu0 %v1853
        %1973 = vmatprep.subr.mxu0 0.0
        %1974 = vmatpush1.msra.mxu0 %v1854
        %1975 = vmatprep.subr.mxu0 0.0
        %1976 = vmatpush1.msra.mxu0 %v1855
        %1977 = vmatprep.subr.mxu0 0.0
        %1978 = vmatpush1.msra.mxu0 %v1856
        %1979 = vmatprep.subr.mxu0 0.0
        %1980 = vmatpush1.msra.mxu0 %v1857
        %1981 = vmatprep.subr.mxu0 0.0
        %1982 = vmatpush1.msra.mxu0 %v1858
        %1983 = vmatprep.subr.mxu0 0.0
        %1984 = vmatpush1.msra.mxu0 %v1859
        %1985 = vmatprep.subr.mxu0 0.0
        %1986 = vmatpush1.msra.mxu0 %v1860
        %1987 = vmatprep.subr.mxu0 0.0
        %1988 = vmatpush1.msra.mxu0 %v1861
        %1989 = vmatprep.subr.mxu0 0.0
        %1990 = vmatpush1.msra.mxu0 %v1862
        %1991 = vmatprep.subr.mxu0 0.0
        %1992 = vmatpush1.msra.mxu0 %v1863
        %1993 = vmatprep.subr.mxu0 0.0
        %1994 = vmatpush1.msra.mxu0 %v1864
        %1995 = vmatprep.subr.mxu0 0.0
        %1996 = vmatpush1.msra.mxu0 %v1865
        %1997 = vmatprep.subr.mxu0 0.0
        %1998 = vmatpush1.msra.mxu0 %v1866
        %1999 = vmatprep.subr.mxu0 0.0
        %2000 = vmatpush1.msra.mxu0 %v1867
        %2001 = vmatprep.subr.mxu0 0.0
        %2002 = vmatpush1.msra.mxu0 %v1868
        %2003 = vmatprep.subr.mxu0 0.0
        %2004 = vmatpush1.msra.mxu0 %v1869
        %2005 = vmatprep.subr.mxu0 0.0
        %2006 = vmatpush1.msra.mxu0 %v1870
        %2007 = vmatprep.subr.mxu0 0.0
        %2008 = vmatpush1.msra.mxu0 %v1871
        %2009 = vmatprep.subr.mxu0 0.0
        %2010 = vmatpush1.msra.mxu0 %v1872
        %2011 = vmatprep.subr.mxu0 0.0
        %2012 = vmatpush1.msra.mxu0 %v1873
        %2013 = vmatprep.subr.mxu0 0.0
        %2014 = vmatpush1.msra.mxu0 %v1874
        %2015 = vmatprep.subr.mxu0 0.0
        %2016 = vmatpush1.msra.mxu0 %v1875
        %2017 = vmatprep.subr.mxu0 0.0
        %2018 = vmatpush1.msra.mxu0 %v1876
        %2019 = vmatprep.subr.mxu0 0.0
        %2020 = vmatpush1.msra.mxu0 %v1877
        %2021 = vmatprep.subr.mxu0 0.0
        %2022 = vmatpush1.msra.mxu0 %v1878
        %2023 = vmatprep.subr.mxu0 0.0
        %2024 = vmatpush1.msra.mxu0 %v1879
        %2025 = vmatprep.subr.mxu0 0.0
        %2026 = vmatpush1.msra.mxu0 %v1880
        %2027 = vmatprep.subr.mxu0 0.0
        %2028 = vmatpush1.msra.mxu0 %v1881
        %2029 = vmatprep.subr.mxu0 0.0
        %2030 = vmatpush1.msra.mxu0 %v1882
        %2031 = vmatprep.subr.mxu0 0.0
        %2032 = vmatpush1.msra.mxu0 %v1883
        %2033 = vmatprep.mubr.f32.mxu0 %v1807
        %2034 = vmatmul.mubr.f32.gmra.mrb[0].mxu0 %v1806
        %v2035 = vpop.f32.mrb[0].mxu0
        %v2036 = vadd.f32 %v1951, %v2035
        %v2037 = vpop.f32.mrb[0].mxu0
        %2038 = vmatprep.mubr.f32.mxu0 %v1811
        %2039 = vmatmul.mubr.f32.gmra.mrb[0].mxu0 %v1810
        %v2040 = vpop.f32.mrb[0].mxu0
        %v2041 = vadd.f32 %v1956, %v2040
        %v2042 = vpop.f32.mrb[0].mxu0
        %2043 = vmatprep.mubr.f32.mxu0 %v1815
        %2044 = vmatmul.mubr.f32.gmra.mrb[0].mxu0 %v1814
        %v2045 = vpop.f32.mrb[0].mxu0
        %v2046 = vadd.f32 %v1961, %v2045
        %v2047 = vpop.f32.mrb[0].mxu0
        %2048 = vmatprep.mubr.f32.mxu0 %v1819
        %2049 = vmatmul.mubr.f32.gmra.mrb[0].mxu0 %v1818
        %v2050 = vpop.f32.mrb[0].mxu0
        %v2051 = vadd.f32 %v1966, %v2050
        %v2052 = vpop.f32.mrb[0].mxu0
        %2053 = vdwg.mxu0
        %v2054 = vadd.f32 %v2036, %v329
        %v2055 = vadd.f32 %v2041, %v330
        %v2056 = vadd.f32 %v2046, %v331
        %v2057 = vadd.f32 %v2051, %v332
        %2058 = vst [vmem:[%s315] sm:$0xff] %v2054
        %2059 = vst [vmem:[%s315 + $0x8] sm:$0xff] %v2055
        %2060 = vst [vmem:[%s315 + $0x10] sm:$0xff] %v2056
        %2061 = vst [vmem:[%s315 + $0x18] sm:$0xff] %v2057
        %s2062 = sand.u32 %s208, 1
        %s2063 = scalar_lea.sflag [#allocation3], %s2062
        %s2064 = sand.u32 %s208, 1
        %s2065 = smul.addr %s2064, 32
        %s2066 = scalar_lea.vmem [#allocation2], %s2065
        // Predicated region
        $region53: #{moe_forward.1} parent=51 // pred_check
          %p2067 = pneg %p218
        $region54: #{moe_forward.1} parent=51 // pred_check_branch
          %2069 = sbr.rel (%p2067) target = $region56
        $region55: #{moe_forward.1} parent=51 // pred_region
          %s2070 = smul.u32 4, %s22
          %s2072 = ssub.s32 512, 512
          %2073 = vsyncadd %s2063, %s2072
          %s2074 = smul.addr %s2070, 128
          %s2075 = scalar_lea.hbm %s8, %s2074
          %s2076 = sshll.u32 %s2066, 4
          %s2077 = int_to_ptr.vmem [resolvable:$true] %s2076
          %2082 = dma.vmem_to_hbm [thread:$0]  %s2077, 512, %s2075, %s2063, 128, 128, 8
        $region56: #{moe_forward.1} parent=51 // pred_fallthru
          _
      $region52: #{moe_forward.1} parent=5 // pred_fallthru
        _
      %p2083 = scmp.le.s32.totalorder 2, %s17
      // Predicated region
      $region57: #{moe_forward.1} parent=5 // pred_check
        %p2084 = pneg %p2083
      $region58: #{moe_forward.1} parent=5 // pred_check_branch
        %2086 = sbr.rel (%p2084) target = $region60
      $region59: #{moe_forward.1} parent=5 // pred_region
        %s2087 = ssub.s32 %s17, 2
        // Predicated region
        $region61: #{moe_forward.1} parent=59 // pred_check
          %p2088 = pneg %p224
        $region62: #{moe_forward.1} parent=59 // pred_check_branch
          %2090 = sbr.rel (%p2088) target = $region64
        $region63: #{moe_forward.1} parent=59 // pred_region
          %s2091 = sand.u32 %s209, 1
          %s2092 = scalar_lea.sflag [#allocation3], %s2091
          %s2093 = sand.u32 %s209, 1
          %s2094 = smul.addr %s2093, 32
          %s2095 = scalar_lea.vmem [#allocation2], %s2094
          %2096 = dma.done %s2092, 512
        $region64: #{moe_forward.1} parent=59 // pred_fallthru
          _
      $region60: #{moe_forward.1} parent=5 // pred_fallthru
        _
    $region6: #{moe_forward.1} parent=1 // loop_footer
      %s21 = sadd.s32 1, %s17
    $region7: #{moe_forward.1} parent=1 // loop_footer_branch
      %16 = sbr.rel target = $region3
    $region8: #{moe_forward.1} parent=1 // loop_exit
      _
    %2097 = vsyncpa [#allocation3], 1
    %s2098 = scalar_lea.sflag [#allocation3], 1
    %2099 = vsyncpa %s2098, 1

</llo_original>
